<compile_context>
chip_gen: v7x
topology: tpu7x:2x2x1
jax: 0.10.0
libtpu: 0.0.40
codegen_flags: <defaults>
</compile_context>

<pallas_src>
import functools

import jax
import jax.numpy as jnp
import numpy as np
from jax import lax
from jax.experimental import pallas as pl
from jax.experimental.pallas import tpu as pltpu


def _round_up(x, m):
    return (x + m - 1) // m * m


# --------------------------------------------------------------------------
# Fused kernel: stem conv + LeakyReLU + num_block residual blocks
# --------------------------------------------------------------------------
def _fused_kernel(x_ref, w0_ref, b0_ref, wb_ref, bb_ref, o_ref,
                  acc_ref, taps_ref, *, num_block, interior_col,
                  negative_slope=0.1):
    """One batch element per grid step.

    x_ref   : (1, H+2, W+2, Cin)            f32   spatially padded input
    w0_ref  : (9*Cin, Cf)                   bf16  stem weights, dy & dx folded into K
    b0_ref  : (1, Cf)                       f32
    wb_ref  : (num_block, 2, 3, 3*Cf, Cf)   bf16  block weights (conv1, conv2), dx folded into K
    bb_ref  : (num_block, 2, 1, Cf)         f32   block biases
    o_ref   : (1, H, W, Cf)                 f32
    acc_ref : VMEM (H*W, Cf)                f32   residual-chain accumulator (current fea)
    taps_ref: VMEM (H+2, WP, 3*Cf)          bf16  dx-unfolded (im2col) halo scratch
    """
    H, W, Cf = o_ref.shape[1], o_ref.shape[2], o_ref.shape[3]
    L = interior_col                      # interior columns live at [L, L+W)
    HW = H * W

    # ---- zero ONLY the border cells the convs read as zero padding ---------
    # (previously: two full-buffer zero sweeps per step).  Interior cells are
    # rewritten before every conv, so only these slabs must be zero:
    #   rows 0 and H+1 (top/bottom halo, all dx-groups)
    #   column L       of dx-group 0 (left halo)
    #   column L+W-1   of dx-group 2 (right halo)
    # Re-zeroed each step (cheap) so correctness does not depend on scratch
    # persistence when the batch axis is split across TensorCores.
    zrow = jnp.zeros((1,) + taps_ref.shape[1:], taps_ref.dtype)
    taps_ref[0:1] = zrow
    taps_ref[H + 1:H + 2] = zrow
    zcol = jnp.zeros((H + 2, 1, Cf), taps_ref.dtype)
    taps_ref[:, L:L + 1, 0:Cf] = zcol
    taps_ref[:, L + W - 1:L + W, 2 * Cf:3 * Cf] = zcol

    def matmul(taps2d, w2d, acc2d):
        return acc2d + lax.dot_general(
            taps2d, w2d,
            dimension_numbers=(((1,), (0,)), ((), ())),
            preferred_element_type=jnp.float32)

    # ---- stem: Conv2d(Cin, Cf, 3, 1, 1) + LeakyReLU(0.1) --------------------
    # dy and dx both folded into the contraction dim -> ONE matmul, K = 9*Cin.
    xb = x_ref[0].astype(jnp.bfloat16)                       # (H+2, W+2, Cin)
    cin = xb.shape[-1]
    taps0 = jnp.concatenate(
        [xb[dy:dy + H, dx:dx + W, :] for dy in range(3) for dx in range(3)],
        axis=-1).reshape(HW, 9 * cin)                        # (H*W, 9*Cin)
    fea = jnp.broadcast_to(b0_ref[0:1, :], (HW, Cf))         # bias-initialised acc
    fea = matmul(taps0, w0_ref[...], fea)
    fea = jnp.where(fea >= 0, fea, negative_slope * fea)
    acc_ref[...] = fea

    # ---- residual blocks: fea = fea + conv2(relu(conv1(fea))) ---------------
    def im2col_store(act_hwc_bf16):
        # Store the activation three times at dx-shifted column offsets so that
        # taps_ref[dy:dy+H, L:L+W, :] is directly the (H, W, 3*Cf) im2col slab
        # for row-offset dy -> no concatenate / relayout at matmul time.
        # Never touches the border cells zeroed above.
        for k in range(3):
            taps_ref[1:H + 1, L + 1 - k:L + 1 - k + W,
                     k * Cf:(k + 1) * Cf] = act_hwc_bf16

    def conv_from_taps(blk, cidx, acc2d):
        for dy in range(3):
            taps2d = taps_ref[dy:dy + H, L:L + W, :].reshape(HW, 3 * Cf)
            acc2d = matmul(taps2d, wb_ref[blk, cidx, dy], acc2d)
        return acc2d

    def block_body(blk, carry):
        # conv1 + ReLU (bias folded into accumulator init)
        im2col_store(acc_ref[...].astype(jnp.bfloat16).reshape(H, W, Cf))
        h = conv_from_taps(blk, 0, jnp.broadcast_to(bb_ref[blk, 0], (HW, Cf)))
        h = jnp.maximum(h, 0.0)
        # conv2 (+ residual; residual and bias folded into accumulator init)
        im2col_store(h.astype(jnp.bfloat16).reshape(H, W, Cf))
        out = conv_from_taps(
            blk, 1, acc_ref[...] + jnp.broadcast_to(bb_ref[blk, 1], (HW, Cf)))
        acc_ref[...] = out
        return carry

    lax.fori_loop(0, num_block, block_body, 0)   # trip count 0 is a no-op

    o_ref[0] = acc_ref[...].reshape(H, W, Cf).astype(o_ref.dtype)


# --------------------------------------------------------------------------
# Wrapper: one pallas_call for the whole ConvResidualBlocks forward
# --------------------------------------------------------------------------
def conv_residual_blocks(x_nhwc, params, *, vmem_limit_bytes=64 * 1024 * 1024):
    """x_nhwc: (N, H, W, Cin) f32.  Returns (N, H, W, Cf) f32.

    vmem_limit_bytes: 64 MiB is safe on every generation; raise toward
    ~100-128 MiB on v5e/v6e for large frames, keep ~48-56 MiB on v7x.
    """
    N, H, W, Cin = x_nhwc.shape
    w0, b0 = params["w0"], params["b0"]
    Cf = w0.shape[-1]
    blocks = params["blocks"]
    num_block = len(blocks)

    # Pad H/W once for the whole fused network; interior layers take their halo
    # from the zeroed borders of the VMEM taps scratch (no per-layer jnp.pad).
    xp = jnp.pad(x_nhwc, ((0, 0), (1, 1), (1, 1), (0, 0)))

    # Stem: fold dy & dx into K (single K=9*Cin matmul).  Blocks: fold dx into
    # K (three K=3*Cf matmuls per conv).  Weights cast to bf16 once here.
    w0f = w0.reshape(9 * Cin, Cf).astype(jnp.bfloat16)
    b0f = b0.reshape(1, Cf).astype(jnp.float32)
    if num_block > 0:
        wb = jnp.stack([jnp.stack([blk["w1"].reshape(3, 3 * Cf, Cf),
                                   blk["w2"].reshape(3, 3 * Cf, Cf)])
                        for blk in blocks]).astype(jnp.bfloat16)
        bb = jnp.stack([jnp.stack([blk["b1"].reshape(1, Cf),
                                   blk["b2"].reshape(1, Cf)])
                        for blk in blocks]).astype(jnp.float32)
    else:  # refs must be non-degenerate; the fori_loop never reads them
        wb = jnp.zeros((1, 2, 3, 3 * Cf, Cf), jnp.bfloat16)
        bb = jnp.zeros((1, 2, 1, Cf), jnp.float32)

    # Taps scratch: interior columns start at a sublane-aligned offset (8);
    # width covers left/right shifted writes plus the right halo, rounded to 8.
    L = 8
    WP = _round_up(L + W + 1, 8)

    kernel = functools.partial(_fused_kernel, num_block=num_block,
                               interior_col=L)

    return pl.pallas_call(
        kernel,
        out_shape=jax.ShapeDtypeStruct((N, H, W, Cf), jnp.float32),
        grid_spec=pltpu.PrefetchScalarGridSpec(
            num_scalar_prefetch=0,
            grid=(N,),                                   # one batch element / step
            in_specs=[
                pl.BlockSpec((1, H + 2, W + 2, Cin), lambda n: (n, 0, 0, 0)),
                # Constant block indices -> weights stay resident in VMEM and
                # their copies are not re-issued between grid steps.
                pl.BlockSpec(w0f.shape, lambda n: (0, 0)),
                pl.BlockSpec(b0f.shape, lambda n: (0, 0)),
                pl.BlockSpec(wb.shape, lambda n: (0, 0, 0, 0, 0)),
                pl.BlockSpec(bb.shape, lambda n: (0, 0, 0, 0)),
            ],
            out_specs=pl.BlockSpec((1, H, W, Cf), lambda n: (n, 0, 0, 0)),
            scratch_shapes=[
                pltpu.VMEM((H * W, Cf), jnp.float32),           # residual-chain acc
                pltpu.VMEM((H + 2, WP, 3 * Cf), jnp.bfloat16),  # im2col halo scratch
            ],
        ),
        compiler_params=pltpu.CompilerParams(
            dimension_semantics=("parallel",),
            vmem_limit_bytes=vmem_limit_bytes),
    )(xp, w0f, b0f, wb, bb)


# --------------------------------------------------------------------------
# Pure-JAX reference mirroring the kernel numerics exactly
# (same bf16 operands, same K-folding, same f32 accumulation order)
# --------------------------------------------------------------------------
def _dot_k(taps_bf16, w_bf16):
    return lax.dot_general(
        taps_bf16, w_bf16,
        dimension_numbers=(((taps_bf16.ndim - 1,), (0,)), ((), ())),
        preferred_element_type=jnp.float32)


def conv_residual_blocks_ref(x_nhwc, params):
    N, H, W, Cin = x_nhwc.shape
    w0, b0 = params["w0"], params["b0"]
    Cf = w0.shape[-1]

    # Stem: dy & dx folded into K (one matmul), bias-initialised accumulator.
    xp = jnp.pad(x_nhwc, ((0, 0), (1, 1), (1, 1), (0, 0))).astype(jnp.bfloat16)
    taps0 = jnp.concatenate([xp[:, dy:dy + H, dx:dx + W, :]
                             for dy in range(3) for dx in range(3)], axis=-1)
    fea = jnp.broadcast_to(b0.astype(jnp.float32), (N, H, W, Cf))
    fea = fea + _dot_k(taps0, w0.reshape(9 * Cin, Cf).astype(jnp.bfloat16))
    fea = jnp.where(fea >= 0, fea, 0.1 * fea)

    def conv3x3(x, w, acc):      # dx folded into K, three per-dy matmuls
        xpad = jnp.pad(x, ((0, 0), (1, 1), (1, 1), (0, 0))).astype(jnp.bfloat16)
        w3 = w.reshape(3, 3 * Cf, Cf).astype(jnp.bfloat16)
        for dy in range(3):
            taps = jnp.concatenate([xpad[:, dy:dy + H, dx:dx + W, :]
                                    for dx in range(3)], axis=-1)
            acc = acc + _dot_k(taps, w3[dy])
        return acc

    for blk in params["blocks"]:
        b1 = jnp.broadcast_to(blk["b1"].astype(jnp.float32), fea.shape)
        h = jnp.maximum(conv3x3(fea, blk["w1"], b1), 0.0)
        b2 = jnp.broadcast_to(blk["b2"].astype(jnp.float32), fea.shape)
        fea = conv3x3(h, blk["w2"], fea + b2)
    return fea


# --------------------------------------------------------------------------
# Deterministic parameter init (synthetic; mirrors the module's shapes, HWIO)
# --------------------------------------------------------------------------
def init_params(key, num_in_ch, num_out_ch, num_block):
    keys = jax.random.split(key, 2 + 4 * num_block)
    params = {
        "w0": 0.1 * jax.random.normal(keys[0], (3, 3, num_in_ch, num_out_ch), jnp.float32),
        "b0": 0.01 * jax.random.normal(keys[1], (num_out_ch,), jnp.float32),
        "blocks": [],
    }
    for i in range(num_block):
        k = keys[2 + 4 * i: 2 + 4 * (i + 1)]
        params["blocks"].append({
            "w1": 0.1 * jax.random.normal(k[0], (3, 3, num_out_ch, num_out_ch), jnp.float32),
            "b1": 0.01 * jax.random.normal(k[1], (num_out_ch,), jnp.float32),
            "w2": 0.1 * jax.random.normal(k[2], (3, 3, num_out_ch, num_out_ch), jnp.float32),
            "b2": 0.01 * jax.random.normal(k[3], (num_out_ch,), jnp.float32),
        })
    return params


if __name__ == "__main__":
    # Small shapes consistent with the module defaults (scaled down):
    #   batch=2, num_in_ch=4, num_out_ch=32, H=W=16, num_block=2
    N, Cin, H, W = 2, 4, 16, 16
    Cout, num_block = 32, 2

    key = jax.random.PRNGKey(0)
    kx, kp = jax.random.split(key)

    # PyTorch-style NCHW input, transposed to NHWC for the kernel.
    x_nchw = jax.random.normal(kx, (N, Cin, H, W), jnp.float32)
    x_nhwc = jnp.transpose(x_nchw, (0, 2, 3, 1))

    params = init_params(kp, Cin, Cout, num_block)

    out_nhwc = jax.jit(conv_residual_blocks)(x_nhwc, params)
    out_nhwc = jax.block_until_ready(out_nhwc)

    # Correctness check against a pure-JAX reference with matching numerics.
    ref_nhwc = jax.block_until_ready(conv_residual_blocks_ref(x_nhwc, params))
    np.testing.assert_allclose(np.asarray(out_nhwc), np.asarray(ref_nhwc),
                               rtol=2e-3, atol=2e-3)

    # Back to NCHW to match the PyTorch output convention (shape only).
    out_nchw = jnp.transpose(out_nhwc, (0, 3, 1, 2))
    assert out_nchw.shape == (N, Cout, H, W)

    print("KERNEL_OK")
</pallas_src>

<mosaic_0001>
module attributes {stable_mosaic.version = 11 : i64} {
  func.func @_fused_kernel(%arg0: i32, %arg1: memref<1x18x18x4xf32, #tpu.memory_space<vmem>>, %arg2: memref<36x32xbf16, #tpu.memory_space<vmem>>, %arg3: memref<1x32xf32, #tpu.memory_space<vmem>>, %arg4: memref<2x2x3x96x32xbf16, #tpu.memory_space<vmem>>, %arg5: memref<2x2x1x32xf32, #tpu.memory_space<vmem>>, %arg6: memref<1x16x16x32xf32, #tpu.memory_space<vmem>>, %arg7: memref<256x32xf32, #tpu.memory_space<vmem>>, %arg8: memref<18x32x96xbf16, #tpu.memory_space<vmem>>) attributes {dimension_semantics = [#tpu.dimension_semantics<parallel>], iteration_bounds = array<i64: 2>, scalar_prefetch = 0 : i64, scratch_operands = 2 : i64, tpu.core_type = #tpu.core_type<tc>, window_params = [{transform_indices = @transform_0, window_bounds = array<i64: 1, 18, 18, 4>}, {pipeline_mode = #tpu.pipeline_mode<synchronous>, transform_indices = @transform_1, window_bounds = array<i64: 36, 32>}, {pipeline_mode = #tpu.pipeline_mode<synchronous>, transform_indices = @transform_2, window_bounds = array<i64: 1, 32>}, {pipeline_mode = #tpu.pipeline_mode<synchronous>, transform_indices = @transform_3, window_bounds = array<i64: 2, 2, 3, 96, 32>}, {pipeline_mode = #tpu.pipeline_mode<synchronous>, transform_indices = @transform_4, window_bounds = array<i64: 2, 2, 1, 32>}, {transform_indices = @transform_5, window_bounds = array<i64: 1, 16, 16, 32>}]} {
    %cst = arith.constant 0.000000e+00 : bf16
    %0 = vector.broadcast %cst : bf16 to vector<1x32x96xbf16>
    %c0 = arith.constant 0 : index
    %c0_0 = arith.constant 0 : index
    %c0_1 = arith.constant 0 : index
    %1 = vector.load %arg8[%c0, %c0_0, %c0_1] : memref<18x32x96xbf16, #tpu.memory_space<vmem>>, vector<1x32x96xbf16>
    tpu.vector_store %arg8[%c0, %c0_0, %c0_1], %0 {strides = array<i32>} : memref<18x32x96xbf16, #tpu.memory_space<vmem>>, vector<1x32x96xbf16>,
    %c17 = arith.constant 17 : index
    %c0_2 = arith.constant 0 : index
    %c0_3 = arith.constant 0 : index
    %2 = vector.load %arg8[%c17, %c0_2, %c0_3] : memref<18x32x96xbf16, #tpu.memory_space<vmem>>, vector<1x32x96xbf16>
    tpu.vector_store %arg8[%c17, %c0_2, %c0_3], %0 {strides = array<i32>} : memref<18x32x96xbf16, #tpu.memory_space<vmem>>, vector<1x32x96xbf16>,
    %cst_4 = arith.constant 0.000000e+00 : bf16
    %3 = vector.broadcast %cst_4 : bf16 to vector<18x1x32xbf16>
    %c0_5 = arith.constant 0 : index
    %c8 = arith.constant 8 : index
    %c0_6 = arith.constant 0 : index
    %4 = vector.load %arg8[%c0_5, %c8, %c0_6] : memref<18x32x96xbf16, #tpu.memory_space<vmem>>, vector<18x1x32xbf16>
    tpu.vector_store %arg8[%c0_5, %c8, %c0_6], %3 {strides = array<i32>} : memref<18x32x96xbf16, #tpu.memory_space<vmem>>, vector<18x1x32xbf16>,
    %c0_7 = arith.constant 0 : index
    %c23 = arith.constant 23 : index
    %c64 = arith.constant 64 : index
    %5 = vector.load %arg8[%c0_7, %c23, %c64] : memref<18x32x96xbf16, #tpu.memory_space<vmem>>, vector<18x1x32xbf16>
    tpu.vector_store %arg8[%c0_7, %c23, %c64], %3 {strides = array<i32>} : memref<18x32x96xbf16, #tpu.memory_space<vmem>>, vector<18x1x32xbf16>,
    %c0_8 = arith.constant 0 : index
    %c0_9 = arith.constant 0 : index
    %c0_10 = arith.constant 0 : index
    %c0_11 = arith.constant 0 : index
    %6 = vector.load %arg1[%c0_8, %c0_9, %c0_10, %c0_11] : memref<1x18x18x4xf32, #tpu.memory_space<vmem>>, vector<1x18x18x4xf32>
    %7 = vector.shape_cast %6 : vector<1x18x18x4xf32> to vector<18x18x4xf32>
    %8 = arith.truncf %7 : vector<18x18x4xf32> to vector<18x18x4xbf16>
    %9 = vector.extract_strided_slice %8 {offsets = [0, 0, 0], sizes = [16, 16, 4], strides = [1, 1, 1]} : vector<18x18x4xbf16> to vector<16x16x4xbf16>
    %10 = vector.extract_strided_slice %8 {offsets = [0, 1, 0], sizes = [16, 16, 4], strides = [1, 1, 1]} : vector<18x18x4xbf16> to vector<16x16x4xbf16>
    %11 = vector.extract_strided_slice %8 {offsets = [0, 2, 0], sizes = [16, 16, 4], strides = [1, 1, 1]} : vector<18x18x4xbf16> to vector<16x16x4xbf16>
    %12 = vector.extract_strided_slice %8 {offsets = [1, 0, 0], sizes = [16, 16, 4], strides = [1, 1, 1]} : vector<18x18x4xbf16> to vector<16x16x4xbf16>
    %13 = vector.extract_strided_slice %8 {offsets = [1, 1, 0], sizes = [16, 16, 4], strides = [1, 1, 1]} : vector<18x18x4xbf16> to vector<16x16x4xbf16>
    %14 = vector.extract_strided_slice %8 {offsets = [1, 2, 0], sizes = [16, 16, 4], strides = [1, 1, 1]} : vector<18x18x4xbf16> to vector<16x16x4xbf16>
    %15 = vector.extract_strided_slice %8 {offsets = [2, 0, 0], sizes = [16, 16, 4], strides = [1, 1, 1]} : vector<18x18x4xbf16> to vector<16x16x4xbf16>
    %16 = vector.extract_strided_slice %8 {offsets = [2, 1, 0], sizes = [16, 16, 4], strides = [1, 1, 1]} : vector<18x18x4xbf16> to vector<16x16x4xbf16>
    %17 = vector.extract_strided_slice %8 {offsets = [2, 2, 0], sizes = [16, 16, 4], strides = [1, 1, 1]} : vector<18x18x4xbf16> to vector<16x16x4xbf16>
    %18 = tpu.concatenate %9, %10, %11, %12, %13, %14, %15, %16, %17 in 2 : vector<16x16x4xbf16>, vector<16x16x4xbf16>, vector<16x16x4xbf16>, vector<16x16x4xbf16>, vector<16x16x4xbf16>, vector<16x16x4xbf16>, vector<16x16x4xbf16>, vector<16x16x4xbf16>, vector<16x16x4xbf16> -> vector<16x16x36xbf16>
    %19 = vector.shape_cast %18 : vector<16x16x36xbf16> to vector<256x36xbf16>
    %c0_12 = arith.constant 0 : index
    %c0_13 = arith.constant 0 : index
    %20 = vector.load %arg3[%c0_12, %c0_13] : memref<1x32xf32, #tpu.memory_space<vmem>>, vector<1x32xf32>
    %21 = vector.shape_cast %20 : vector<1x32xf32> to vector<1x32xf32>
    %22 = vector.broadcast %21 : vector<1x32xf32> to vector<256x32xf32>
    %c0_14 = arith.constant 0 : index
    %c0_15 = arith.constant 0 : index
    %23 = vector.load %arg2[%c0_14, %c0_15] : memref<36x32xbf16, #tpu.memory_space<vmem>>, vector<36x32xbf16>
    %cst_16 = arith.constant dense<0.000000e+00> : vector<256x32xf32>
    %24 = tpu.matmul %19, %23, %cst_16 {dimension_numbers = #tpu.dot_dimension_numbers<[1], [0], [0], [1], [0, 0, 1, 1], [], []>} : vector<256x36xbf16>, vector<36x32xbf16>, vector<256x32xf32> -> vector<256x32xf32>
    %25 = arith.addf %22, %24 : vector<256x32xf32>
    %cst_17 = arith.constant 0.000000e+00 : f32
    %26 = vector.broadcast %cst_17 : f32 to vector<256x32xf32>
    %27 = arith.cmpf oge, %25, %26 : vector<256x32xf32>
    %cst_18 = arith.constant 1.000000e-01 : f32
    %28 = vector.broadcast %cst_18 : f32 to vector<256x32xf32>
    %29 = arith.mulf %28, %25 : vector<256x32xf32>
    %30 = arith.select %27, %25, %29 : vector<256x32xi1>, vector<256x32xf32>
    %c0_19 = arith.constant 0 : index
    %c0_20 = arith.constant 0 : index
    %31 = vector.load %arg7[%c0_19, %c0_20] : memref<256x32xf32, #tpu.memory_space<vmem>>, vector<256x32xf32>
    tpu.vector_store %arg7[%c0_19, %c0_20], %30 {strides = array<i32>} : memref<256x32xf32, #tpu.memory_space<vmem>>, vector<256x32xf32>,
    %c0_i32 = arith.constant 0 : i32
    %c2_i32 = arith.constant 2 : i32
    %32 = arith.addi %c0_i32, %c2_i32 : i32
    %c1_i32 = arith.constant 1 : i32
    scf.for %arg9 = %c0_i32 to %32 step %c1_i32  : i32 {
      %c0_28 = arith.constant 0 : index
      %c0_29 = arith.constant 0 : index
      %38 = vector.load %arg7[%c0_28, %c0_29] : memref<256x32xf32, #tpu.memory_space<vmem>>, vector<256x32xf32>
      %39 = arith.truncf %38 : vector<256x32xf32> to vector<256x32xbf16>
      %40 = vector.shape_cast %39 : vector<256x32xbf16> to vector<16x16x32xbf16>
      %c1 = arith.constant 1 : index
      %c9 = arith.constant 9 : index
      %c0_30 = arith.constant 0 : index
      %41 = vector.load %arg8[%c1, %c9, %c0_30] : memref<18x32x96xbf16, #tpu.memory_space<vmem>>, vector<16x16x32xbf16>
      tpu.vector_store %arg8[%c1, %c9, %c0_30], %40 {strides = array<i32>} : memref<18x32x96xbf16, #tpu.memory_space<vmem>>, vector<16x16x32xbf16>,
      %c1_31 = arith.constant 1 : index
      %c8_32 = arith.constant 8 : index
      %c32 = arith.constant 32 : index
      %42 = vector.load %arg8[%c1_31, %c8_32, %c32] : memref<18x32x96xbf16, #tpu.memory_space<vmem>>, vector<16x16x32xbf16>
      tpu.vector_store %arg8[%c1_31, %c8_32, %c32], %40 {strides = array<i32>} : memref<18x32x96xbf16, #tpu.memory_space<vmem>>, vector<16x16x32xbf16>,
      %c1_33 = arith.constant 1 : index
      %c7 = arith.constant 7 : index
      %c64_34 = arith.constant 64 : index
      %43 = vector.load %arg8[%c1_33, %c7, %c64_34] : memref<18x32x96xbf16, #tpu.memory_space<vmem>>, vector<16x16x32xbf16>
      tpu.vector_store %arg8[%c1_33, %c7, %c64_34], %40 {strides = array<i32>} : memref<18x32x96xbf16, #tpu.memory_space<vmem>>, vector<16x16x32xbf16>,
      %44 = arith.index_cast %arg9 : i32 to index
      %c0_35 = arith.constant 0 : index
      %c0_36 = arith.constant 0 : index
      %c0_37 = arith.constant 0 : index
      %45 = vector.load %arg5[%44, %c0_35, %c0_36, %c0_37] : memref<2x2x1x32xf32, #tpu.memory_space<vmem>>, vector<1x1x1x32xf32>
      %46 = vector.shape_cast %45 : vector<1x1x1x32xf32> to vector<1x32xf32>
      %47 = vector.shape_cast %46 : vector<1x32xf32> to vector<1x32xf32>
      %48 = vector.broadcast %47 : vector<1x32xf32> to vector<256x32xf32>
      %c0_38 = arith.constant 0 : index
      %c8_39 = arith.constant 8 : index
      %c0_40 = arith.constant 0 : index
      %49 = vector.load %arg8[%c0_38, %c8_39, %c0_40] : memref<18x32x96xbf16, #tpu.memory_space<vmem>>, vector<16x16x96xbf16>
      %50 = vector.shape_cast %49 : vector<16x16x96xbf16> to vector<256x96xbf16>
      %51 = arith.index_cast %arg9 : i32 to index
      %c0_41 = arith.constant 0 : index
      %c0_42 = arith.constant 0 : index
      %c0_43 = arith.constant 0 : index
      %c0_44 = arith.constant 0 : index
      %52 = vector.load %arg4[%51, %c0_41, %c0_42, %c0_43, %c0_44] : memref<2x2x3x96x32xbf16, #tpu.memory_space<vmem>>, vector<1x1x1x96x32xbf16>
      %53 = vector.shape_cast %52 : vector<1x1x1x96x32xbf16> to vector<96x32xbf16>
      %cst_45 = arith.constant dense<0.000000e+00> : vector<256x32xf32>
      %54 = tpu.matmul %50, %53, %cst_45 {dimension_numbers = #tpu.dot_dimension_numbers<[1], [0], [0], [1], [0, 0, 1, 1], [], []>} : vector<256x96xbf16>, vector<96x32xbf16>, vector<256x32xf32> -> vector<256x32xf32>
      %55 = arith.addf %48, %54 : vector<256x32xf32>
      %c1_46 = arith.constant 1 : index
      %c8_47 = arith.constant 8 : index
      %c0_48 = arith.constant 0 : index
      %56 = vector.load %arg8[%c1_46, %c8_47, %c0_48] : memref<18x32x96xbf16, #tpu.memory_space<vmem>>, vector<16x16x96xbf16>
      %57 = vector.shape_cast %56 : vector<16x16x96xbf16> to vector<256x96xbf16>
      %58 = arith.index_cast %arg9 : i32 to index
      %c0_49 = arith.constant 0 : index
      %c1_50 = arith.constant 1 : index
      %c0_51 = arith.constant 0 : index
      %c0_52 = arith.constant 0 : index
      %59 = vector.load %arg4[%58, %c0_49, %c1_50, %c0_51, %c0_52] : memref<2x2x3x96x32xbf16, #tpu.memory_space<vmem>>, vector<1x1x1x96x32xbf16>
      %60 = vector.shape_cast %59 : vector<1x1x1x96x32xbf16> to vector<96x32xbf16>
      %cst_53 = arith.constant dense<0.000000e+00> : vector<256x32xf32>
      %61 = tpu.matmul %57, %60, %cst_53 {dimension_numbers = #tpu.dot_dimension_numbers<[1], [0], [0], [1], [0, 0, 1, 1], [], []>} : vector<256x96xbf16>, vector<96x32xbf16>, vector<256x32xf32> -> vector<256x32xf32>
      %62 = arith.addf %55, %61 : vector<256x32xf32>
      %c2 = arith.constant 2 : index
      %c8_54 = arith.constant 8 : index
      %c0_55 = arith.constant 0 : index
      %63 = vector.load %arg8[%c2, %c8_54, %c0_55] : memref<18x32x96xbf16, #tpu.memory_space<vmem>>, vector<16x16x96xbf16>
      %64 = vector.shape_cast %63 : vector<16x16x96xbf16> to vector<256x96xbf16>
      %65 = arith.index_cast %arg9 : i32 to index
      %c0_56 = arith.constant 0 : index
      %c2_57 = arith.constant 2 : index
      %c0_58 = arith.constant 0 : index
      %c0_59 = arith.constant 0 : index
      %66 = vector.load %arg4[%65, %c0_56, %c2_57, %c0_58, %c0_59] : memref<2x2x3x96x32xbf16, #tpu.memory_space<vmem>>, vector<1x1x1x96x32xbf16>
      %67 = vector.shape_cast %66 : vector<1x1x1x96x32xbf16> to vector<96x32xbf16>
      %cst_60 = arith.constant dense<0.000000e+00> : vector<256x32xf32>
      %68 = tpu.matmul %64, %67, %cst_60 {dimension_numbers = #tpu.dot_dimension_numbers<[1], [0], [0], [1], [0, 0, 1, 1], [], []>} : vector<256x96xbf16>, vector<96x32xbf16>, vector<256x32xf32> -> vector<256x32xf32>
      %69 = arith.addf %62, %68 : vector<256x32xf32>
      %cst_61 = arith.constant 0.000000e+00 : f32
      %70 = vector.broadcast %cst_61 : f32 to vector<256x32xf32>
      %71 = arith.maximumf %69, %70 : vector<256x32xf32>
      %72 = arith.truncf %71 : vector<256x32xf32> to vector<256x32xbf16>
      %73 = vector.shape_cast %72 : vector<256x32xbf16> to vector<16x16x32xbf16>
      %c1_62 = arith.constant 1 : index
      %c9_63 = arith.constant 9 : index
      %c0_64 = arith.constant 0 : index
      %74 = vector.load %arg8[%c1_62, %c9_63, %c0_64] : memref<18x32x96xbf16, #tpu.memory_space<vmem>>, vector<16x16x32xbf16>
      tpu.vector_store %arg8[%c1_62, %c9_63, %c0_64], %73 {strides = array<i32>} : memref<18x32x96xbf16, #tpu.memory_space<vmem>>, vector<16x16x32xbf16>,
      %c1_65 = arith.constant 1 : index
      %c8_66 = arith.constant 8 : index
      %c32_67 = arith.constant 32 : index
      %75 = vector.load %arg8[%c1_65, %c8_66, %c32_67] : memref<18x32x96xbf16, #tpu.memory_space<vmem>>, vector<16x16x32xbf16>
      tpu.vector_store %arg8[%c1_65, %c8_66, %c32_67], %73 {strides = array<i32>} : memref<18x32x96xbf16, #tpu.memory_space<vmem>>, vector<16x16x32xbf16>,
      %c1_68 = arith.constant 1 : index
      %c7_69 = arith.constant 7 : index
      %c64_70 = arith.constant 64 : index
      %76 = vector.load %arg8[%c1_68, %c7_69, %c64_70] : memref<18x32x96xbf16, #tpu.memory_space<vmem>>, vector<16x16x32xbf16>
      tpu.vector_store %arg8[%c1_68, %c7_69, %c64_70], %73 {strides = array<i32>} : memref<18x32x96xbf16, #tpu.memory_space<vmem>>, vector<16x16x32xbf16>,
      %c0_71 = arith.constant 0 : index
      %c0_72 = arith.constant 0 : index
      %77 = vector.load %arg7[%c0_71, %c0_72] : memref<256x32xf32, #tpu.memory_space<vmem>>, vector<256x32xf32>
      %78 = arith.index_cast %arg9 : i32 to index
      %c1_73 = arith.constant 1 : index
      %c0_74 = arith.constant 0 : index
      %c0_75 = arith.constant 0 : index
      %79 = vector.load %arg5[%78, %c1_73, %c0_74, %c0_75] : memref<2x2x1x32xf32, #tpu.memory_space<vmem>>, vector<1x1x1x32xf32>
      %80 = vector.shape_cast %79 : vector<1x1x1x32xf32> to vector<1x32xf32>
      %81 = vector.shape_cast %80 : vector<1x32xf32> to vector<1x32xf32>
      %82 = vector.broadcast %81 : vector<1x32xf32> to vector<256x32xf32>
      %83 = arith.addf %77, %82 : vector<256x32xf32>
      %c0_76 = arith.constant 0 : index
      %c8_77 = arith.constant 8 : index
      %c0_78 = arith.constant 0 : index
      %84 = vector.load %arg8[%c0_76, %c8_77, %c0_78] : memref<18x32x96xbf16, #tpu.memory_space<vmem>>, vector<16x16x96xbf16>
      %85 = vector.shape_cast %84 : vector<16x16x96xbf16> to vector<256x96xbf16>
      %86 = arith.index_cast %arg9 : i32 to index
      %c1_79 = arith.constant 1 : index
      %c0_80 = arith.constant 0 : index
      %c0_81 = arith.constant 0 : index
      %c0_82 = arith.constant 0 : index
      %87 = vector.load %arg4[%86, %c1_79, %c0_80, %c0_81, %c0_82] : memref<2x2x3x96x32xbf16, #tpu.memory_space<vmem>>, vector<1x1x1x96x32xbf16>
      %88 = vector.shape_cast %87 : vector<1x1x1x96x32xbf16> to vector<96x32xbf16>
      %cst_83 = arith.constant dense<0.000000e+00> : vector<256x32xf32>
      %89 = tpu.matmul %85, %88, %cst_83 {dimension_numbers = #tpu.dot_dimension_numbers<[1], [0], [0], [1], [0, 0, 1, 1], [], []>} : vector<256x96xbf16>, vector<96x32xbf16>, vector<256x32xf32> -> vector<256x32xf32>
      %90 = arith.addf %83, %89 : vector<256x32xf32>
      %c1_84 = arith.constant 1 : index
      %c8_85 = arith.constant 8 : index
      %c0_86 = arith.constant 0 : index
      %91 = vector.load %arg8[%c1_84, %c8_85, %c0_86] : memref<18x32x96xbf16, #tpu.memory_space<vmem>>, vector<16x16x96xbf16>
      %92 = vector.shape_cast %91 : vector<16x16x96xbf16> to vector<256x96xbf16>
      %93 = arith.index_cast %arg9 : i32 to index
      %c1_87 = arith.constant 1 : index
      %c1_88 = arith.constant 1 : index
      %c0_89 = arith.constant 0 : index
      %c0_90 = arith.constant 0 : index
      %94 = vector.load %arg4[%93, %c1_87, %c1_88, %c0_89, %c0_90] : memref<2x2x3x96x32xbf16, #tpu.memory_space<vmem>>, vector<1x1x1x96x32xbf16>
      %95 = vector.shape_cast %94 : vector<1x1x1x96x32xbf16> to vector<96x32xbf16>
      %cst_91 = arith.constant dense<0.000000e+00> : vector<256x32xf32>
      %96 = tpu.matmul %92, %95, %cst_91 {dimension_numbers = #tpu.dot_dimension_numbers<[1], [0], [0], [1], [0, 0, 1, 1], [], []>} : vector<256x96xbf16>, vector<96x32xbf16>, vector<256x32xf32> -> vector<256x32xf32>
      %97 = arith.addf %90, %96 : vector<256x32xf32>
      %c2_92 = arith.constant 2 : index
      %c8_93 = arith.constant 8 : index
      %c0_94 = arith.constant 0 : index
      %98 = vector.load %arg8[%c2_92, %c8_93, %c0_94] : memref<18x32x96xbf16, #tpu.memory_space<vmem>>, vector<16x16x96xbf16>
      %99 = vector.shape_cast %98 : vector<16x16x96xbf16> to vector<256x96xbf16>
      %100 = arith.index_cast %arg9 : i32 to index
      %c1_95 = arith.constant 1 : index
      %c2_96 = arith.constant 2 : index
      %c0_97 = arith.constant 0 : index
      %c0_98 = arith.constant 0 : index
      %101 = vector.load %arg4[%100, %c1_95, %c2_96, %c0_97, %c0_98] : memref<2x2x3x96x32xbf16, #tpu.memory_space<vmem>>, vector<1x1x1x96x32xbf16>
      %102 = vector.shape_cast %101 : vector<1x1x1x96x32xbf16> to vector<96x32xbf16>
      %cst_99 = arith.constant dense<0.000000e+00> : vector<256x32xf32>
      %103 = tpu.matmul %99, %102, %cst_99 {dimension_numbers = #tpu.dot_dimension_numbers<[1], [0], [0], [1], [0, 0, 1, 1], [], []>} : vector<256x96xbf16>, vector<96x32xbf16>, vector<256x32xf32> -> vector<256x32xf32>
      %104 = arith.addf %97, %103 : vector<256x32xf32>
      %c0_100 = arith.constant 0 : index
      %c0_101 = arith.constant 0 : index
      %105 = vector.load %arg7[%c0_100, %c0_101] : memref<256x32xf32, #tpu.memory_space<vmem>>, vector<256x32xf32>
      tpu.vector_store %arg7[%c0_100, %c0_101], %104 {strides = array<i32>} : memref<256x32xf32, #tpu.memory_space<vmem>>, vector<256x32xf32>,
    }
    %c2_i32_21 = arith.constant 2 : i32
    %c0_22 = arith.constant 0 : index
    %c0_23 = arith.constant 0 : index
    %33 = vector.load %arg7[%c0_22, %c0_23] : memref<256x32xf32, #tpu.memory_space<vmem>>, vector<256x32xf32>
    %34 = vector.shape_cast %33 : vector<256x32xf32> to vector<16x16x32xf32>
    %c0_24 = arith.constant 0 : index
    %c0_25 = arith.constant 0 : index
    %c0_26 = arith.constant 0 : index
    %c0_27 = arith.constant 0 : index
    %35 = vector.load %arg6[%c0_24, %c0_25, %c0_26, %c0_27] : memref<1x16x16x32xf32, #tpu.memory_space<vmem>>, vector<1x16x16x32xf32>
    %36 = vector.shape_cast %35 : vector<1x16x16x32xf32> to vector<16x16x32xf32>
    %37 = vector.shape_cast %34 : vector<16x16x32xf32> to vector<1x16x16x32xf32>
    tpu.vector_store %arg6[%c0_24, %c0_25, %c0_26, %c0_27], %37 {strides = array<i32>} : memref<1x16x16x32xf32, #tpu.memory_space<vmem>>, vector<1x16x16x32xf32>,
    return
  }
  func.func @transform_0(%arg0: i32) -> (i32, i32, i32, i32) {
    %c0_i32 = arith.constant 0 : i32
    %c0_i32_0 = arith.constant 0 : i32
    %c0_i32_1 = arith.constant 0 : i32
    %c0_i32_2 = arith.constant 0 : i32
    return %arg0, %c0_i32, %c0_i32_0, %c0_i32_1 : i32, i32, i32, i32
  }
  func.func @transform_1(%arg0: i32) -> (i32, i32) {
    %c0_i32 = arith.constant 0 : i32
    %c0_i32_0 = arith.constant 0 : i32
    %c0_i32_1 = arith.constant 0 : i32
    return %c0_i32, %c0_i32_0 : i32, i32
  }
  func.func @transform_2(%arg0: i32) -> (i32, i32) {
    %c0_i32 = arith.constant 0 : i32
    %c0_i32_0 = arith.constant 0 : i32
    %c0_i32_1 = arith.constant 0 : i32
    return %c0_i32, %c0_i32_0 : i32, i32
  }
  func.func @transform_3(%arg0: i32) -> (i32, i32, i32, i32, i32) {
    %c0_i32 = arith.constant 0 : i32
    %c0_i32_0 = arith.constant 0 : i32
    %c0_i32_1 = arith.constant 0 : i32
    %c0_i32_2 = arith.constant 0 : i32
    %c0_i32_3 = arith.constant 0 : i32
    %c0_i32_4 = arith.constant 0 : i32
    return %c0_i32, %c0_i32_0, %c0_i32_1, %c0_i32_2, %c0_i32_3 : i32, i32, i32, i32, i32
  }
  func.func @transform_4(%arg0: i32) -> (i32, i32, i32, i32) {
    %c0_i32 = arith.constant 0 : i32
    %c0_i32_0 = arith.constant 0 : i32
    %c0_i32_1 = arith.constant 0 : i32
    %c0_i32_2 = arith.constant 0 : i32
    %c0_i32_3 = arith.constant 0 : i32
    return %c0_i32, %c0_i32_0, %c0_i32_1, %c0_i32_2 : i32, i32, i32, i32
  }
  func.func @transform_5(%arg0: i32) -> (i32, i32, i32, i32) {
    %c0_i32 = arith.constant 0 : i32
    %c0_i32_0 = arith.constant 0 : i32
    %c0_i32_1 = arith.constant 0 : i32
    %c0_i32_2 = arith.constant 0 : i32
    return %arg0, %c0_i32, %c0_i32_0, %c0_i32_1 : i32, i32, i32, i32
  }
}

</mosaic_0001>

<llo_original>
// kernel: conv_residual_blocks.1
$region0: #{conv_residual_blocks.1}
  #allocation0 [shape = 'u32[]', space=smem, size = 0x4, offset = 0x4, fixed_abs, tag = 'smem constant byte address 0x4 - core index']
  #allocation1 [shape = 'u32[144,128]{1,0:T(1,128)}', space=vmem, size = 0x12000, scoped, tag = 'internal scratch']
  #allocation2 [shape = 'f32[256,32]{1,0:T(8,128)}', space=vmem, size = 0x20000, scoped, tag = 'scratch operand']
  #allocation3 [shape = 'bf16[18,32,96]{2,1,0:T(16,128)(2,1)}', space=vmem, size = 0x24000, scoped, tag = 'scratch operand']
  %s0 = inlined_call_operand.hbm [shape: f32[2,18,18,4], index: 0, kind: input, shape index: {}]
  %s1 = inlined_call_operand.hbm [shape: bf16[36,32], index: 1, kind: input, shape index: {}]
  %s2 = inlined_call_operand.hbm [shape: f32[1,32], index: 2, kind: input, shape index: {}]
  %s3 = inlined_call_operand.hbm [shape: bf16[2,2,3,96,32], index: 3, kind: input, shape index: {}]
  %s4 = inlined_call_operand.hbm [shape: f32[2,2,1,32], index: 4, kind: input, shape index: {}]
  %s5 = inlined_call_operand.hbm [shape: f32[2,16,16,32], index: 5, kind: output, shape index: {}]
  %s6 = sld [smem:[#allocation0]]
  $region80: #{conv_residual_blocks.1} parent=0
    _
  %s8 = ssub.s32 1, %s6
  %s9 = scalar_select 0, %s8, %s6
  $region1: #{conv_residual_blocks.1} parent=0
    #allocation4 [shape = 'u8[442368]{0}', space=vmem, size = 0x6c000, scoped, tag = 'input window, operand 0']
    #allocation5 [shape = 's32[2]{0}', space=sflag, size = 0x8, scoped, tag = 'scoped memory for conv_residual_blocks.1']
    #allocation6 [shape = 's32[2]{0}', space=sflag, size = 0x8, scoped, tag = 'scoped memory for conv_residual_blocks.1']
    #allocation7 [shape = 'u8[10240]{0}', space=vmem, size = 0x2800, scoped, tag = 'input window, operand 1, single buffered']
    #allocation8 [shape = 's32[1]{0}', space=sflag, size = 0x4, scoped, tag = 'scoped memory for conv_residual_blocks.1']
    #allocation9 [shape = 'u8[512]{0}', space=vmem, size = 0x400, scoped, tag = 'input window, operand 2, single buffered']
    #allocation10 [shape = 'u8[294912]{0}', space=vmem, size = 0x48000, scoped, tag = 'input window, operand 3, single buffered']
    #allocation11 [shape = 's32[1]{0}', space=sflag, size = 0x4, scoped, tag = 'scoped memory for conv_residual_blocks.1']
    #allocation12 [shape = 'u8[2048]{0}', space=vmem, size = 0x800, scoped, tag = 'input window, operand 4, single buffered']
    #allocation13 [shape = 'u8[262144]{0}', space=vmem, size = 0x40000, scoped, tag = 'output window, operand 0']
    %10 = vsyncpa [#allocation5], 0
    %s11 = scalar_lea.sflag [#allocation5], 1
    %12 = vsyncpa %s11, 0
    %13 = vsyncpa [#allocation8], 0
    %14 = vsyncpa [#allocation11], 0
    %15 = vsyncpa [#allocation6], 0
    %s16 = scalar_lea.sflag [#allocation6], 1
    %17 = vsyncpa %s16, 0
    loop: start=0, step=1, limit=4
    $region2: #{conv_residual_blocks.1} parent=1 // loop_pre_header
      _
    $region3: #{conv_residual_blocks.1} parent=1 // loop_header
      %s19 = sphi 0, %s23
      %p20 = scmp.ge.s32.totalorder %s19, 4
      %s29 = sphi 0, %s31
      %s32 = sphi 0, %s29
      %s33 = sphi 0, %s32
      %s49 = sphi 0, %s33
      %s53 = sphi 0, %s53
      %s55 = sphi 0, %s53
      %s56 = sphi 0, %s55
      %s70 = sphi 0, %s56
      %s74 = sphi 0, %s74
      %s76 = sphi 0, %s74
      %s77 = sphi 0, %s76
      %s91 = sphi 0, %s77
      %s95 = sphi 0, %s95
      %s97 = sphi 0, %s95
      %s98 = sphi 0, %s97
      %s112 = sphi 0, %s98
      %s116 = sphi 0, %s116
      %s118 = sphi 0, %s116
      %s119 = sphi 0, %s118
      %s133 = sphi 0, %s119
      %s139 = sphi 0, %s141
      %s142 = sphi 0, %s139
      %s143 = sphi 0, %s142
      %s159 = sphi 0, %s143
    $region4: #{conv_residual_blocks.1} parent=1 // loop_header_branch
      %22 = sbr.rel (%p20) target = $region8
    $region5: #{conv_residual_blocks.1} parent=1 // loop_body
      %s24 = ssub.s32 %s19, 1
      %s25 = ssub.s32 %s19, 2
      %s26 = sadd.s32 %s19, 1
      %s27 = ssub.s32 %s19, %s26
      %p28 = scmp.eq.s32.totalorder %s27, 0
      %s30 = sadd.s32 %s29, 1
      %s31 = scalar_select %p28, %s29, %s30
      %p34 = pneg %p28
      %p35 = scmp.eq.s32.totalorder %s19, 1
      %p36 = por %p34, %p35
      %p37 = scmp.ne.s32.totalorder %s29, %s32
      %p38 = scmp.eq.s32.totalorder %s19, 0
      %p39 = por %p37, %p38
      %p40 = scmp.ne.s32.totalorder %s29, %s32
      %p41 = scmp.eq.s32.totalorder %s24, 1
      %p42 = por %p40, %p41
      %p43 = scmp.ne.s32.totalorder %s32, %s33
      %p44 = scmp.eq.s32.totalorder %s24, 0
      %p45 = por %p43, %p44
      %p46 = scmp.ne.s32.totalorder %s32, %s33
      %p47 = scmp.eq.s32.totalorder %s25, 1
      %p48 = por %p46, %p47
      %p50 = scmp.ne.s32.totalorder %s33, %s49
      %p51 = scmp.eq.s32.totalorder %s25, 0
      %p52 = por %p50, %p51
      %s54 = sadd.s32 %s53, 1
      %p57 = scmp.eq.s32.totalorder %s19, 1
      %p58 = scmp.ne.s32.totalorder %s53, %s55
      %p59 = scmp.eq.s32.totalorder %s19, 0
      %p60 = por %p58, %p59
      %p61 = scmp.ne.s32.totalorder %s53, %s55
      %p62 = scmp.eq.s32.totalorder %s24, 1
      %p63 = por %p61, %p62
      %p64 = scmp.ne.s32.totalorder %s55, %s56
      %p65 = scmp.eq.s32.totalorder %s24, 0
      %p66 = por %p64, %p65
      %p67 = scmp.ne.s32.totalorder %s55, %s56
      %p68 = scmp.eq.s32.totalorder %s25, 1
      %p69 = por %p67, %p68
      %p71 = scmp.ne.s32.totalorder %s56, %s70
      %p72 = scmp.eq.s32.totalorder %s25, 0
      %p73 = por %p71, %p72
      %s75 = sadd.s32 %s74, 1
      %p78 = scmp.eq.s32.totalorder %s19, 1
      %p79 = scmp.ne.s32.totalorder %s74, %s76
      %p80 = scmp.eq.s32.totalorder %s19, 0
      %p81 = por %p79, %p80
      %p82 = scmp.ne.s32.totalorder %s74, %s76
      %p83 = scmp.eq.s32.totalorder %s24, 1
      %p84 = por %p82, %p83
      %p85 = scmp.ne.s32.totalorder %s76, %s77
      %p86 = scmp.eq.s32.totalorder %s24, 0
      %p87 = por %p85, %p86
      %p88 = scmp.ne.s32.totalorder %s76, %s77
      %p89 = scmp.eq.s32.totalorder %s25, 1
      %p90 = por %p88, %p89
      %p92 = scmp.ne.s32.totalorder %s77, %s91
      %p93 = scmp.eq.s32.totalorder %s25, 0
      %p94 = por %p92, %p93
      %s96 = sadd.s32 %s95, 1
      %p99 = scmp.eq.s32.totalorder %s19, 1
      %p100 = scmp.ne.s32.totalorder %s95, %s97
      %p101 = scmp.eq.s32.totalorder %s19, 0
      %p102 = por %p100, %p101
      %p103 = scmp.ne.s32.totalorder %s95, %s97
      %p104 = scmp.eq.s32.totalorder %s24, 1
      %p105 = por %p103, %p104
      %p106 = scmp.ne.s32.totalorder %s97, %s98
      %p107 = scmp.eq.s32.totalorder %s24, 0
      %p108 = por %p106, %p107
      %p109 = scmp.ne.s32.totalorder %s97, %s98
      %p110 = scmp.eq.s32.totalorder %s25, 1
      %p111 = por %p109, %p110
      %p113 = scmp.ne.s32.totalorder %s98, %s112
      %p114 = scmp.eq.s32.totalorder %s25, 0
      %p115 = por %p113, %p114
      %s117 = sadd.s32 %s116, 1
      %p120 = scmp.eq.s32.totalorder %s19, 1
      %p121 = scmp.ne.s32.totalorder %s116, %s118
      %p122 = scmp.eq.s32.totalorder %s19, 0
      %p123 = por %p121, %p122
      %p124 = scmp.ne.s32.totalorder %s116, %s118
      %p125 = scmp.eq.s32.totalorder %s24, 1
      %p126 = por %p124, %p125
      %p127 = scmp.ne.s32.totalorder %s118, %s119
      %p128 = scmp.eq.s32.totalorder %s24, 0
      %p129 = por %p127, %p128
      %p130 = scmp.ne.s32.totalorder %s118, %s119
      %p131 = scmp.eq.s32.totalorder %s25, 1
      %p132 = por %p130, %p131
      %p134 = scmp.ne.s32.totalorder %s119, %s133
      %p135 = scmp.eq.s32.totalorder %s25, 0
      %p136 = por %p134, %p135
      %s137 = ssub.s32 %s19, %s26
      %p138 = scmp.eq.s32.totalorder %s137, 0
      %s140 = sadd.s32 %s139, 1
      %s141 = scalar_select %p138, %s139, %s140
      %p144 = pneg %p138
      %p145 = scmp.eq.s32.totalorder %s19, 1
      %p146 = por %p144, %p145
      %p147 = scmp.ne.s32.totalorder %s139, %s142
      %p148 = scmp.eq.s32.totalorder %s19, 0
      %p149 = por %p147, %p148
      %p150 = scmp.ne.s32.totalorder %s139, %s142
      %p151 = scmp.eq.s32.totalorder %s24, 1
      %p152 = por %p150, %p151
      %p153 = scmp.ne.s32.totalorder %s142, %s143
      %p154 = scmp.eq.s32.totalorder %s24, 0
      %p155 = por %p153, %p154
      %p156 = scmp.ne.s32.totalorder %s142, %s143
      %p157 = scmp.eq.s32.totalorder %s25, 1
      %p158 = por %p156, %p157
      %p160 = scmp.ne.s32.totalorder %s143, %s159
      %p161 = scmp.eq.s32.totalorder %s25, 0
      %p162 = por %p160, %p161
      %p163 = scmp.le.s32.totalorder 1, %s19
      %p164 = scmp.lt.s32.totalorder %s19, 3
      %p165 = pnand %p163, %p164
      %p166 = pneg %p165
      // Predicated region
      $region9: #{conv_residual_blocks.1} parent=5 // pred_check
        _
      $region10: #{conv_residual_blocks.1} parent=5 // pred_check_branch
        %168 = sbr.rel (%p165) target = $region12
      $region11: #{conv_residual_blocks.1} parent=5 // pred_region
        %s169 = ssub.s32 %s19, 1
        // Predicated region
        $region13: #{conv_residual_blocks.1} parent=11 // pred_check
          %p170 = pneg %p66
        $region14: #{conv_residual_blocks.1} parent=11 // pred_check_branch
          %172 = sbr.rel (%p170) target = $region16
        $region15: #{conv_residual_blocks.1} parent=11 // pred_region
          %s174 = ssub.s32 320, 320
          %175 = vsyncadd [#allocation8], %s174
          %s176 = sshll.u32 [#allocation7], 4
          %s177 = int_to_ptr.vmem [resolvable:$true] %s176
          %182 = dma.hbm_to_vmem [thread:$0]  %s1, 320, %s177, [#allocation8], 64, 64, 4
        $region16: #{conv_residual_blocks.1} parent=11 // pred_fallthru
          _
        // Predicated region
        $region17: #{conv_residual_blocks.1} parent=11 // pred_check
          %p183 = pneg %p87
        $region18: #{conv_residual_blocks.1} parent=11 // pred_check_branch
          %185 = sbr.rel (%p183) target = $region20
        $region19: #{conv_residual_blocks.1} parent=11 // pred_region
          %s187 = ssub.s32 16, 16
          %188 = vsyncadd [#allocation8], %s187
          %s190 = sshll.u32 [#allocation9], 4
          %s191 = int_to_ptr.vmem [resolvable:$true] %s190
          %193 = dma.hbm_to_vmem [thread:$0]  %s2, 16, %s191, [#allocation8]
        $region20: #{conv_residual_blocks.1} parent=11 // pred_fallthru
          _
        // Predicated region
        $region21: #{conv_residual_blocks.1} parent=11 // pred_check
          %p194 = pneg %p108
        $region22: #{conv_residual_blocks.1} parent=11 // pred_check_branch
          %196 = sbr.rel (%p194) target = $region24
        $region23: #{conv_residual_blocks.1} parent=11 // pred_region
          %s198 = ssub.s32 9216, 9216
          %199 = vsyncadd [#allocation11], %s198
          %s200 = sshll.u32 [#allocation10], 4
          %s201 = int_to_ptr.vmem [resolvable:$true] %s200
          %206 = dma.hbm_to_vmem [thread:$0]  %s3, 9216, %s201, [#allocation11], 64, 64, 4
        $region24: #{conv_residual_blocks.1} parent=11 // pred_fallthru
          _
        // Predicated region
        $region25: #{conv_residual_blocks.1} parent=11 // pred_check
          %p207 = pneg %p129
        $region26: #{conv_residual_blocks.1} parent=11 // pred_check_branch
          %209 = sbr.rel (%p207) target = $region28
        $region27: #{conv_residual_blocks.1} parent=11 // pred_region
          %s211 = ssub.s32 64, 64
          %212 = vsyncadd [#allocation11], %s211
          %s213 = sshll.u32 [#allocation12], 4
          %s214 = int_to_ptr.vmem [resolvable:$true] %s213
          %219 = dma.hbm_to_vmem [thread:$0]  %s4, 64, %s214, [#allocation11], 16, 16, 1
        $region28: #{conv_residual_blocks.1} parent=11 // pred_fallthru
          _
      $region12: #{conv_residual_blocks.1} parent=5 // pred_fallthru
        _
      %p220 = scmp.lt.s32.totalorder %s19, 2
      // Predicated region
      $region29: #{conv_residual_blocks.1} parent=5 // pred_check
        %p221 = pneg %p220
      $region30: #{conv_residual_blocks.1} parent=5 // pred_check_branch
        %223 = sbr.rel (%p221) target = $region32
      $region31: #{conv_residual_blocks.1} parent=5 // pred_region
        // Predicated region
        $region33: #{conv_residual_blocks.1} parent=31 // pred_check
          %p224 = pneg %p39
        $region34: #{conv_residual_blocks.1} parent=31 // pred_check_branch
          %226 = sbr.rel (%p224) target = $region36
        $region35: #{conv_residual_blocks.1} parent=31 // pred_region
          %s227 = sand.u32 %s29, 1
          %s228 = scalar_lea.sflag [#allocation5], %s227
          %s229 = sand.u32 %s29, 1
          %s230 = smul.addr %s229, 432
          %s231 = scalar_lea.vmem [#allocation4], %s230
          %s233 = ssub.s32 6912, 6912
          %234 = vsyncadd %s228, %s233
          %s235 = smul.addr %s19, 54
          %s236 = smul.addr %s235, 128
          %s237 = scalar_lea.hbm %s0, %s236
          %s238 = sshll.u32 %s231, 4
          %s239 = int_to_ptr.vmem [resolvable:$true] %s238
          %244 = dma.hbm_to_vmem [thread:$0]  %s237, 6912, %s239, %s228, 128, 128, 8
        $region36: #{conv_residual_blocks.1} parent=31 // pred_fallthru
          _
      $region32: #{conv_residual_blocks.1} parent=5 // pred_fallthru
        _
      %p245 = scmp.le.s32.totalorder 1, %s19
      %p246 = scmp.lt.s32.totalorder %s19, 3
      %p247 = pnand %p245, %p246
      %p248 = pneg %p247
      // Predicated region
      $region37: #{conv_residual_blocks.1} parent=5 // pred_check
        _
      $region38: #{conv_residual_blocks.1} parent=5 // pred_check_branch
        %250 = sbr.rel (%p247) target = $region40
      $region39: #{conv_residual_blocks.1} parent=5 // pred_region
        %s251 = ssub.s32 %s19, 1
        %s252 = sand.u32 %s32, 1
        %s253 = scalar_lea.sflag [#allocation5], %s252
        %s254 = sand.u32 %s32, 1
        %s255 = smul.addr %s254, 432
        %s256 = scalar_lea.vmem [#allocation4], %s255
        // Predicated region
        $region41: #{conv_residual_blocks.1} parent=39 // pred_check
          %p257 = pneg %p45
        $region42: #{conv_residual_blocks.1} parent=39 // pred_check_branch
          %259 = sbr.rel (%p257) target = $region44
        $region43: #{conv_residual_blocks.1} parent=39 // pred_region
          %260 = dma.done %s253, 6912
        $region44: #{conv_residual_blocks.1} parent=39 // pred_fallthru
          _
        // Predicated region
        $region45: #{conv_residual_blocks.1} parent=39 // pred_check
          %p261 = pneg %p66
        $region46: #{conv_residual_blocks.1} parent=39 // pred_check_branch
          %263 = sbr.rel (%p261) target = $region48
        $region47: #{conv_residual_blocks.1} parent=39 // pred_region
          %264 = dma.done [#allocation8], 320
        $region48: #{conv_residual_blocks.1} parent=39 // pred_fallthru
          _
        // Predicated region
        $region49: #{conv_residual_blocks.1} parent=39 // pred_check
          %p265 = pneg %p87
        $region50: #{conv_residual_blocks.1} parent=39 // pred_check_branch
          %267 = sbr.rel (%p265) target = $region52
        $region51: #{conv_residual_blocks.1} parent=39 // pred_region
          %268 = dma.done [#allocation8], 16
        $region52: #{conv_residual_blocks.1} parent=39 // pred_fallthru
          _
        // Predicated region
        $region53: #{conv_residual_blocks.1} parent=39 // pred_check
          %p269 = pneg %p108
        $region54: #{conv_residual_blocks.1} parent=39 // pred_check_branch
          %271 = sbr.rel (%p269) target = $region56
        $region55: #{conv_residual_blocks.1} parent=39 // pred_region
          %272 = dma.done [#allocation11], 9216
        $region56: #{conv_residual_blocks.1} parent=39 // pred_fallthru
          _
        // Predicated region
        $region57: #{conv_residual_blocks.1} parent=39 // pred_check
          %p273 = pneg %p129
        $region58: #{conv_residual_blocks.1} parent=39 // pred_check_branch
          %275 = sbr.rel (%p273) target = $region60
        $region59: #{conv_residual_blocks.1} parent=39 // pred_region
          %276 = dma.done [#allocation11], 64
        $region60: #{conv_residual_blocks.1} parent=39 // pred_fallthru
          _
        %s277 = sand.u32 %s32, 1
        %s278 = scalar_lea.sflag [#allocation5], %s277
        %s279 = sand.u32 %s32, 1
        %s280 = smul.addr %s279, 432
        %s281 = scalar_lea.vmem [#allocation4], %s280
        %p282 = pneg %p45
        %p283 = pneg %p42
        %p284 = pneg %p66
        %p285 = pneg %p63
        %p286 = pneg %p87
        %p287 = pneg %p84
        %p288 = pneg %p108
        %p289 = pneg %p105
        %p290 = pneg %p129
        %p291 = pneg %p126
        %p292 = pneg %p155
        %p293 = pneg %p152
        %s294 = sand.u32 %s142, 1
        %s295 = scalar_lea.sflag [#allocation6], %s294
        %s296 = sand.u32 %s142, 1
        %s297 = smul.addr %s296, 256
        %s298 = scalar_lea.vmem [#allocation13], %s297
        %vm300 = vcmask 785408
        %301 = vst.msk [vmem:[#allocation3] sm:$0xff] %vm300, 0
        %302 = vst.msk [vmem:[#allocation3 + $0x8] sm:$0xff] %vm300, 0
        %s303 = scalar_lea.vmem [#allocation3], 272
        %304 = vst.msk [vmem:[%s303] sm:$0xff] %vm300, 0
        %305 = vst.msk [vmem:[%s303 + $0x8] sm:$0xff] %vm300, 0
        %vm306 = vcmask 258052
        %vm307 = vsmask.f32 4352
        %vm308 = vmand %vm306, %vm307
        %v309 = vld [vmem:[#allocation3] sm:$0x10]
        %v310 = vsel %vm308, 0, %v309
        %311 = vst [vmem:[#allocation3] sm:$0x10] %v310
        %v312 = vld [vmem:[#allocation3 + $0x10] sm:$0x10]
        %v313 = vsel %vm308, 0, %v312
        %314 = vst [vmem:[#allocation3 + $0x10] sm:$0x10] %v313
        %v315 = vld [vmem:[#allocation3 + $0x20] sm:$0x10]
        %v316 = vsel %vm308, 0, %v315
        %317 = vst [vmem:[#allocation3 + $0x20] sm:$0x10] %v316
        %v318 = vld [vmem:[#allocation3 + $0x30] sm:$0x10]
        %v319 = vsel %vm308, 0, %v318
        %320 = vst [vmem:[#allocation3 + $0x30] sm:$0x10] %v319
        %v321 = vld [vmem:[#allocation3 + $0x40] sm:$0x10]
        %v322 = vsel %vm308, 0, %v321
        %323 = vst [vmem:[#allocation3 + $0x40] sm:$0x10] %v322
        %v324 = vld [vmem:[#allocation3 + $0x50] sm:$0x10]
        %v325 = vsel %vm308, 0, %v324
        %326 = vst [vmem:[#allocation3 + $0x50] sm:$0x10] %v325
        %v327 = vld [vmem:[#allocation3 + $0x60] sm:$0x10]
        %v328 = vsel %vm308, 0, %v327
        %329 = vst [vmem:[#allocation3 + $0x60] sm:$0x10] %v328
        %v330 = vld [vmem:[#allocation3 + $0x70] sm:$0x10]
        %v331 = vsel %vm308, 0, %v330
        %332 = vst [vmem:[#allocation3 + $0x70] sm:$0x10] %v331
        %v333 = vld [vmem:[#allocation3 + $0x80] sm:$0x10]
        %v334 = vsel %vm308, 0, %v333
        %335 = vst [vmem:[#allocation3 + $0x80] sm:$0x10] %v334
        %v336 = vld [vmem:[#allocation3 + $0x90] sm:$0x10]
        %v337 = vsel %vm308, 0, %v336
        %338 = vst [vmem:[#allocation3 + $0x90] sm:$0x10] %v337
        %v339 = vld [vmem:[#allocation3 + $0xa0] sm:$0x10]
        %v340 = vsel %vm308, 0, %v339
        %341 = vst [vmem:[#allocation3 + $0xa0] sm:$0x10] %v340
        %v342 = vld [vmem:[#allocation3 + $0xb0] sm:$0x10]
        %v343 = vsel %vm308, 0, %v342
        %344 = vst [vmem:[#allocation3 + $0xb0] sm:$0x10] %v343
        %v345 = vld [vmem:[#allocation3 + $0xc0] sm:$0x10]
        %v346 = vsel %vm308, 0, %v345
        %347 = vst [vmem:[#allocation3 + $0xc0] sm:$0x10] %v346
        %v348 = vld [vmem:[#allocation3 + $0xd0] sm:$0x10]
        %v349 = vsel %vm308, 0, %v348
        %350 = vst [vmem:[#allocation3 + $0xd0] sm:$0x10] %v349
        %v351 = vld [vmem:[#allocation3 + $0xe0] sm:$0x10]
        %v352 = vsel %vm308, 0, %v351
        %353 = vst [vmem:[#allocation3 + $0xe0] sm:$0x10] %v352
        %v354 = vld [vmem:[#allocation3 + $0xf0] sm:$0x10]
        %v355 = vsel %vm308, 0, %v354
        %356 = vst [vmem:[#allocation3 + $0xf0] sm:$0x10] %v355
        %v357 = vld [vmem:[#allocation3 + $0x100] sm:$0x10]
        %v358 = vsel %vm308, 0, %v357
        %359 = vst [vmem:[#allocation3 + $0x100] sm:$0x10] %v358
        %v360 = vld [vmem:[#allocation3 + $0x110] sm:$0x10]
        %v361 = vsel %vm308, 0, %v360
        %362 = vst [vmem:[#allocation3 + $0x110] sm:$0x10] %v361
        %vm363 = vcmask 781827
        %vm364 = vsmask.f32 7950
        %vm365 = vmand %vm363, %vm364
        %v366 = vld [vmem:[#allocation3 + $0x8] sm:$0x8]
        %v367 = vsel %vm365, 0, %v366
        %368 = vst [vmem:[#allocation3 + $0x8] sm:$0x8] %v367
        %v369 = vld [vmem:[#allocation3 + $0x18] sm:$0x8]
        %v370 = vsel %vm365, 0, %v369
        %371 = vst [vmem:[#allocation3 + $0x18] sm:$0x8] %v370
        %v372 = vld [vmem:[#allocation3 + $0x28] sm:$0x8]
        %v373 = vsel %vm365, 0, %v372
        %374 = vst [vmem:[#allocation3 + $0x28] sm:$0x8] %v373
        %v375 = vld [vmem:[#allocation3 + $0x38] sm:$0x8]
        %v376 = vsel %vm365, 0, %v375
        %377 = vst [vmem:[#allocation3 + $0x38] sm:$0x8] %v376
        %v378 = vld [vmem:[#allocation3 + $0x48] sm:$0x8]
        %v379 = vsel %vm365, 0, %v378
        %380 = vst [vmem:[#allocation3 + $0x48] sm:$0x8] %v379
        %v381 = vld [vmem:[#allocation3 + $0x58] sm:$0x8]
        %v382 = vsel %vm365, 0, %v381
        %383 = vst [vmem:[#allocation3 + $0x58] sm:$0x8] %v382
        %v384 = vld [vmem:[#allocation3 + $0x68] sm:$0x8]
        %v385 = vsel %vm365, 0, %v384
        %386 = vst [vmem:[#allocation3 + $0x68] sm:$0x8] %v385
        %v387 = vld [vmem:[#allocation3 + $0x78] sm:$0x8]
        %v388 = vsel %vm365, 0, %v387
        %389 = vst [vmem:[#allocation3 + $0x78] sm:$0x8] %v388
        %v390 = vld [vmem:[#allocation3 + $0x88] sm:$0x8]
        %v391 = vsel %vm365, 0, %v390
        %392 = vst [vmem:[#allocation3 + $0x88] sm:$0x8] %v391
        %v393 = vld [vmem:[#allocation3 + $0x98] sm:$0x8]
        %v394 = vsel %vm365, 0, %v393
        %395 = vst [vmem:[#allocation3 + $0x98] sm:$0x8] %v394
        %v396 = vld [vmem:[#allocation3 + $0xa8] sm:$0x8]
        %v397 = vsel %vm365, 0, %v396
        %398 = vst [vmem:[#allocation3 + $0xa8] sm:$0x8] %v397
        %v399 = vld [vmem:[#allocation3 + $0xb8] sm:$0x8]
        %v400 = vsel %vm365, 0, %v399
        %401 = vst [vmem:[#allocation3 + $0xb8] sm:$0x8] %v400
        %v402 = vld [vmem:[#allocation3 + $0xc8] sm:$0x8]
        %v403 = vsel %vm365, 0, %v402
        %404 = vst [vmem:[#allocation3 + $0xc8] sm:$0x8] %v403
        %v405 = vld [vmem:[#allocation3 + $0xd8] sm:$0x8]
        %v406 = vsel %vm365, 0, %v405
        %407 = vst [vmem:[#allocation3 + $0xd8] sm:$0x8] %v406
        %v408 = vld [vmem:[#allocation3 + $0xe8] sm:$0x8]
        %v409 = vsel %vm365, 0, %v408
        %410 = vst [vmem:[#allocation3 + $0xe8] sm:$0x8] %v409
        %v411 = vld [vmem:[#allocation3 + $0xf8] sm:$0x8]
        %v412 = vsel %vm365, 0, %v411
        %413 = vst [vmem:[#allocation3 + $0xf8] sm:$0x8] %v412
        %v414 = vld [vmem:[#allocation3 + $0x108] sm:$0x8]
        %v415 = vsel %vm365, 0, %v414
        %416 = vst [vmem:[#allocation3 + $0x108] sm:$0x8] %v415
        %v417 = vld [vmem:[#allocation3 + $0x118] sm:$0x8]
        %v418 = vsel %vm365, 0, %v417
        %419 = vst [vmem:[#allocation3 + $0x118] sm:$0x8] %v418
        %v420 = vld [vmem:[%s256] sm:$0xff]
        %v421 = vld [vmem:[%s256 + $0x8] sm:$0xff]
        %v422 = vld [vmem:[%s256 + $0x10] sm:$0x3]
        %v423 = vld [vmem:[%s256 + $0x18] sm:$0xff]
        %v424 = vld [vmem:[%s256 + $0x20] sm:$0xff]
        %v425 = vld [vmem:[%s256 + $0x28] sm:$0x3]
        %v426 = vld [vmem:[%s256 + $0x30] sm:$0xff]
        %v427 = vld [vmem:[%s256 + $0x38] sm:$0xff]
        %v428 = vld [vmem:[%s256 + $0x40] sm:$0x3]
        %v429 = vld [vmem:[%s256 + $0x48] sm:$0xff]
        %v430 = vld [vmem:[%s256 + $0x50] sm:$0xff]
        %v431 = vld [vmem:[%s256 + $0x58] sm:$0x3]
        %v432 = vld [vmem:[%s256 + $0x60] sm:$0xff]
        %v433 = vld [vmem:[%s256 + $0x68] sm:$0xff]
        %v434 = vld [vmem:[%s256 + $0x70] sm:$0x3]
        %v435 = vld [vmem:[%s256 + $0x78] sm:$0xff]
        %v436 = vld [vmem:[%s256 + $0x80] sm:$0xff]
        %v437 = vld [vmem:[%s256 + $0x88] sm:$0x3]
        %v438 = vld [vmem:[%s256 + $0x90] sm:$0xff]
        %v439 = vld [vmem:[%s256 + $0x98] sm:$0xff]
        %v440 = vld [vmem:[%s256 + $0xa0] sm:$0x3]
        %v441 = vld [vmem:[%s256 + $0xa8] sm:$0xff]
        %v442 = vld [vmem:[%s256 + $0xb0] sm:$0xff]
        %v443 = vld [vmem:[%s256 + $0xb8] sm:$0x3]
        %v444 = vld [vmem:[%s256 + $0xc0] sm:$0xff]
        %v445 = vld [vmem:[%s256 + $0xc8] sm:$0xff]
        %v446 = vld [vmem:[%s256 + $0xd0] sm:$0x3]
        %v447 = vld [vmem:[%s256 + $0xd8] sm:$0xff]
        %v448 = vld [vmem:[%s256 + $0xe0] sm:$0xff]
        %v449 = vld [vmem:[%s256 + $0xe8] sm:$0x3]
        %v450 = vld [vmem:[%s256 + $0xf0] sm:$0xff]
        %v451 = vld [vmem:[%s256 + $0xf8] sm:$0xff]
        %v452 = vld [vmem:[%s256 + $0x100] sm:$0x3]
        %v453 = vld [vmem:[%s256 + $0x108] sm:$0xff]
        %v454 = vld [vmem:[%s256 + $0x110] sm:$0xff]
        %v455 = vld [vmem:[%s256 + $0x118] sm:$0x3]
        %v456 = vld [vmem:[%s256 + $0x120] sm:$0xff]
        %v457 = vld [vmem:[%s256 + $0x128] sm:$0xff]
        %v458 = vld [vmem:[%s256 + $0x130] sm:$0x3]
        %v459 = vld [vmem:[%s256 + $0x138] sm:$0xff]
        %v460 = vld [vmem:[%s256 + $0x140] sm:$0xff]
        %v461 = vld [vmem:[%s256 + $0x148] sm:$0x3]
        %v462 = vld [vmem:[%s256 + $0x150] sm:$0xff]
        %v463 = vld [vmem:[%s256 + $0x158] sm:$0xff]
        %v464 = vld [vmem:[%s256 + $0x160] sm:$0x3]
        %v465 = vld [vmem:[%s256 + $0x168] sm:$0xff]
        %v466 = vld [vmem:[%s256 + $0x170] sm:$0xff]
        %v467 = vld [vmem:[%s256 + $0x178] sm:$0x3]
        %v468 = vld [vmem:[%s256 + $0x180] sm:$0xff]
        %v469 = vld [vmem:[%s256 + $0x188] sm:$0xff]
        %v470 = vld [vmem:[%s256 + $0x190] sm:$0x3]
        %v471 = vld [vmem:[%s256 + $0x198] sm:$0xff]
        %v472 = vld [vmem:[%s256 + $0x1a0] sm:$0xff]
        %v473 = vld [vmem:[%s256 + $0x1a8] sm:$0x3]
        %v474 = vpack.c.bf16 %v421, %v420
        %v475 = vpack.c.bf16 %v422, %v422
        %v476 = vpack.c.bf16 %v424, %v423
        %v477 = vpack.c.bf16 %v425, %v425
        %v478 = vpack.c.bf16 %v427, %v426
        %v479 = vpack.c.bf16 %v428, %v428
        %v480 = vpack.c.bf16 %v430, %v429
        %v481 = vpack.c.bf16 %v431, %v431
        %v482 = vpack.c.bf16 %v433, %v432
        %v483 = vpack.c.bf16 %v434, %v434
        %v484 = vpack.c.bf16 %v436, %v435
        %v485 = vpack.c.bf16 %v437, %v437
        %v486 = vpack.c.bf16 %v439, %v438
        %v487 = vpack.c.bf16 %v440, %v440
        %v488 = vpack.c.bf16 %v442, %v441
        %v489 = vpack.c.bf16 %v443, %v443
        %v490 = vpack.c.bf16 %v445, %v444
        %v491 = vpack.c.bf16 %v446, %v446
        %v492 = vpack.c.bf16 %v448, %v447
        %v493 = vpack.c.bf16 %v449, %v449
        %v494 = vpack.c.bf16 %v451, %v450
        %v495 = vpack.c.bf16 %v452, %v452
        %v496 = vpack.c.bf16 %v454, %v453
        %v497 = vpack.c.bf16 %v455, %v455
        %v498 = vpack.c.bf16 %v457, %v456
        %v499 = vpack.c.bf16 %v458, %v458
        %v500 = vpack.c.bf16 %v460, %v459
        %v501 = vpack.c.bf16 %v461, %v461
        %v502 = vpack.c.bf16 %v463, %v462
        %v503 = vpack.c.bf16 %v464, %v464
        %v504 = vpack.c.bf16 %v466, %v465
        %v505 = vpack.c.bf16 %v467, %v467
        %v506 = vpack.c.bf16 %v469, %v468
        %v507 = vpack.c.bf16 %v470, %v470
        %v508 = vpack.c.bf16 %v472, %v471
        %v509 = vpack.c.bf16 %v473, %v473
        %vm510 = vsmask.f32 7424
        %v512 = vshrl.u32 %v474, 16
        %v514 = vshll.u32 %v474, 16
        %v516 = vrot.slane %v514, 1
        %v517 = vor.u32 %v512, %v516
        %v519 = vshll.u32 %v475, 16
        %v521 = vrot.slane %v519, 1
        %v522 = vsel %vm510, %v517, %v521
        %v524 = vshrl.u32 %v476, 16
        %v526 = vshll.u32 %v476, 16
        %v528 = vrot.slane %v526, 1
        %v529 = vor.u32 %v524, %v528
        %v531 = vshll.u32 %v477, 16
        %v533 = vrot.slane %v531, 1
        %v534 = vsel %vm510, %v529, %v533
        %v536 = vshrl.u32 %v478, 16
        %v538 = vshll.u32 %v478, 16
        %v540 = vrot.slane %v538, 1
        %v541 = vor.u32 %v536, %v540
        %v543 = vshll.u32 %v479, 16
        %v545 = vrot.slane %v543, 1
        %v546 = vsel %vm510, %v541, %v545
        %v548 = vshrl.u32 %v480, 16
        %v550 = vshll.u32 %v480, 16
        %v552 = vrot.slane %v550, 1
        %v553 = vor.u32 %v548, %v552
        %v555 = vshll.u32 %v481, 16
        %v557 = vrot.slane %v555, 1
        %v558 = vsel %vm510, %v553, %v557
        %v560 = vshrl.u32 %v482, 16
        %v562 = vshll.u32 %v482, 16
        %v564 = vrot.slane %v562, 1
        %v565 = vor.u32 %v560, %v564
        %v567 = vshll.u32 %v483, 16
        %v569 = vrot.slane %v567, 1
        %v570 = vsel %vm510, %v565, %v569
        %v572 = vshrl.u32 %v484, 16
        %v574 = vshll.u32 %v484, 16
        %v576 = vrot.slane %v574, 1
        %v577 = vor.u32 %v572, %v576
        %v579 = vshll.u32 %v485, 16
        %v581 = vrot.slane %v579, 1
        %v582 = vsel %vm510, %v577, %v581
        %v584 = vshrl.u32 %v486, 16
        %v586 = vshll.u32 %v486, 16
        %v588 = vrot.slane %v586, 1
        %v589 = vor.u32 %v584, %v588
        %v591 = vshll.u32 %v487, 16
        %v593 = vrot.slane %v591, 1
        %v594 = vsel %vm510, %v589, %v593
        %v596 = vshrl.u32 %v488, 16
        %v598 = vshll.u32 %v488, 16
        %v600 = vrot.slane %v598, 1
        %v601 = vor.u32 %v596, %v600
        %v603 = vshll.u32 %v489, 16
        %v605 = vrot.slane %v603, 1
        %v606 = vsel %vm510, %v601, %v605
        %v608 = vshrl.u32 %v490, 16
        %v610 = vshll.u32 %v490, 16
        %v612 = vrot.slane %v610, 1
        %v613 = vor.u32 %v608, %v612
        %v615 = vshll.u32 %v491, 16
        %v617 = vrot.slane %v615, 1
        %v618 = vsel %vm510, %v613, %v617
        %v620 = vshrl.u32 %v492, 16
        %v622 = vshll.u32 %v492, 16
        %v624 = vrot.slane %v622, 1
        %v625 = vor.u32 %v620, %v624
        %v627 = vshll.u32 %v493, 16
        %v629 = vrot.slane %v627, 1
        %v630 = vsel %vm510, %v625, %v629
        %v632 = vshrl.u32 %v494, 16
        %v634 = vshll.u32 %v494, 16
        %v636 = vrot.slane %v634, 1
        %v637 = vor.u32 %v632, %v636
        %v639 = vshll.u32 %v495, 16
        %v641 = vrot.slane %v639, 1
        %v642 = vsel %vm510, %v637, %v641
        %v644 = vshrl.u32 %v496, 16
        %v646 = vshll.u32 %v496, 16
        %v648 = vrot.slane %v646, 1
        %v649 = vor.u32 %v644, %v648
        %v651 = vshll.u32 %v497, 16
        %v653 = vrot.slane %v651, 1
        %v654 = vsel %vm510, %v649, %v653
        %v656 = vshrl.u32 %v498, 16
        %v658 = vshll.u32 %v498, 16
        %v660 = vrot.slane %v658, 1
        %v661 = vor.u32 %v656, %v660
        %v663 = vshll.u32 %v499, 16
        %v665 = vrot.slane %v663, 1
        %v666 = vsel %vm510, %v661, %v665
        %v668 = vshrl.u32 %v500, 16
        %v670 = vshll.u32 %v500, 16
        %v672 = vrot.slane %v670, 1
        %v673 = vor.u32 %v668, %v672
        %v675 = vshll.u32 %v501, 16
        %v677 = vrot.slane %v675, 1
        %v678 = vsel %vm510, %v673, %v677
        %v680 = vshrl.u32 %v502, 16
        %v682 = vshll.u32 %v502, 16
        %v684 = vrot.slane %v682, 1
        %v685 = vor.u32 %v680, %v684
        %v687 = vshll.u32 %v503, 16
        %v689 = vrot.slane %v687, 1
        %v690 = vsel %vm510, %v685, %v689
        %v692 = vshrl.u32 %v504, 16
        %v694 = vshll.u32 %v504, 16
        %v696 = vrot.slane %v694, 1
        %v697 = vor.u32 %v692, %v696
        %v699 = vshll.u32 %v505, 16
        %v701 = vrot.slane %v699, 1
        %v702 = vsel %vm510, %v697, %v701
        %703 = vrot.lane.b32.xlu0 %v522, 4
        %v704 = vpop.permute.xlu0 %703
        %705 = vrot.lane.b32.xlu0 %v534, 4
        %v706 = vpop.permute.xlu0 %705
        %707 = vrot.lane.b32.xlu0 %v546, 4
        %v708 = vpop.permute.xlu0 %707
        %709 = vrot.lane.b32.xlu0 %v558, 4
        %v710 = vpop.permute.xlu0 %709
        %711 = vrot.lane.b32.xlu0 %v570, 4
        %v712 = vpop.permute.xlu0 %711
        %713 = vrot.lane.b32.xlu0 %v582, 4
        %v714 = vpop.permute.xlu0 %713
        %715 = vrot.lane.b32.xlu0 %v594, 4
        %v716 = vpop.permute.xlu0 %715
        %717 = vrot.lane.b32.xlu0 %v606, 4
        %v718 = vpop.permute.xlu0 %717
        %719 = vrot.lane.b32.xlu0 %v618, 4
        %v720 = vpop.permute.xlu0 %719
        %721 = vrot.lane.b32.xlu0 %v630, 4
        %v722 = vpop.permute.xlu0 %721
        %723 = vrot.lane.b32.xlu0 %v642, 4
        %v724 = vpop.permute.xlu0 %723
        %725 = vrot.lane.b32.xlu0 %v654, 4
        %v726 = vpop.permute.xlu0 %725
        %727 = vrot.lane.b32.xlu0 %v666, 4
        %v728 = vpop.permute.xlu0 %727
        %729 = vrot.lane.b32.xlu0 %v678, 4
        %v730 = vpop.permute.xlu0 %729
        %731 = vrot.lane.b32.xlu0 %v690, 4
        %v732 = vpop.permute.xlu0 %731
        %733 = vrot.lane.b32.xlu0 %v702, 4
        %v734 = vpop.permute.xlu0 %733
        %vm767 = vcmask 1046528
        %v768 = vrot.slane %v474, 1
        %v769 = vrot.slane %v475, 1
        %v770 = vsel %vm767, %v768, %v769
        %v771 = vrot.slane %v476, 1
        %v772 = vrot.slane %v477, 1
        %v773 = vsel %vm767, %v771, %v772
        %v774 = vrot.slane %v478, 1
        %v775 = vrot.slane %v479, 1
        %v776 = vsel %vm767, %v774, %v775
        %v777 = vrot.slane %v480, 1
        %v778 = vrot.slane %v481, 1
        %v779 = vsel %vm767, %v777, %v778
        %v780 = vrot.slane %v482, 1
        %v781 = vrot.slane %v483, 1
        %v782 = vsel %vm767, %v780, %v781
        %v783 = vrot.slane %v484, 1
        %v784 = vrot.slane %v485, 1
        %v785 = vsel %vm767, %v783, %v784
        %v786 = vrot.slane %v486, 1
        %v787 = vrot.slane %v487, 1
        %v788 = vsel %vm767, %v786, %v787
        %v789 = vrot.slane %v488, 1
        %v790 = vrot.slane %v489, 1
        %v791 = vsel %vm767, %v789, %v790
        %v792 = vrot.slane %v490, 1
        %v793 = vrot.slane %v491, 1
        %v794 = vsel %vm767, %v792, %v793
        %v795 = vrot.slane %v492, 1
        %v796 = vrot.slane %v493, 1
        %v797 = vsel %vm767, %v795, %v796
        %v798 = vrot.slane %v494, 1
        %v799 = vrot.slane %v495, 1
        %v800 = vsel %vm767, %v798, %v799
        %v801 = vrot.slane %v496, 1
        %v802 = vrot.slane %v497, 1
        %v803 = vsel %vm767, %v801, %v802
        %v804 = vrot.slane %v498, 1
        %v805 = vrot.slane %v499, 1
        %v806 = vsel %vm767, %v804, %v805
        %v807 = vrot.slane %v500, 1
        %v808 = vrot.slane %v501, 1
        %v809 = vsel %vm767, %v807, %v808
        %v810 = vrot.slane %v502, 1
        %v811 = vrot.slane %v503, 1
        %v812 = vsel %vm767, %v810, %v811
        %v813 = vrot.slane %v504, 1
        %v814 = vrot.slane %v505, 1
        %v815 = vsel %vm767, %v813, %v814
        %816 = vrot.lane.b32.xlu0 %v770, 8
        %v817 = vpop.permute.xlu0 %816
        %818 = vrot.lane.b32.xlu0 %v773, 8
        %v819 = vpop.permute.xlu0 %818
        %820 = vrot.lane.b32.xlu0 %v776, 8
        %v821 = vpop.permute.xlu0 %820
        %822 = vrot.lane.b32.xlu0 %v779, 8
        %v823 = vpop.permute.xlu0 %822
        %824 = vrot.lane.b32.xlu0 %v782, 8
        %v825 = vpop.permute.xlu0 %824
        %826 = vrot.lane.b32.xlu0 %v785, 8
        %v827 = vpop.permute.xlu0 %826
        %828 = vrot.lane.b32.xlu0 %v788, 8
        %v829 = vpop.permute.xlu0 %828
        %830 = vrot.lane.b32.xlu0 %v791, 8
        %v831 = vpop.permute.xlu0 %830
        %832 = vrot.lane.b32.xlu0 %v794, 8
        %v833 = vpop.permute.xlu0 %832
        %834 = vrot.lane.b32.xlu0 %v797, 8
        %v835 = vpop.permute.xlu0 %834
        %836 = vrot.lane.b32.xlu0 %v800, 8
        %v837 = vpop.permute.xlu0 %836
        %838 = vrot.lane.b32.xlu0 %v803, 8
        %v839 = vpop.permute.xlu0 %838
        %840 = vrot.lane.b32.xlu0 %v806, 8
        %v841 = vpop.permute.xlu0 %840
        %842 = vrot.lane.b32.xlu0 %v809, 8
        %v843 = vpop.permute.xlu0 %842
        %844 = vrot.lane.b32.xlu0 %v812, 8
        %v845 = vpop.permute.xlu0 %844
        %846 = vrot.lane.b32.xlu0 %v815, 8
        %v847 = vpop.permute.xlu0 %846
        %849 = vrot.lane.b32.xlu0 %v476, 12
        %v850 = vpop.permute.xlu0 %849
        %851 = vrot.lane.b32.xlu0 %v478, 12
        %v852 = vpop.permute.xlu0 %851
        %853 = vrot.lane.b32.xlu0 %v480, 12
        %v854 = vpop.permute.xlu0 %853
        %855 = vrot.lane.b32.xlu0 %v482, 12
        %v856 = vpop.permute.xlu0 %855
        %857 = vrot.lane.b32.xlu0 %v484, 12
        %v858 = vpop.permute.xlu0 %857
        %859 = vrot.lane.b32.xlu0 %v486, 12
        %v860 = vpop.permute.xlu0 %859
        %861 = vrot.lane.b32.xlu0 %v488, 12
        %v862 = vpop.permute.xlu0 %861
        %863 = vrot.lane.b32.xlu0 %v490, 12
        %v864 = vpop.permute.xlu0 %863
        %865 = vrot.lane.b32.xlu0 %v492, 12
        %v866 = vpop.permute.xlu0 %865
        %867 = vrot.lane.b32.xlu0 %v494, 12
        %v868 = vpop.permute.xlu0 %867
        %869 = vrot.lane.b32.xlu0 %v496, 12
        %v870 = vpop.permute.xlu0 %869
        %871 = vrot.lane.b32.xlu0 %v498, 12
        %v872 = vpop.permute.xlu0 %871
        %873 = vrot.lane.b32.xlu0 %v500, 12
        %v874 = vpop.permute.xlu0 %873
        %875 = vrot.lane.b32.xlu0 %v502, 12
        %v876 = vpop.permute.xlu0 %875
        %877 = vrot.lane.b32.xlu0 %v504, 12
        %v878 = vpop.permute.xlu0 %877
        %879 = vrot.lane.b32.xlu0 %v506, 12
        %v880 = vpop.permute.xlu0 %879
        %v882 = vshrl.u32 %v506, 16
        %v884 = vshll.u32 %v506, 16
        %v886 = vrot.slane %v884, 1
        %v887 = vor.u32 %v882, %v886
        %v889 = vshll.u32 %v507, 16
        %v891 = vrot.slane %v889, 1
        %v892 = vsel %vm510, %v887, %v891
        %893 = vrot.lane.b32.xlu0 %v534, 16
        %v894 = vpop.permute.xlu0 %893
        %895 = vrot.lane.b32.xlu0 %v546, 16
        %v896 = vpop.permute.xlu0 %895
        %897 = vrot.lane.b32.xlu0 %v558, 16
        %v898 = vpop.permute.xlu0 %897
        %899 = vrot.lane.b32.xlu0 %v570, 16
        %v900 = vpop.permute.xlu0 %899
        %901 = vrot.lane.b32.xlu0 %v582, 16
        %v902 = vpop.permute.xlu0 %901
        %903 = vrot.lane.b32.xlu0 %v594, 16
        %v904 = vpop.permute.xlu0 %903
        %905 = vrot.lane.b32.xlu0 %v606, 16
        %v906 = vpop.permute.xlu0 %905
        %907 = vrot.lane.b32.xlu0 %v618, 16
        %v908 = vpop.permute.xlu0 %907
        %909 = vrot.lane.b32.xlu0 %v630, 16
        %v910 = vpop.permute.xlu0 %909
        %911 = vrot.lane.b32.xlu0 %v642, 16
        %v912 = vpop.permute.xlu0 %911
        %913 = vrot.lane.b32.xlu0 %v654, 16
        %v914 = vpop.permute.xlu0 %913
        %915 = vrot.lane.b32.xlu0 %v666, 16
        %v916 = vpop.permute.xlu0 %915
        %917 = vrot.lane.b32.xlu0 %v678, 16
        %v918 = vpop.permute.xlu0 %917
        %919 = vrot.lane.b32.xlu0 %v690, 16
        %v920 = vpop.permute.xlu0 %919
        %921 = vrot.lane.b32.xlu0 %v702, 16
        %v922 = vpop.permute.xlu0 %921
        %923 = vrot.lane.b32.xlu0 %v892, 16
        %v924 = vpop.permute.xlu0 %923
        %v926 = vrot.slane %v506, 1
        %v927 = vrot.slane %v507, 1
        %v928 = vsel %vm767, %v926, %v927
        %929 = vrot.lane.b32.xlu0 %v773, 20
        %v930 = vpop.permute.xlu0 %929
        %931 = vrot.lane.b32.xlu0 %v776, 20
        %v932 = vpop.permute.xlu0 %931
        %933 = vrot.lane.b32.xlu0 %v779, 20
        %v934 = vpop.permute.xlu0 %933
        %935 = vrot.lane.b32.xlu0 %v782, 20
        %v936 = vpop.permute.xlu0 %935
        %937 = vrot.lane.b32.xlu0 %v785, 20
        %v938 = vpop.permute.xlu0 %937
        %939 = vrot.lane.b32.xlu0 %v788, 20
        %v940 = vpop.permute.xlu0 %939
        %941 = vrot.lane.b32.xlu0 %v791, 20
        %v942 = vpop.permute.xlu0 %941
        %943 = vrot.lane.b32.xlu0 %v794, 20
        %v944 = vpop.permute.xlu0 %943
        %945 = vrot.lane.b32.xlu0 %v797, 20
        %v946 = vpop.permute.xlu0 %945
        %947 = vrot.lane.b32.xlu0 %v800, 20
        %v948 = vpop.permute.xlu0 %947
        %949 = vrot.lane.b32.xlu0 %v803, 20
        %v950 = vpop.permute.xlu0 %949
        %951 = vrot.lane.b32.xlu0 %v806, 20
        %v952 = vpop.permute.xlu0 %951
        %953 = vrot.lane.b32.xlu0 %v809, 20
        %v954 = vpop.permute.xlu0 %953
        %955 = vrot.lane.b32.xlu0 %v812, 20
        %v956 = vpop.permute.xlu0 %955
        %957 = vrot.lane.b32.xlu0 %v815, 20
        %v958 = vpop.permute.xlu0 %957
        %959 = vrot.lane.b32.xlu0 %v928, 20
        %v960 = vpop.permute.xlu0 %959
        %962 = vrot.lane.b32.xlu0 %v478, 24
        %v963 = vpop.permute.xlu0 %962
        %964 = vrot.lane.b32.xlu0 %v480, 24
        %v965 = vpop.permute.xlu0 %964
        %966 = vrot.lane.b32.xlu0 %v482, 24
        %v967 = vpop.permute.xlu0 %966
        %968 = vrot.lane.b32.xlu0 %v484, 24
        %v969 = vpop.permute.xlu0 %968
        %970 = vrot.lane.b32.xlu0 %v486, 24
        %v971 = vpop.permute.xlu0 %970
        %972 = vrot.lane.b32.xlu0 %v488, 24
        %v973 = vpop.permute.xlu0 %972
        %974 = vrot.lane.b32.xlu0 %v490, 24
        %v975 = vpop.permute.xlu0 %974
        %976 = vrot.lane.b32.xlu0 %v492, 24
        %v977 = vpop.permute.xlu0 %976
        %978 = vrot.lane.b32.xlu0 %v494, 24
        %v979 = vpop.permute.xlu0 %978
        %980 = vrot.lane.b32.xlu0 %v496, 24
        %v981 = vpop.permute.xlu0 %980
        %982 = vrot.lane.b32.xlu0 %v498, 24
        %v983 = vpop.permute.xlu0 %982
        %984 = vrot.lane.b32.xlu0 %v500, 24
        %v985 = vpop.permute.xlu0 %984
        %986 = vrot.lane.b32.xlu0 %v502, 24
        %v987 = vpop.permute.xlu0 %986
        %988 = vrot.lane.b32.xlu0 %v504, 24
        %v989 = vpop.permute.xlu0 %988
        %990 = vrot.lane.b32.xlu0 %v506, 24
        %v991 = vpop.permute.xlu0 %990
        %992 = vrot.lane.b32.xlu0 %v508, 24
        %v993 = vpop.permute.xlu0 %992
        %v995 = vshrl.u32 %v508, 16
        %v997 = vshll.u32 %v508, 16
        %v999 = vrot.slane %v997, 1
        %v1000 = vor.u32 %v995, %v999
        %v1002 = vshll.u32 %v509, 16
        %v1004 = vrot.slane %v1002, 1
        %v1005 = vsel %vm510, %v1000, %v1004
        %1006 = vrot.lane.b32.xlu0 %v546, 28
        %v1007 = vpop.permute.xlu0 %1006
        %1008 = vrot.lane.b32.xlu0 %v558, 28
        %v1009 = vpop.permute.xlu0 %1008
        %1010 = vrot.lane.b32.xlu0 %v570, 28
        %v1011 = vpop.permute.xlu0 %1010
        %1012 = vrot.lane.b32.xlu0 %v582, 28
        %v1013 = vpop.permute.xlu0 %1012
        %1014 = vrot.lane.b32.xlu0 %v594, 28
        %v1015 = vpop.permute.xlu0 %1014
        %1016 = vrot.lane.b32.xlu0 %v606, 28
        %v1017 = vpop.permute.xlu0 %1016
        %1018 = vrot.lane.b32.xlu0 %v618, 28
        %v1019 = vpop.permute.xlu0 %1018
        %1020 = vrot.lane.b32.xlu0 %v630, 28
        %v1021 = vpop.permute.xlu0 %1020
        %1022 = vrot.lane.b32.xlu0 %v642, 28
        %v1023 = vpop.permute.xlu0 %1022
        %1024 = vrot.lane.b32.xlu0 %v654, 28
        %v1025 = vpop.permute.xlu0 %1024
        %1026 = vrot.lane.b32.xlu0 %v666, 28
        %v1027 = vpop.permute.xlu0 %1026
        %1028 = vrot.lane.b32.xlu0 %v678, 28
        %v1029 = vpop.permute.xlu0 %1028
        %1030 = vrot.lane.b32.xlu0 %v690, 28
        %v1031 = vpop.permute.xlu0 %1030
        %1032 = vrot.lane.b32.xlu0 %v702, 28
        %v1033 = vpop.permute.xlu0 %1032
        %1034 = vrot.lane.b32.xlu0 %v892, 28
        %v1035 = vpop.permute.xlu0 %1034
        %1036 = vrot.lane.b32.xlu0 %v1005, 28
        %v1037 = vpop.permute.xlu0 %1036
        %v1039 = vrot.slane %v508, 1
        %v1040 = vrot.slane %v509, 1
        %v1041 = vsel %vm767, %v1039, %v1040
        %1042 = vrot.lane.b32.xlu0 %v776, 32
        %v1043 = vpop.permute.xlu0 %1042
        %1044 = vrot.lane.b32.xlu0 %v779, 32
        %v1045 = vpop.permute.xlu0 %1044
        %1046 = vrot.lane.b32.xlu0 %v782, 32
        %v1047 = vpop.permute.xlu0 %1046
        %1048 = vrot.lane.b32.xlu0 %v785, 32
        %v1049 = vpop.permute.xlu0 %1048
        %1050 = vrot.lane.b32.xlu0 %v788, 32
        %v1051 = vpop.permute.xlu0 %1050
        %1052 = vrot.lane.b32.xlu0 %v791, 32
        %v1053 = vpop.permute.xlu0 %1052
        %1054 = vrot.lane.b32.xlu0 %v794, 32
        %v1055 = vpop.permute.xlu0 %1054
        %1056 = vrot.lane.b32.xlu0 %v797, 32
        %v1057 = vpop.permute.xlu0 %1056
        %1058 = vrot.lane.b32.xlu0 %v800, 32
        %v1059 = vpop.permute.xlu0 %1058
        %1060 = vrot.lane.b32.xlu0 %v803, 32
        %v1061 = vpop.permute.xlu0 %1060
        %1062 = vrot.lane.b32.xlu0 %v806, 32
        %v1063 = vpop.permute.xlu0 %1062
        %1064 = vrot.lane.b32.xlu0 %v809, 32
        %v1065 = vpop.permute.xlu0 %1064
        %1066 = vrot.lane.b32.xlu0 %v812, 32
        %v1067 = vpop.permute.xlu0 %1066
        %1068 = vrot.lane.b32.xlu0 %v815, 32
        %v1069 = vpop.permute.xlu0 %1068
        %1070 = vrot.lane.b32.xlu0 %v928, 32
        %v1071 = vpop.permute.xlu0 %1070
        %1072 = vrot.lane.b32.xlu0 %v1041, 32
        %v1073 = vpop.permute.xlu0 %1072
        %vm1074 = vcmask 31744
        %v1076 = vsel %vm1074, %v474, %v704
        %v1078 = vsel %vm1074, %v476, %v706
        %v1080 = vsel %vm1074, %v478, %v708
        %v1082 = vsel %vm1074, %v480, %v710
        %v1084 = vsel %vm1074, %v482, %v712
        %v1086 = vsel %vm1074, %v484, %v714
        %v1088 = vsel %vm1074, %v486, %v716
        %v1090 = vsel %vm1074, %v488, %v718
        %v1092 = vsel %vm1074, %v490, %v720
        %v1094 = vsel %vm1074, %v492, %v722
        %v1096 = vsel %vm1074, %v494, %v724
        %v1098 = vsel %vm1074, %v496, %v726
        %v1100 = vsel %vm1074, %v498, %v728
        %v1102 = vsel %vm1074, %v500, %v730
        %v1104 = vsel %vm1074, %v502, %v732
        %v1106 = vsel %vm1074, %v504, %v734
        %vm1107 = vcmask 64512
        %v1109 = vsel %vm1107, %v1076, %v817
        %v1111 = vsel %vm1107, %v1078, %v819
        %v1113 = vsel %vm1107, %v1080, %v821
        %v1115 = vsel %vm1107, %v1082, %v823
        %v1117 = vsel %vm1107, %v1084, %v825
        %v1119 = vsel %vm1107, %v1086, %v827
        %v1121 = vsel %vm1107, %v1088, %v829
        %v1123 = vsel %vm1107, %v1090, %v831
        %v1125 = vsel %vm1107, %v1092, %v833
        %v1127 = vsel %vm1107, %v1094, %v835
        %v1129 = vsel %vm1107, %v1096, %v837
        %v1131 = vsel %vm1107, %v1098, %v839
        %v1133 = vsel %vm1107, %v1100, %v841
        %v1135 = vsel %vm1107, %v1102, %v843
        %v1137 = vsel %vm1107, %v1104, %v845
        %v1139 = vsel %vm1107, %v1106, %v847
        %vm1140 = vcmask 97280
        %v1142 = vsel %vm1140, %v1109, %v850
        %v1144 = vsel %vm1140, %v1111, %v852
        %v1146 = vsel %vm1140, %v1113, %v854
        %v1148 = vsel %vm1140, %v1115, %v856
        %v1150 = vsel %vm1140, %v1117, %v858
        %v1152 = vsel %vm1140, %v1119, %v860
        %v1154 = vsel %vm1140, %v1121, %v862
        %v1156 = vsel %vm1140, %v1123, %v864
        %v1158 = vsel %vm1140, %v1125, %v866
        %v1160 = vsel %vm1140, %v1127, %v868
        %v1162 = vsel %vm1140, %v1129, %v870
        %v1164 = vsel %vm1140, %v1131, %v872
        %v1166 = vsel %vm1140, %v1133, %v874
        %v1168 = vsel %vm1140, %v1135, %v876
        %v1170 = vsel %vm1140, %v1137, %v878
        %v1172 = vsel %vm1140, %v1139, %v880
        %vm1173 = vcmask 130048
        %v1175 = vsel %vm1173, %v1142, %v894
        %v1177 = vsel %vm1173, %v1144, %v896
        %v1179 = vsel %vm1173, %v1146, %v898
        %v1181 = vsel %vm1173, %v1148, %v900
        %v1183 = vsel %vm1173, %v1150, %v902
        %v1185 = vsel %vm1173, %v1152, %v904
        %v1187 = vsel %vm1173, %v1154, %v906
        %v1189 = vsel %vm1173, %v1156, %v908
        %v1191 = vsel %vm1173, %v1158, %v910
        %v1193 = vsel %vm1173, %v1160, %v912
        %v1195 = vsel %vm1173, %v1162, %v914
        %v1197 = vsel %vm1173, %v1164, %v916
        %v1199 = vsel %vm1173, %v1166, %v918
        %v1201 = vsel %vm1173, %v1168, %v920
        %v1203 = vsel %vm1173, %v1170, %v922
        %v1205 = vsel %vm1173, %v1172, %v924
        %vm1206 = vcmask 162816
        %v1208 = vsel %vm1206, %v1175, %v930
        %v1210 = vsel %vm1206, %v1177, %v932
        %v1212 = vsel %vm1206, %v1179, %v934
        %v1214 = vsel %vm1206, %v1181, %v936
        %v1216 = vsel %vm1206, %v1183, %v938
        %v1218 = vsel %vm1206, %v1185, %v940
        %v1220 = vsel %vm1206, %v1187, %v942
        %v1222 = vsel %vm1206, %v1189, %v944
        %v1224 = vsel %vm1206, %v1191, %v946
        %v1226 = vsel %vm1206, %v1193, %v948
        %v1228 = vsel %vm1206, %v1195, %v950
        %v1230 = vsel %vm1206, %v1197, %v952
        %v1232 = vsel %vm1206, %v1199, %v954
        %v1234 = vsel %vm1206, %v1201, %v956
        %v1236 = vsel %vm1206, %v1203, %v958
        %v1238 = vsel %vm1206, %v1205, %v960
        %vm1239 = vcmask 195584
        %v1241 = vsel %vm1239, %v1208, %v963
        %v1243 = vsel %vm1239, %v1210, %v965
        %v1245 = vsel %vm1239, %v1212, %v967
        %v1247 = vsel %vm1239, %v1214, %v969
        %v1249 = vsel %vm1239, %v1216, %v971
        %v1251 = vsel %vm1239, %v1218, %v973
        %v1253 = vsel %vm1239, %v1220, %v975
        %v1255 = vsel %vm1239, %v1222, %v977
        %v1257 = vsel %vm1239, %v1224, %v979
        %v1259 = vsel %vm1239, %v1226, %v981
        %v1261 = vsel %vm1239, %v1228, %v983
        %v1263 = vsel %vm1239, %v1230, %v985
        %v1265 = vsel %vm1239, %v1232, %v987
        %v1267 = vsel %vm1239, %v1234, %v989
        %v1269 = vsel %vm1239, %v1236, %v991
        %v1271 = vsel %vm1239, %v1238, %v993
        %vm1272 = vcmask 228352
        %v1274 = vsel %vm1272, %v1241, %v1007
        %v1276 = vsel %vm1272, %v1243, %v1009
        %v1278 = vsel %vm1272, %v1245, %v1011
        %v1280 = vsel %vm1272, %v1247, %v1013
        %v1282 = vsel %vm1272, %v1249, %v1015
        %v1284 = vsel %vm1272, %v1251, %v1017
        %v1286 = vsel %vm1272, %v1253, %v1019
        %v1288 = vsel %vm1272, %v1255, %v1021
        %v1290 = vsel %vm1272, %v1257, %v1023
        %v1292 = vsel %vm1272, %v1259, %v1025
        %v1294 = vsel %vm1272, %v1261, %v1027
        %v1296 = vsel %vm1272, %v1263, %v1029
        %v1298 = vsel %vm1272, %v1265, %v1031
        %v1300 = vsel %vm1272, %v1267, %v1033
        %v1302 = vsel %vm1272, %v1269, %v1035
        %v1304 = vsel %vm1272, %v1271, %v1037
        %vm1305 = vcmask 261120
        %v1307 = vsel %vm1305, %v1274, %v1043
        %v1309 = vsel %vm1305, %v1276, %v1045
        %v1311 = vsel %vm1305, %v1278, %v1047
        %v1313 = vsel %vm1305, %v1280, %v1049
        %v1315 = vsel %vm1305, %v1282, %v1051
        %v1317 = vsel %vm1305, %v1284, %v1053
        %v1319 = vsel %vm1305, %v1286, %v1055
        %v1321 = vsel %vm1305, %v1288, %v1057
        %v1323 = vsel %vm1305, %v1290, %v1059
        %v1325 = vsel %vm1305, %v1292, %v1061
        %v1327 = vsel %vm1305, %v1294, %v1063
        %v1329 = vsel %vm1305, %v1296, %v1065
        %v1331 = vsel %vm1305, %v1298, %v1067
        %v1333 = vsel %vm1305, %v1300, %v1069
        %v1335 = vsel %vm1305, %v1302, %v1071
        %v1337 = vsel %vm1305, %v1304, %v1073
        %v1338 = vld [vmem:[#allocation9] sm:$0x1]
        %v1340 = vlaneseq
        %v1341 = vshrl.u32 %v1340, 7
        %v1342 = vsub.s32 0, %v1341
        %v1343 = vrot.slane %v1338, %v1342
        %v1345 = vld [vmem:[#allocation7] sm:$0xf]
        %v1346 = vld [vmem:[#allocation7 + $0x4] sm:$0xf]
        %v1347 = vld [vmem:[#allocation7 + $0x8] sm:$0xf]
        %v1348 = vld [vmem:[#allocation7 + $0xc] sm:$0xf]
        %v1349 = vld [vmem:[#allocation7 + $0x10] sm:$0x3]
        %v1355 = vunpack.c.l.b16 %v1345
        %v1356 = vunpack.c.l.b16 %v1346
        %v1357 = vunpack.c.l.b16 %v1347
        %v1358 = vunpack.c.l.b16 %v1348
        %v1359 = vunpack.c.l.b16 %v1349
        %v1360 = vpack.c.b16 %v1356, %v1355
        %v1361 = vpack.c.b16 %v1358, %v1357
        %v1362 = vpack.c.b16 %v1359, %v1359
        %vm1365 = vcmask 293888
        %v1366 = vsel %vm1365, %v1307, 0
        %v1368 = vsel %vm1365, %v1309, 0
        %v1370 = vsel %vm1365, %v1311, 0
        %v1372 = vsel %vm1365, %v1313, 0
        %v1374 = vsel %vm1365, %v1315, 0
        %v1376 = vsel %vm1365, %v1317, 0
        %v1378 = vsel %vm1365, %v1319, 0
        %v1380 = vsel %vm1365, %v1321, 0
        %v1382 = vsel %vm1365, %v1323, 0
        %v1384 = vsel %vm1365, %v1325, 0
        %v1386 = vsel %vm1365, %v1327, 0
        %v1388 = vsel %vm1365, %v1329, 0
        %v1390 = vsel %vm1365, %v1331, 0
        %v1392 = vsel %vm1365, %v1333, 0
        %v1394 = vsel %vm1365, %v1335, 0
        %v1396 = vsel %vm1365, %v1337, 0
        %vm1398 = vcmask 1041408
        %v1400 = vsel %vm1398, %v1362, 0
        %1402 = vmatprep.subr.bf16.mxu0 0
        %1403 = vmatpush1.bf16.msra.mxu0 %v1360
        %1404 = vmatprep.subr.bf16.mxu0 0
        %1405 = vmatpush1.bf16.msra.mxu0 %v1361
        %1406 = vmatprep.subr.bf16.mxu0 0
        %1407 = vmatpush1.bf16.msra.mxu0 %v1400
        %1408 = vmatprep.subr.bf16.mxu0 0
        %1409 = vmatpush1.bf16.msra.mxu0 0
        %1410 = vmatprep.subr.bf16.mxu0 0
        %1411 = vmatpush1.bf16.msra.mxu0 0
        %1412 = vmatprep.subr.bf16.mxu0 0
        %1413 = vmatpush1.bf16.msra.mxu0 0
        %1414 = vmatprep.subr.bf16.mxu0 0
        %1415 = vmatpush1.bf16.msra.mxu0 0
        %1416 = vmatprep.subr.bf16.mxu0 0
        %1417 = vmatpush1.bf16.msra.mxu0 0
        %1418 = vmatprep.subr.bf16.mxu0 0
        %1419 = vmatpush1.bf16.msra.mxu0 0
        %1420 = vmatprep.subr.bf16.mxu0 0
        %1421 = vmatpush1.bf16.msra.mxu0 0
        %1422 = vmatprep.subr.bf16.mxu0 0
        %1423 = vmatpush1.bf16.msra.mxu0 0
        %1424 = vmatprep.subr.bf16.mxu0 0
        %1425 = vmatpush1.bf16.msra.mxu0 0
        %1426 = vmatprep.subr.bf16.mxu0 0
        %1427 = vmatpush1.bf16.msra.mxu0 0
        %1428 = vmatprep.subr.bf16.mxu0 0
        %1429 = vmatpush1.bf16.msra.mxu0 0
        %1430 = vmatprep.subr.bf16.mxu0 0
        %1431 = vmatpush1.bf16.msra.mxu0 0
        %1432 = vmatprep.subr.bf16.mxu0 0
        %1433 = vmatpush1.bf16.msra.mxu0 0
        %1434 = vmatprep.mubr.bf16.mxu0 0
        %1435 = vmatmul.mubr.bf16.gmra.mrb[0].mxu0 %v1366
        %v1436 = vpop.f32.mrb[0].mxu0
        %v1437 = vadd.f32 0.0, %v1436
        %v1438 = vpop.f32.mrb[0].mxu0
        %v1439 = vpop.f32.mrb[0].mxu0
        %v1440 = vadd.f32 0.0, %v1439
        %v1441 = vpop.f32.mrb[0].mxu0
        %1442 = vmatprep.mubr.bf16.mxu0 0
        %1443 = vmatmul.mubr.bf16.gmra.mrb[0].mxu0 %v1368
        %v1444 = vpop.f32.mrb[0].mxu0
        %v1445 = vadd.f32 0.0, %v1444
        %v1446 = vpop.f32.mrb[0].mxu0
        %v1447 = vpop.f32.mrb[0].mxu0
        %v1448 = vadd.f32 0.0, %v1447
        %v1449 = vpop.f32.mrb[0].mxu0
        %1450 = vmatprep.mubr.bf16.mxu0 0
        %1451 = vmatmul.mubr.bf16.gmra.mrb[0].mxu0 %v1370
        %v1452 = vpop.f32.mrb[0].mxu0
        %v1453 = vadd.f32 0.0, %v1452
        %v1454 = vpop.f32.mrb[0].mxu0
        %v1455 = vpop.f32.mrb[0].mxu0
        %v1456 = vadd.f32 0.0, %v1455
        %v1457 = vpop.f32.mrb[0].mxu0
        %1458 = vmatprep.mubr.bf16.mxu0 0
        %1459 = vmatmul.mubr.bf16.gmra.mrb[0].mxu0 %v1372
        %v1460 = vpop.f32.mrb[0].mxu0
        %v1461 = vadd.f32 0.0, %v1460
        %v1462 = vpop.f32.mrb[0].mxu0
        %v1463 = vpop.f32.mrb[0].mxu0
        %v1464 = vadd.f32 0.0, %v1463
        %v1465 = vpop.f32.mrb[0].mxu0
        %1466 = vmatprep.mubr.bf16.mxu0 0
        %1467 = vmatmul.mubr.bf16.gmra.mrb[0].mxu0 %v1374
        %v1468 = vpop.f32.mrb[0].mxu0
        %v1469 = vadd.f32 0.0, %v1468
        %v1470 = vpop.f32.mrb[0].mxu0
        %v1471 = vpop.f32.mrb[0].mxu0
        %v1472 = vadd.f32 0.0, %v1471
        %v1473 = vpop.f32.mrb[0].mxu0
        %1474 = vmatprep.mubr.bf16.mxu0 0
        %1475 = vmatmul.mubr.bf16.gmra.mrb[0].mxu0 %v1376
        %v1476 = vpop.f32.mrb[0].mxu0
        %v1477 = vadd.f32 0.0, %v1476
        %v1478 = vpop.f32.mrb[0].mxu0
        %v1479 = vpop.f32.mrb[0].mxu0
        %v1480 = vadd.f32 0.0, %v1479
        %v1481 = vpop.f32.mrb[0].mxu0
        %1482 = vmatprep.mubr.bf16.mxu0 0
        %1483 = vmatmul.mubr.bf16.gmra.mrb[0].mxu0 %v1378
        %v1484 = vpop.f32.mrb[0].mxu0
        %v1485 = vadd.f32 0.0, %v1484
        %v1486 = vpop.f32.mrb[0].mxu0
        %v1487 = vpop.f32.mrb[0].mxu0
        %v1488 = vadd.f32 0.0, %v1487
        %v1489 = vpop.f32.mrb[0].mxu0
        %1490 = vmatprep.mubr.bf16.mxu0 0
        %1491 = vmatmul.mubr.bf16.gmra.mrb[0].mxu0 %v1380
        %v1492 = vpop.f32.mrb[0].mxu0
        %v1493 = vadd.f32 0.0, %v1492
        %v1494 = vpop.f32.mrb[0].mxu0
        %v1495 = vpop.f32.mrb[0].mxu0
        %v1496 = vadd.f32 0.0, %v1495
        %v1497 = vpop.f32.mrb[0].mxu0
        %1498 = vmatprep.mubr.bf16.mxu0 0
        %1499 = vmatmul.mubr.bf16.gmra.mrb[0].mxu0 %v1382
        %v1500 = vpop.f32.mrb[0].mxu0
        %v1501 = vadd.f32 0.0, %v1500
        %v1502 = vpop.f32.mrb[0].mxu0
        %v1503 = vpop.f32.mrb[0].mxu0
        %v1504 = vadd.f32 0.0, %v1503
        %v1505 = vpop.f32.mrb[0].mxu0
        %1506 = vmatprep.mubr.bf16.mxu0 0
        %1507 = vmatmul.mubr.bf16.gmra.mrb[0].mxu0 %v1384
        %v1508 = vpop.f32.mrb[0].mxu0
        %v1509 = vadd.f32 0.0, %v1508
        %v1510 = vpop.f32.mrb[0].mxu0
        %v1511 = vpop.f32.mrb[0].mxu0
        %v1512 = vadd.f32 0.0, %v1511
        %v1513 = vpop.f32.mrb[0].mxu0
        %1514 = vmatprep.mubr.bf16.mxu0 0
        %1515 = vmatmul.mubr.bf16.gmra.mrb[0].mxu0 %v1386
        %v1516 = vpop.f32.mrb[0].mxu0
        %v1517 = vadd.f32 0.0, %v1516
        %v1518 = vpop.f32.mrb[0].mxu0
        %v1519 = vpop.f32.mrb[0].mxu0
        %v1520 = vadd.f32 0.0, %v1519
        %v1521 = vpop.f32.mrb[0].mxu0
        %1522 = vmatprep.mubr.bf16.mxu0 0
        %1523 = vmatmul.mubr.bf16.gmra.mrb[0].mxu0 %v1388
        %v1524 = vpop.f32.mrb[0].mxu0
        %v1525 = vadd.f32 0.0, %v1524
        %v1526 = vpop.f32.mrb[0].mxu0
        %v1527 = vpop.f32.mrb[0].mxu0
        %v1528 = vadd.f32 0.0, %v1527
        %v1529 = vpop.f32.mrb[0].mxu0
        %1530 = vmatprep.mubr.bf16.mxu0 0
        %1531 = vmatmul.mubr.bf16.gmra.mrb[0].mxu0 %v1390
        %v1532 = vpop.f32.mrb[0].mxu0
        %v1533 = vadd.f32 0.0, %v1532
        %v1534 = vpop.f32.mrb[0].mxu0
        %v1535 = vpop.f32.mrb[0].mxu0
        %v1536 = vadd.f32 0.0, %v1535
        %v1537 = vpop.f32.mrb[0].mxu0
        %1538 = vmatprep.mubr.bf16.mxu0 0
        %1539 = vmatmul.mubr.bf16.gmra.mrb[0].mxu0 %v1392
        %v1540 = vpop.f32.mrb[0].mxu0
        %v1541 = vadd.f32 0.0, %v1540
        %v1542 = vpop.f32.mrb[0].mxu0
        %v1543 = vpop.f32.mrb[0].mxu0
        %v1544 = vadd.f32 0.0, %v1543
        %v1545 = vpop.f32.mrb[0].mxu0
        %1546 = vmatprep.mubr.bf16.mxu0 0
        %1547 = vmatmul.mubr.bf16.gmra.mrb[0].mxu0 %v1394
        %v1548 = vpop.f32.mrb[0].mxu0
        %v1549 = vadd.f32 0.0, %v1548
        %v1550 = vpop.f32.mrb[0].mxu0
        %v1551 = vpop.f32.mrb[0].mxu0
        %v1552 = vadd.f32 0.0, %v1551
        %v1553 = vpop.f32.mrb[0].mxu0
        %1554 = vmatprep.mubr.bf16.mxu0 0
        %1555 = vmatmul.mubr.bf16.gmra.mrb[0].mxu0 %v1396
        %v1556 = vpop.f32.mrb[0].mxu0
        %v1557 = vadd.f32 0.0, %v1556
        %v1558 = vpop.f32.mrb[0].mxu0
        %v1559 = vpop.f32.mrb[0].mxu0
        %v1560 = vadd.f32 0.0, %v1559
        %v1561 = vpop.f32.mrb[0].mxu0
        %1562 = vdwg.mxu0
        %v1563 = vadd.f32 %v1343, %v1437
        %v1564 = vadd.f32 %v1343, %v1440
        %v1565 = vadd.f32 %v1343, %v1445
        %v1566 = vadd.f32 %v1343, %v1448
        %v1567 = vadd.f32 %v1343, %v1453
        %v1568 = vadd.f32 %v1343, %v1456
        %v1569 = vadd.f32 %v1343, %v1461
        %v1570 = vadd.f32 %v1343, %v1464
        %v1571 = vadd.f32 %v1343, %v1469
        %v1572 = vadd.f32 %v1343, %v1472
        %v1573 = vadd.f32 %v1343, %v1477
        %v1574 = vadd.f32 %v1343, %v1480
        %v1575 = vadd.f32 %v1343, %v1485
        %v1576 = vadd.f32 %v1343, %v1488
        %v1577 = vadd.f32 %v1343, %v1493
        %v1578 = vadd.f32 %v1343, %v1496
        %v1579 = vadd.f32 %v1343, %v1501
        %v1580 = vadd.f32 %v1343, %v1504
        %v1581 = vadd.f32 %v1343, %v1509
        %v1582 = vadd.f32 %v1343, %v1512
        %v1583 = vadd.f32 %v1343, %v1517
        %v1584 = vadd.f32 %v1343, %v1520
        %v1585 = vadd.f32 %v1343, %v1525
        %v1586 = vadd.f32 %v1343, %v1528
        %v1587 = vadd.f32 %v1343, %v1533
        %v1588 = vadd.f32 %v1343, %v1536
        %v1589 = vadd.f32 %v1343, %v1541
        %v1590 = vadd.f32 %v1343, %v1544
        %v1591 = vadd.f32 %v1343, %v1549
        %v1592 = vadd.f32 %v1343, %v1552
        %v1593 = vadd.f32 %v1343, %v1557
        %v1594 = vadd.f32 %v1343, %v1560
        %vm1595 = vcmp.ge.f32.partialorder %v1563, 0.0
        %vm1596 = vcmp.ge.f32.partialorder %v1564, 0.0
        %vm1597 = vcmp.ge.f32.partialorder %v1565, 0.0
        %vm1598 = vcmp.ge.f32.partialorder %v1566, 0.0
        %vm1599 = vcmp.ge.f32.partialorder %v1567, 0.0
        %vm1600 = vcmp.ge.f32.partialorder %v1568, 0.0
        %vm1601 = vcmp.ge.f32.partialorder %v1569, 0.0
        %vm1602 = vcmp.ge.f32.partialorder %v1570, 0.0
        %vm1603 = vcmp.ge.f32.partialorder %v1571, 0.0
        %vm1604 = vcmp.ge.f32.partialorder %v1572, 0.0
        %vm1605 = vcmp.ge.f32.partialorder %v1573, 0.0
        %vm1606 = vcmp.ge.f32.partialorder %v1574, 0.0
        %vm1607 = vcmp.ge.f32.partialorder %v1575, 0.0
        %vm1608 = vcmp.ge.f32.partialorder %v1576, 0.0
        %vm1609 = vcmp.ge.f32.partialorder %v1577, 0.0
        %vm1610 = vcmp.ge.f32.partialorder %v1578, 0.0
        %vm1611 = vcmp.ge.f32.partialorder %v1579, 0.0
        %vm1612 = vcmp.ge.f32.partialorder %v1580, 0.0
        %vm1613 = vcmp.ge.f32.partialorder %v1581, 0.0
        %vm1614 = vcmp.ge.f32.partialorder %v1582, 0.0
        %vm1615 = vcmp.ge.f32.partialorder %v1583, 0.0
        %vm1616 = vcmp.ge.f32.partialorder %v1584, 0.0
        %vm1617 = vcmp.ge.f32.partialorder %v1585, 0.0
        %vm1618 = vcmp.ge.f32.partialorder %v1586, 0.0
        %vm1619 = vcmp.ge.f32.partialorder %v1587, 0.0
        %vm1620 = vcmp.ge.f32.partialorder %v1588, 0.0
        %vm1621 = vcmp.ge.f32.partialorder %v1589, 0.0
        %vm1622 = vcmp.ge.f32.partialorder %v1590, 0.0
        %vm1623 = vcmp.ge.f32.partialorder %v1591, 0.0
        %vm1624 = vcmp.ge.f32.partialorder %v1592, 0.0
        %vm1625 = vcmp.ge.f32.partialorder %v1593, 0.0
        %vm1626 = vcmp.ge.f32.partialorder %v1594, 0.0
        %v1627 = vmul.f32 %v1563, 0.1
        %v1628 = vmul.f32 %v1564, 0.1
        %v1629 = vmul.f32 %v1565, 0.1
        %v1630 = vmul.f32 %v1566, 0.1
        %v1631 = vmul.f32 %v1567, 0.1
        %v1632 = vmul.f32 %v1568, 0.1
        %v1633 = vmul.f32 %v1569, 0.1
        %v1634 = vmul.f32 %v1570, 0.1
        %v1635 = vmul.f32 %v1571, 0.1
        %v1636 = vmul.f32 %v1572, 0.1
        %v1637 = vmul.f32 %v1573, 0.1
        %v1638 = vmul.f32 %v1574, 0.1
        %v1639 = vmul.f32 %v1575, 0.1
        %v1640 = vmul.f32 %v1576, 0.1
        %v1641 = vmul.f32 %v1577, 0.1
        %v1642 = vmul.f32 %v1578, 0.1
        %v1643 = vmul.f32 %v1579, 0.1
        %v1644 = vmul.f32 %v1580, 0.1
        %v1645 = vmul.f32 %v1581, 0.1
        %v1646 = vmul.f32 %v1582, 0.1
        %v1647 = vmul.f32 %v1583, 0.1
        %v1648 = vmul.f32 %v1584, 0.1
        %v1649 = vmul.f32 %v1585, 0.1
        %v1650 = vmul.f32 %v1586, 0.1
        %v1651 = vmul.f32 %v1587, 0.1
        %v1652 = vmul.f32 %v1588, 0.1
        %v1653 = vmul.f32 %v1589, 0.1
        %v1654 = vmul.f32 %v1590, 0.1
        %v1655 = vmul.f32 %v1591, 0.1
        %v1656 = vmul.f32 %v1592, 0.1
        %v1657 = vmul.f32 %v1593, 0.1
        %v1658 = vmul.f32 %v1594, 0.1
        %v1659 = vsel %vm1595, %v1563, %v1627
        %v1660 = vsel %vm1596, %v1564, %v1628
        %v1661 = vsel %vm1597, %v1565, %v1629
        %v1662 = vsel %vm1598, %v1566, %v1630
        %v1663 = vsel %vm1599, %v1567, %v1631
        %v1664 = vsel %vm1600, %v1568, %v1632
        %v1665 = vsel %vm1601, %v1569, %v1633
        %v1666 = vsel %vm1602, %v1570, %v1634
        %v1667 = vsel %vm1603, %v1571, %v1635
        %v1668 = vsel %vm1604, %v1572, %v1636
        %v1669 = vsel %vm1605, %v1573, %v1637
        %v1670 = vsel %vm1606, %v1574, %v1638
        %v1671 = vsel %vm1607, %v1575, %v1639
        %v1672 = vsel %vm1608, %v1576, %v1640
        %v1673 = vsel %vm1609, %v1577, %v1641
        %v1674 = vsel %vm1610, %v1578, %v1642
        %v1675 = vsel %vm1611, %v1579, %v1643
        %v1676 = vsel %vm1612, %v1580, %v1644
        %v1677 = vsel %vm1613, %v1581, %v1645
        %v1678 = vsel %vm1614, %v1582, %v1646
        %v1679 = vsel %vm1615, %v1583, %v1647
        %v1680 = vsel %vm1616, %v1584, %v1648
        %v1681 = vsel %vm1617, %v1585, %v1649
        %v1682 = vsel %vm1618, %v1586, %v1650
        %v1683 = vsel %vm1619, %v1587, %v1651
        %v1684 = vsel %vm1620, %v1588, %v1652
        %v1685 = vsel %vm1621, %v1589, %v1653
        %v1686 = vsel %vm1622, %v1590, %v1654
        %v1687 = vsel %vm1623, %v1591, %v1655
        %v1688 = vsel %vm1624, %v1592, %v1656
        %v1689 = vsel %vm1625, %v1593, %v1657
        %v1690 = vsel %vm1626, %v1594, %v1658
        %1691 = vst.msk [vmem:[#allocation2] sm:$0xff] %vm1305, %v1659
        %1692 = vst.msk [vmem:[#allocation2 + $0x8] sm:$0xff] %vm1305, %v1660
        %1693 = vst.msk [vmem:[#allocation2 + $0x10] sm:$0xff] %vm1305, %v1661
        %1694 = vst.msk [vmem:[#allocation2 + $0x18] sm:$0xff] %vm1305, %v1662
        %1695 = vst.msk [vmem:[#allocation2 + $0x20] sm:$0xff] %vm1305, %v1663
        %1696 = vst.msk [vmem:[#allocation2 + $0x28] sm:$0xff] %vm1305, %v1664
        %1697 = vst.msk [vmem:[#allocation2 + $0x30] sm:$0xff] %vm1305, %v1665
        %1698 = vst.msk [vmem:[#allocation2 + $0x38] sm:$0xff] %vm1305, %v1666
        %1699 = vst.msk [vmem:[#allocation2 + $0x40] sm:$0xff] %vm1305, %v1667
        %1700 = vst.msk [vmem:[#allocation2 + $0x48] sm:$0xff] %vm1305, %v1668
        %1701 = vst.msk [vmem:[#allocation2 + $0x50] sm:$0xff] %vm1305, %v1669
        %1702 = vst.msk [vmem:[#allocation2 + $0x58] sm:$0xff] %vm1305, %v1670
        %1703 = vst.msk [vmem:[#allocation2 + $0x60] sm:$0xff] %vm1305, %v1671
        %1704 = vst.msk [vmem:[#allocation2 + $0x68] sm:$0xff] %vm1305, %v1672
        %1705 = vst.msk [vmem:[#allocation2 + $0x70] sm:$0xff] %vm1305, %v1673
        %1706 = vst.msk [vmem:[#allocation2 + $0x78] sm:$0xff] %vm1305, %v1674
        %1707 = vst.msk [vmem:[#allocation2 + $0x80] sm:$0xff] %vm1305, %v1675
        %1708 = vst.msk [vmem:[#allocation2 + $0x88] sm:$0xff] %vm1305, %v1676
        %1709 = vst.msk [vmem:[#allocation2 + $0x90] sm:$0xff] %vm1305, %v1677
        %1710 = vst.msk [vmem:[#allocation2 + $0x98] sm:$0xff] %vm1305, %v1678
        %1711 = vst.msk [vmem:[#allocation2 + $0xa0] sm:$0xff] %vm1305, %v1679
        %1712 = vst.msk [vmem:[#allocation2 + $0xa8] sm:$0xff] %vm1305, %v1680
        %1713 = vst.msk [vmem:[#allocation2 + $0xb0] sm:$0xff] %vm1305, %v1681
        %1714 = vst.msk [vmem:[#allocation2 + $0xb8] sm:$0xff] %vm1305, %v1682
        %1715 = vst.msk [vmem:[#allocation2 + $0xc0] sm:$0xff] %vm1305, %v1683
        %1716 = vst.msk [vmem:[#allocation2 + $0xc8] sm:$0xff] %vm1305, %v1684
        %1717 = vst.msk [vmem:[#allocation2 + $0xd0] sm:$0xff] %vm1305, %v1685
        %1718 = vst.msk [vmem:[#allocation2 + $0xd8] sm:$0xff] %vm1305, %v1686
        %1719 = vst.msk [vmem:[#allocation2 + $0xe0] sm:$0xff] %vm1305, %v1687
        %1720 = vst.msk [vmem:[#allocation2 + $0xe8] sm:$0xff] %vm1305, %v1688
        %1721 = vst.msk [vmem:[#allocation2 + $0xf0] sm:$0xff] %vm1305, %v1689
        %1722 = vst.msk [vmem:[#allocation2 + $0xf8] sm:$0xff] %vm1305, %v1690
        loop: start=0, step=1, limit=2
        $region61: #{conv_residual_blocks.1} parent=39 // loop_pre_header
          _
        $region62: #{conv_residual_blocks.1} parent=39 // loop_header
          %s1724 = sphi 0, %s1728
          %p1725 = scmp.ge.s32.totalorder %s1724, 2
        $region63: #{conv_residual_blocks.1} parent=39 // loop_header_branch
          %1727 = sbr.rel (%p1725) target = $region67
        $region64: #{conv_residual_blocks.1} parent=39 // loop_body
          %v1729 = vld [vmem:[#allocation2] sm:$0xff]
          %v1730 = vld [vmem:[#allocation2 + $0x8] sm:$0xff]
          %v1731 = vld [vmem:[#allocation2 + $0x10] sm:$0xff]
          %v1732 = vld [vmem:[#allocation2 + $0x18] sm:$0xff]
          %v1733 = vld [vmem:[#allocation2 + $0x20] sm:$0xff]
          %v1734 = vld [vmem:[#allocation2 + $0x28] sm:$0xff]
          %v1735 = vld [vmem:[#allocation2 + $0x30] sm:$0xff]
          %v1736 = vld [vmem:[#allocation2 + $0x38] sm:$0xff]
          %v1737 = vld [vmem:[#allocation2 + $0x40] sm:$0xff]
          %v1738 = vld [vmem:[#allocation2 + $0x48] sm:$0xff]
          %v1739 = vld [vmem:[#allocation2 + $0x50] sm:$0xff]
          %v1740 = vld [vmem:[#allocation2 + $0x58] sm:$0xff]
          %v1741 = vld [vmem:[#allocation2 + $0x60] sm:$0xff]
          %v1742 = vld [vmem:[#allocation2 + $0x68] sm:$0xff]
          %v1743 = vld [vmem:[#allocation2 + $0x70] sm:$0xff]
          %v1744 = vld [vmem:[#allocation2 + $0x78] sm:$0xff]
          %v1745 = vld [vmem:[#allocation2 + $0x80] sm:$0xff]
          %v1746 = vld [vmem:[#allocation2 + $0x88] sm:$0xff]
          %v1747 = vld [vmem:[#allocation2 + $0x90] sm:$0xff]
          %v1748 = vld [vmem:[#allocation2 + $0x98] sm:$0xff]
          %v1749 = vld [vmem:[#allocation2 + $0xa0] sm:$0xff]
          %v1750 = vld [vmem:[#allocation2 + $0xa8] sm:$0xff]
          %v1751 = vld [vmem:[#allocation2 + $0xb0] sm:$0xff]
          %v1752 = vld [vmem:[#allocation2 + $0xb8] sm:$0xff]
          %v1753 = vld [vmem:[#allocation2 + $0xc0] sm:$0xff]
          %v1754 = vld [vmem:[#allocation2 + $0xc8] sm:$0xff]
          %v1755 = vld [vmem:[#allocation2 + $0xd0] sm:$0xff]
          %v1756 = vld [vmem:[#allocation2 + $0xd8] sm:$0xff]
          %v1757 = vld [vmem:[#allocation2 + $0xe0] sm:$0xff]
          %v1758 = vld [vmem:[#allocation2 + $0xe8] sm:$0xff]
          %v1759 = vld [vmem:[#allocation2 + $0xf0] sm:$0xff]
          %v1760 = vld [vmem:[#allocation2 + $0xf8] sm:$0xff]
          %v1761 = vpack.c.bf16 %v1730, %v1729
          %v1762 = vpack.c.bf16 %v1732, %v1731
          %v1763 = vpack.c.bf16 %v1734, %v1733
          %v1764 = vpack.c.bf16 %v1736, %v1735
          %v1765 = vpack.c.bf16 %v1738, %v1737
          %v1766 = vpack.c.bf16 %v1740, %v1739
          %v1767 = vpack.c.bf16 %v1742, %v1741
          %v1768 = vpack.c.bf16 %v1744, %v1743
          %v1769 = vpack.c.bf16 %v1746, %v1745
          %v1770 = vpack.c.bf16 %v1748, %v1747
          %v1771 = vpack.c.bf16 %v1750, %v1749
          %v1772 = vpack.c.bf16 %v1752, %v1751
          %v1773 = vpack.c.bf16 %v1754, %v1753
          %v1774 = vpack.c.bf16 %v1756, %v1755
          %v1775 = vpack.c.bf16 %v1758, %v1757
          %v1776 = vpack.c.bf16 %v1760, %v1759
          %v1778 = vshrl.u32 %v1761, 16
          %v1780 = vrot.slane %v1778, 3
          %v1781 = vshll.u32 %v1761, 16
          %v1783 = vrot.slane %v1781, 4
          %v1784 = vor.u32 %v1780, %v1783
          %v1786 = vshrl.u32 %v1762, 16
          %v1788 = vrot.slane %v1786, 3
          %v1789 = vshll.u32 %v1762, 16
          %v1791 = vrot.slane %v1789, 4
          %v1792 = vor.u32 %v1788, %v1791
          %v1794 = vshrl.u32 %v1763, 16
          %v1796 = vrot.slane %v1794, 3
          %v1797 = vshll.u32 %v1763, 16
          %v1799 = vrot.slane %v1797, 4
          %v1800 = vor.u32 %v1796, %v1799
          %v1802 = vshrl.u32 %v1764, 16
          %v1804 = vrot.slane %v1802, 3
          %v1805 = vshll.u32 %v1764, 16
          %v1807 = vrot.slane %v1805, 4
          %v1808 = vor.u32 %v1804, %v1807
          %v1810 = vshrl.u32 %v1765, 16
          %v1812 = vrot.slane %v1810, 3
          %v1813 = vshll.u32 %v1765, 16
          %v1815 = vrot.slane %v1813, 4
          %v1816 = vor.u32 %v1812, %v1815
          %v1818 = vshrl.u32 %v1766, 16
          %v1820 = vrot.slane %v1818, 3
          %v1821 = vshll.u32 %v1766, 16
          %v1823 = vrot.slane %v1821, 4
          %v1824 = vor.u32 %v1820, %v1823
          %v1826 = vshrl.u32 %v1767, 16
          %v1828 = vrot.slane %v1826, 3
          %v1829 = vshll.u32 %v1767, 16
          %v1831 = vrot.slane %v1829, 4
          %v1832 = vor.u32 %v1828, %v1831
          %v1834 = vshrl.u32 %v1768, 16
          %v1836 = vrot.slane %v1834, 3
          %v1837 = vshll.u32 %v1768, 16
          %v1839 = vrot.slane %v1837, 4
          %v1840 = vor.u32 %v1836, %v1839
          %v1842 = vshrl.u32 %v1769, 16
          %v1844 = vrot.slane %v1842, 3
          %v1845 = vshll.u32 %v1769, 16
          %v1847 = vrot.slane %v1845, 4
          %v1848 = vor.u32 %v1844, %v1847
          %v1850 = vshrl.u32 %v1770, 16
          %v1852 = vrot.slane %v1850, 3
          %v1853 = vshll.u32 %v1770, 16
          %v1855 = vrot.slane %v1853, 4
          %v1856 = vor.u32 %v1852, %v1855
          %v1858 = vshrl.u32 %v1771, 16
          %v1860 = vrot.slane %v1858, 3
          %v1861 = vshll.u32 %v1771, 16
          %v1863 = vrot.slane %v1861, 4
          %v1864 = vor.u32 %v1860, %v1863
          %v1866 = vshrl.u32 %v1772, 16
          %v1868 = vrot.slane %v1866, 3
          %v1869 = vshll.u32 %v1772, 16
          %v1871 = vrot.slane %v1869, 4
          %v1872 = vor.u32 %v1868, %v1871
          %v1874 = vshrl.u32 %v1773, 16
          %v1876 = vrot.slane %v1874, 3
          %v1877 = vshll.u32 %v1773, 16
          %v1879 = vrot.slane %v1877, 4
          %v1880 = vor.u32 %v1876, %v1879
          %v1882 = vshrl.u32 %v1774, 16
          %v1884 = vrot.slane %v1882, 3
          %v1885 = vshll.u32 %v1774, 16
          %v1887 = vrot.slane %v1885, 4
          %v1888 = vor.u32 %v1884, %v1887
          %v1890 = vshrl.u32 %v1775, 16
          %v1892 = vrot.slane %v1890, 3
          %v1893 = vshll.u32 %v1775, 16
          %v1895 = vrot.slane %v1893, 4
          %v1896 = vor.u32 %v1892, %v1895
          %v1898 = vshrl.u32 %v1776, 16
          %v1900 = vrot.slane %v1898, 3
          %v1901 = vshll.u32 %v1776, 16
          %v1903 = vrot.slane %v1901, 4
          %v1904 = vor.u32 %v1900, %v1903
          %s1921 = scalar_lea.vmem [#allocation3], 16
          %vm1922 = vcmask 261124
          %vm1923 = vsmask.f32 7954
          %vm1924 = vmand %vm1922, %vm1923
          %v1925 = vld [vmem:[%s1921] sm:$0xf0]
          %v1926 = vsel %vm1924, %v1784, %v1925
          %1927 = vst [vmem:[%s1921] sm:$0xf0] %v1926
          %vm1928 = vcmask 258048
          %vm1929 = vmand %vm1928, %vm307
          %v1930 = vld [vmem:[%s1921 + $0x8] sm:$0x1f]
          %v1931 = vsel %vm1929, %v1784, %v1930
          %1932 = vst [vmem:[%s1921 + $0x8] sm:$0x1f] %v1931
          %v1933 = vld [vmem:[%s1921 + $0x10] sm:$0xf0]
          %v1934 = vsel %vm1924, %v1792, %v1933
          %1935 = vst [vmem:[%s1921 + $0x10] sm:$0xf0] %v1934
          %v1936 = vld [vmem:[%s1921 + $0x18] sm:$0x1f]
          %v1937 = vsel %vm1929, %v1792, %v1936
          %1938 = vst [vmem:[%s1921 + $0x18] sm:$0x1f] %v1937
          %v1939 = vld [vmem:[%s1921 + $0x20] sm:$0xf0]
          %v1940 = vsel %vm1924, %v1800, %v1939
          %1941 = vst [vmem:[%s1921 + $0x20] sm:$0xf0] %v1940
          %v1942 = vld [vmem:[%s1921 + $0x28] sm:$0x1f]
          %v1943 = vsel %vm1929, %v1800, %v1942
          %1944 = vst [vmem:[%s1921 + $0x28] sm:$0x1f] %v1943
          %v1945 = vld [vmem:[%s1921 + $0x30] sm:$0xf0]
          %v1946 = vsel %vm1924, %v1808, %v1945
          %1947 = vst [vmem:[%s1921 + $0x30] sm:$0xf0] %v1946
          %v1948 = vld [vmem:[%s1921 + $0x38] sm:$0x1f]
          %v1949 = vsel %vm1929, %v1808, %v1948
          %1950 = vst [vmem:[%s1921 + $0x38] sm:$0x1f] %v1949
          %v1951 = vld [vmem:[%s1921 + $0x40] sm:$0xf0]
          %v1952 = vsel %vm1924, %v1816, %v1951
          %1953 = vst [vmem:[%s1921 + $0x40] sm:$0xf0] %v1952
          %v1954 = vld [vmem:[%s1921 + $0x48] sm:$0x1f]
          %v1955 = vsel %vm1929, %v1816, %v1954
          %1956 = vst [vmem:[%s1921 + $0x48] sm:$0x1f] %v1955
          %v1957 = vld [vmem:[%s1921 + $0x50] sm:$0xf0]
          %v1958 = vsel %vm1924, %v1824, %v1957
          %1959 = vst [vmem:[%s1921 + $0x50] sm:$0xf0] %v1958
          %v1960 = vld [vmem:[%s1921 + $0x58] sm:$0x1f]
          %v1961 = vsel %vm1929, %v1824, %v1960
          %1962 = vst [vmem:[%s1921 + $0x58] sm:$0x1f] %v1961
          %v1963 = vld [vmem:[%s1921 + $0x60] sm:$0xf0]
          %v1964 = vsel %vm1924, %v1832, %v1963
          %1965 = vst [vmem:[%s1921 + $0x60] sm:$0xf0] %v1964
          %v1966 = vld [vmem:[%s1921 + $0x68] sm:$0x1f]
          %v1967 = vsel %vm1929, %v1832, %v1966
          %1968 = vst [vmem:[%s1921 + $0x68] sm:$0x1f] %v1967
          %v1969 = vld [vmem:[%s1921 + $0x70] sm:$0xf0]
          %v1970 = vsel %vm1924, %v1840, %v1969
          %1971 = vst [vmem:[%s1921 + $0x70] sm:$0xf0] %v1970
          %v1972 = vld [vmem:[%s1921 + $0x78] sm:$0x1f]
          %v1973 = vsel %vm1929, %v1840, %v1972
          %1974 = vst [vmem:[%s1921 + $0x78] sm:$0x1f] %v1973
          %v1975 = vld [vmem:[%s1921 + $0x80] sm:$0xf0]
          %v1976 = vsel %vm1924, %v1848, %v1975
          %1977 = vst [vmem:[%s1921 + $0x80] sm:$0xf0] %v1976
          %v1978 = vld [vmem:[%s1921 + $0x88] sm:$0x1f]
          %v1979 = vsel %vm1929, %v1848, %v1978
          %1980 = vst [vmem:[%s1921 + $0x88] sm:$0x1f] %v1979
          %v1981 = vld [vmem:[%s1921 + $0x90] sm:$0xf0]
          %v1982 = vsel %vm1924, %v1856, %v1981
          %1983 = vst [vmem:[%s1921 + $0x90] sm:$0xf0] %v1982
          %v1984 = vld [vmem:[%s1921 + $0x98] sm:$0x1f]
          %v1985 = vsel %vm1929, %v1856, %v1984
          %1986 = vst [vmem:[%s1921 + $0x98] sm:$0x1f] %v1985
          %v1987 = vld [vmem:[%s1921 + $0xa0] sm:$0xf0]
          %v1988 = vsel %vm1924, %v1864, %v1987
          %1989 = vst [vmem:[%s1921 + $0xa0] sm:$0xf0] %v1988
          %v1990 = vld [vmem:[%s1921 + $0xa8] sm:$0x1f]
          %v1991 = vsel %vm1929, %v1864, %v1990
          %1992 = vst [vmem:[%s1921 + $0xa8] sm:$0x1f] %v1991
          %v1993 = vld [vmem:[%s1921 + $0xb0] sm:$0xf0]
          %v1994 = vsel %vm1924, %v1872, %v1993
          %1995 = vst [vmem:[%s1921 + $0xb0] sm:$0xf0] %v1994
          %v1996 = vld [vmem:[%s1921 + $0xb8] sm:$0x1f]
          %v1997 = vsel %vm1929, %v1872, %v1996
          %1998 = vst [vmem:[%s1921 + $0xb8] sm:$0x1f] %v1997
          %v1999 = vld [vmem:[%s1921 + $0xc0] sm:$0xf0]
          %v2000 = vsel %vm1924, %v1880, %v1999
          %2001 = vst [vmem:[%s1921 + $0xc0] sm:$0xf0] %v2000
          %v2002 = vld [vmem:[%s1921 + $0xc8] sm:$0x1f]
          %v2003 = vsel %vm1929, %v1880, %v2002
          %2004 = vst [vmem:[%s1921 + $0xc8] sm:$0x1f] %v2003
          %v2005 = vld [vmem:[%s1921 + $0xd0] sm:$0xf0]
          %v2006 = vsel %vm1924, %v1888, %v2005
          %2007 = vst [vmem:[%s1921 + $0xd0] sm:$0xf0] %v2006
          %v2008 = vld [vmem:[%s1921 + $0xd8] sm:$0x1f]
          %v2009 = vsel %vm1929, %v1888, %v2008
          %2010 = vst [vmem:[%s1921 + $0xd8] sm:$0x1f] %v2009
          %v2011 = vld [vmem:[%s1921 + $0xe0] sm:$0xf0]
          %v2012 = vsel %vm1924, %v1896, %v2011
          %2013 = vst [vmem:[%s1921 + $0xe0] sm:$0xf0] %v2012
          %v2014 = vld [vmem:[%s1921 + $0xe8] sm:$0x1f]
          %v2015 = vsel %vm1929, %v1896, %v2014
          %2016 = vst [vmem:[%s1921 + $0xe8] sm:$0x1f] %v2015
          %v2017 = vld [vmem:[%s1921 + $0xf0] sm:$0xf0]
          %v2018 = vsel %vm1924, %v1904, %v2017
          %2019 = vst [vmem:[%s1921 + $0xf0] sm:$0xf0] %v2018
          %v2020 = vld [vmem:[%s1921 + $0xf8] sm:$0x1f]
          %v2021 = vsel %vm1929, %v1904, %v2020
          %2022 = vst [vmem:[%s1921 + $0xf8] sm:$0x1f] %v2021
          %v2039 = vrot.slane %v1761, 4
          %v2040 = vrot.slane %v1762, 4
          %v2041 = vrot.slane %v1763, 4
          %v2042 = vrot.slane %v1764, 4
          %v2043 = vrot.slane %v1765, 4
          %v2044 = vrot.slane %v1766, 4
          %v2045 = vrot.slane %v1767, 4
          %v2046 = vrot.slane %v1768, 4
          %v2047 = vrot.slane %v1769, 4
          %v2048 = vrot.slane %v1770, 4
          %v2049 = vrot.slane %v1771, 4
          %v2050 = vrot.slane %v1772, 4
          %v2051 = vrot.slane %v1773, 4
          %v2052 = vrot.slane %v1774, 4
          %v2053 = vrot.slane %v1775, 4
          %v2054 = vrot.slane %v1776, 4
          %2055 = vrot.lane.b32.xlu0 %v2039, 32
          %v2056 = vpop.permute.xlu0 %2055
          %2057 = vrot.lane.b32.xlu0 %v2040, 32
          %v2058 = vpop.permute.xlu0 %2057
          %2059 = vrot.lane.b32.xlu0 %v2041, 32
          %v2060 = vpop.permute.xlu0 %2059
          %2061 = vrot.lane.b32.xlu0 %v2042, 32
          %v2062 = vpop.permute.xlu0 %2061
          %2063 = vrot.lane.b32.xlu0 %v2043, 32
          %v2064 = vpop.permute.xlu0 %2063
          %2065 = vrot.lane.b32.xlu0 %v2044, 32
          %v2066 = vpop.permute.xlu0 %2065
          %2067 = vrot.lane.b32.xlu0 %v2045, 32
          %v2068 = vpop.permute.xlu0 %2067
          %2069 = vrot.lane.b32.xlu0 %v2046, 32
          %v2070 = vpop.permute.xlu0 %2069
          %2071 = vrot.lane.b32.xlu0 %v2047, 32
          %v2072 = vpop.permute.xlu0 %2071
          %2073 = vrot.lane.b32.xlu0 %v2048, 32
          %v2074 = vpop.permute.xlu0 %2073
          %2075 = vrot.lane.b32.xlu0 %v2049, 32
          %v2076 = vpop.permute.xlu0 %2075
          %2077 = vrot.lane.b32.xlu0 %v2050, 32
          %v2078 = vpop.permute.xlu0 %2077
          %2079 = vrot.lane.b32.xlu0 %v2051, 32
          %v2080 = vpop.permute.xlu0 %2079
          %2081 = vrot.lane.b32.xlu0 %v2052, 32
          %v2082 = vpop.permute.xlu0 %2081
          %2083 = vrot.lane.b32.xlu0 %v2053, 32
          %v2084 = vpop.permute.xlu0 %2083
          %2085 = vrot.lane.b32.xlu0 %v2054, 32
          %v2086 = vpop.permute.xlu0 %2085
          %vm2103 = vcmask 523524
          %2104 = vst.msk [vmem:[%s1921] sm:$0xf0] %vm2103, %v2056
          %vm2105 = vcmask 519424
          %2106 = vst.msk [vmem:[%s1921 + $0x8] sm:$0xf] %vm2105, %v2056
          %2107 = vst.msk [vmem:[%s1921 + $0x10] sm:$0xf0] %vm2103, %v2058
          %2108 = vst.msk [vmem:[%s1921 + $0x18] sm:$0xf] %vm2105, %v2058
          %2109 = vst.msk [vmem:[%s1921 + $0x20] sm:$0xf0] %vm2103, %v2060
          %2110 = vst.msk [vmem:[%s1921 + $0x28] sm:$0xf] %vm2105, %v2060
          %2111 = vst.msk [vmem:[%s1921 + $0x30] sm:$0xf0] %vm2103, %v2062
          %2112 = vst.msk [vmem:[%s1921 + $0x38] sm:$0xf] %vm2105, %v2062
          %2113 = vst.msk [vmem:[%s1921 + $0x40] sm:$0xf0] %vm2103, %v2064
          %2114 = vst.msk [vmem:[%s1921 + $0x48] sm:$0xf] %vm2105, %v2064
          %2115 = vst.msk [vmem:[%s1921 + $0x50] sm:$0xf0] %vm2103, %v2066
          %2116 = vst.msk [vmem:[%s1921 + $0x58] sm:$0xf] %vm2105, %v2066
          %2117 = vst.msk [vmem:[%s1921 + $0x60] sm:$0xf0] %vm2103, %v2068
          %2118 = vst.msk [vmem:[%s1921 + $0x68] sm:$0xf] %vm2105, %v2068
          %2119 = vst.msk [vmem:[%s1921 + $0x70] sm:$0xf0] %vm2103, %v2070
          %2120 = vst.msk [vmem:[%s1921 + $0x78] sm:$0xf] %vm2105, %v2070
          %2121 = vst.msk [vmem:[%s1921 + $0x80] sm:$0xf0] %vm2103, %v2072
          %2122 = vst.msk [vmem:[%s1921 + $0x88] sm:$0xf] %vm2105, %v2072
          %2123 = vst.msk [vmem:[%s1921 + $0x90] sm:$0xf0] %vm2103, %v2074
          %2124 = vst.msk [vmem:[%s1921 + $0x98] sm:$0xf] %vm2105, %v2074
          %2125 = vst.msk [vmem:[%s1921 + $0xa0] sm:$0xf0] %vm2103, %v2076
          %2126 = vst.msk [vmem:[%s1921 + $0xa8] sm:$0xf] %vm2105, %v2076
          %2127 = vst.msk [vmem:[%s1921 + $0xb0] sm:$0xf0] %vm2103, %v2078
          %2128 = vst.msk [vmem:[%s1921 + $0xb8] sm:$0xf] %vm2105, %v2078
          %2129 = vst.msk [vmem:[%s1921 + $0xc0] sm:$0xf0] %vm2103, %v2080
          %2130 = vst.msk [vmem:[%s1921 + $0xc8] sm:$0xf] %vm2105, %v2080
          %2131 = vst.msk [vmem:[%s1921 + $0xd0] sm:$0xf0] %vm2103, %v2082
          %2132 = vst.msk [vmem:[%s1921 + $0xd8] sm:$0xf] %vm2105, %v2082
          %2133 = vst.msk [vmem:[%s1921 + $0xe0] sm:$0xf0] %vm2103, %v2084
          %2134 = vst.msk [vmem:[%s1921 + $0xe8] sm:$0xf] %vm2105, %v2084
          %2135 = vst.msk [vmem:[%s1921 + $0xf0] sm:$0xf0] %vm2103, %v2086
          %2136 = vst.msk [vmem:[%s1921 + $0xf8] sm:$0xf] %vm2105, %v2086
          %v2137 = vrot.slane %v1778, 4
          %v2138 = vrot.slane %v1781, 5
          %v2139 = vor.u32 %v2137, %v2138
          %v2140 = vrot.slane %v1786, 4
          %v2141 = vrot.slane %v1789, 5
          %v2142 = vor.u32 %v2140, %v2141
          %v2143 = vrot.slane %v1794, 4
          %v2144 = vrot.slane %v1797, 5
          %v2145 = vor.u32 %v2143, %v2144
          %v2146 = vrot.slane %v1802, 4
          %v2147 = vrot.slane %v1805, 5
          %v2148 = vor.u32 %v2146, %v2147
          %v2149 = vrot.slane %v1810, 4
          %v2150 = vrot.slane %v1813, 5
          %v2151 = vor.u32 %v2149, %v2150
          %v2152 = vrot.slane %v1818, 4
          %v2153 = vrot.slane %v1821, 5
          %v2154 = vor.u32 %v2152, %v2153
          %v2155 = vrot.slane %v1826, 4
          %v2156 = vrot.slane %v1829, 5
          %v2157 = vor.u32 %v2155, %v2156
          %v2158 = vrot.slane %v1834, 4
          %v2159 = vrot.slane %v1837, 5
          %v2160 = vor.u32 %v2158, %v2159
          %v2161 = vrot.slane %v1842, 4
          %v2162 = vrot.slane %v1845, 5
          %v2163 = vor.u32 %v2161, %v2162
          %v2164 = vrot.slane %v1850, 4
          %v2165 = vrot.slane %v1853, 5
          %v2166 = vor.u32 %v2164, %v2165
          %v2167 = vrot.slane %v1858, 4
          %v2168 = vrot.slane %v1861, 5
          %v2169 = vor.u32 %v2167, %v2168
          %v2170 = vrot.slane %v1866, 4
          %v2171 = vrot.slane %v1869, 5
          %v2172 = vor.u32 %v2170, %v2171
          %v2173 = vrot.slane %v1874, 4
          %v2174 = vrot.slane %v1877, 5
          %v2175 = vor.u32 %v2173, %v2174
          %v2176 = vrot.slane %v1882, 4
          %v2177 = vrot.slane %v1885, 5
          %v2178 = vor.u32 %v2176, %v2177
          %v2179 = vrot.slane %v1890, 4
          %v2180 = vrot.slane %v1893, 5
          %v2181 = vor.u32 %v2179, %v2180
          %v2182 = vrot.slane %v1898, 4
          %v2183 = vrot.slane %v1901, 5
          %v2184 = vor.u32 %v2182, %v2183
          %2185 = vrot.lane.b32.xlu0 %v2139, 64
          %v2186 = vpop.permute.xlu0 %2185
          %2187 = vrot.lane.b32.xlu0 %v2142, 64
          %v2188 = vpop.permute.xlu0 %2187
          %2189 = vrot.lane.b32.xlu0 %v2145, 64
          %v2190 = vpop.permute.xlu0 %2189
          %2191 = vrot.lane.b32.xlu0 %v2148, 64
          %v2192 = vpop.permute.xlu0 %2191
          %2193 = vrot.lane.b32.xlu0 %v2151, 64
          %v2194 = vpop.permute.xlu0 %2193
          %2195 = vrot.lane.b32.xlu0 %v2154, 64
          %v2196 = vpop.permute.xlu0 %2195
          %2197 = vrot.lane.b32.xlu0 %v2157, 64
          %v2198 = vpop.permute.xlu0 %2197
          %2199 = vrot.lane.b32.xlu0 %v2160, 64
          %v2200 = vpop.permute.xlu0 %2199
          %2201 = vrot.lane.b32.xlu0 %v2163, 64
          %v2202 = vpop.permute.xlu0 %2201
          %2203 = vrot.lane.b32.xlu0 %v2166, 64
          %v2204 = vpop.permute.xlu0 %2203
          %2205 = vrot.lane.b32.xlu0 %v2169, 64
          %v2206 = vpop.permute.xlu0 %2205
          %2207 = vrot.lane.b32.xlu0 %v2172, 64
          %v2208 = vpop.permute.xlu0 %2207
          %2209 = vrot.lane.b32.xlu0 %v2175, 64
          %v2210 = vpop.permute.xlu0 %2209
          %2211 = vrot.lane.b32.xlu0 %v2178, 64
          %v2212 = vpop.permute.xlu0 %2211
          %2213 = vrot.lane.b32.xlu0 %v2181, 64
          %v2214 = vpop.permute.xlu0 %2213
          %2215 = vrot.lane.b32.xlu0 %v2184, 64
          %v2216 = vpop.permute.xlu0 %2215
          %vm2233 = vcmask 785923
          %vm2234 = vmand %vm2233, %vm364
          %v2235 = vld [vmem:[%s1921] sm:$0xf8]
          %v2236 = vsel %vm2234, %v2186, %v2235
          %2237 = vst [vmem:[%s1921] sm:$0xf8] %v2236
          %vm2238 = vcmask 781824
          %vm2239 = vsmask.f32 3328
          %vm2240 = vmand %vm2238, %vm2239
          %v2241 = vld [vmem:[%s1921 + $0x8] sm:$0xf]
          %v2242 = vsel %vm2240, %v2186, %v2241
          %2243 = vst [vmem:[%s1921 + $0x8] sm:$0xf] %v2242
          %v2244 = vld [vmem:[%s1921 + $0x10] sm:$0xf8]
          %v2245 = vsel %vm2234, %v2188, %v2244
          %2246 = vst [vmem:[%s1921 + $0x10] sm:$0xf8] %v2245
          %v2247 = vld [vmem:[%s1921 + $0x18] sm:$0xf]
          %v2248 = vsel %vm2240, %v2188, %v2247
          %2249 = vst [vmem:[%s1921 + $0x18] sm:$0xf] %v2248
          %v2250 = vld [vmem:[%s1921 + $0x20] sm:$0xf8]
          %v2251 = vsel %vm2234, %v2190, %v2250
          %2252 = vst [vmem:[%s1921 + $0x20] sm:$0xf8] %v2251
          %v2253 = vld [vmem:[%s1921 + $0x28] sm:$0xf]
          %v2254 = vsel %vm2240, %v2190, %v2253
          %2255 = vst [vmem:[%s1921 + $0x28] sm:$0xf] %v2254
          %v2256 = vld [vmem:[%s1921 + $0x30] sm:$0xf8]
          %v2257 = vsel %vm2234, %v2192, %v2256
          %2258 = vst [vmem:[%s1921 + $0x30] sm:$0xf8] %v2257
          %v2259 = vld [vmem:[%s1921 + $0x38] sm:$0xf]
          %v2260 = vsel %vm2240, %v2192, %v2259
          %2261 = vst [vmem:[%s1921 + $0x38] sm:$0xf] %v2260
          %v2262 = vld [vmem:[%s1921 + $0x40] sm:$0xf8]
          %v2263 = vsel %vm2234, %v2194, %v2262
          %2264 = vst [vmem:[%s1921 + $0x40] sm:$0xf8] %v2263
          %v2265 = vld [vmem:[%s1921 + $0x48] sm:$0xf]
          %v2266 = vsel %vm2240, %v2194, %v2265
          %2267 = vst [vmem:[%s1921 + $0x48] sm:$0xf] %v2266
          %v2268 = vld [vmem:[%s1921 + $0x50] sm:$0xf8]
          %v2269 = vsel %vm2234, %v2196, %v2268
          %2270 = vst [vmem:[%s1921 + $0x50] sm:$0xf8] %v2269
          %v2271 = vld [vmem:[%s1921 + $0x58] sm:$0xf]
          %v2272 = vsel %vm2240, %v2196, %v2271
          %2273 = vst [vmem:[%s1921 + $0x58] sm:$0xf] %v2272
          %v2274 = vld [vmem:[%s1921 + $0x60] sm:$0xf8]
          %v2275 = vsel %vm2234, %v2198, %v2274
          %2276 = vst [vmem:[%s1921 + $0x60] sm:$0xf8] %v2275
          %v2277 = vld [vmem:[%s1921 + $0x68] sm:$0xf]
          %v2278 = vsel %vm2240, %v2198, %v2277
          %2279 = vst [vmem:[%s1921 + $0x68] sm:$0xf] %v2278
          %v2280 = vld [vmem:[%s1921 + $0x70] sm:$0xf8]
          %v2281 = vsel %vm2234, %v2200, %v2280
          %2282 = vst [vmem:[%s1921 + $0x70] sm:$0xf8] %v2281
          %v2283 = vld [vmem:[%s1921 + $0x78] sm:$0xf]
          %v2284 = vsel %vm2240, %v2200, %v2283
          %2285 = vst [vmem:[%s1921 + $0x78] sm:$0xf] %v2284
          %v2286 = vld [vmem:[%s1921 + $0x80] sm:$0xf8]
          %v2287 = vsel %vm2234, %v2202, %v2286
          %2288 = vst [vmem:[%s1921 + $0x80] sm:$0xf8] %v2287
          %v2289 = vld [vmem:[%s1921 + $0x88] sm:$0xf]
          %v2290 = vsel %vm2240, %v2202, %v2289
          %2291 = vst [vmem:[%s1921 + $0x88] sm:$0xf] %v2290
          %v2292 = vld [vmem:[%s1921 + $0x90] sm:$0xf8]
          %v2293 = vsel %vm2234, %v2204, %v2292
          %2294 = vst [vmem:[%s1921 + $0x90] sm:$0xf8] %v2293
          %v2295 = vld [vmem:[%s1921 + $0x98] sm:$0xf]
          %v2296 = vsel %vm2240, %v2204, %v2295
          %2297 = vst [vmem:[%s1921 + $0x98] sm:$0xf] %v2296
          %v2298 = vld [vmem:[%s1921 + $0xa0] sm:$0xf8]
          %v2299 = vsel %vm2234, %v2206, %v2298
          %2300 = vst [vmem:[%s1921 + $0xa0] sm:$0xf8] %v2299
          %v2301 = vld [vmem:[%s1921 + $0xa8] sm:$0xf]
          %v2302 = vsel %vm2240, %v2206, %v2301
          %2303 = vst [vmem:[%s1921 + $0xa8] sm:$0xf] %v2302
          %v2304 = vld [vmem:[%s1921 + $0xb0] sm:$0xf8]
          %v2305 = vsel %vm2234, %v2208, %v2304
          %2306 = vst [vmem:[%s1921 + $0xb0] sm:$0xf8] %v2305
          %v2307 = vld [vmem:[%s1921 + $0xb8] sm:$0xf]
          %v2308 = vsel %vm2240, %v2208, %v2307
          %2309 = vst [vmem:[%s1921 + $0xb8] sm:$0xf] %v2308
          %v2310 = vld [vmem:[%s1921 + $0xc0] sm:$0xf8]
          %v2311 = vsel %vm2234, %v2210, %v2310
          %2312 = vst [vmem:[%s1921 + $0xc0] sm:$0xf8] %v2311
          %v2313 = vld [vmem:[%s1921 + $0xc8] sm:$0xf]
          %v2314 = vsel %vm2240, %v2210, %v2313
          %2315 = vst [vmem:[%s1921 + $0xc8] sm:$0xf] %v2314
          %v2316 = vld [vmem:[%s1921 + $0xd0] sm:$0xf8]
          %v2317 = vsel %vm2234, %v2212, %v2316
          %2318 = vst [vmem:[%s1921 + $0xd0] sm:$0xf8] %v2317
          %v2319 = vld [vmem:[%s1921 + $0xd8] sm:$0xf]
          %v2320 = vsel %vm2240, %v2212, %v2319
          %2321 = vst [vmem:[%s1921 + $0xd8] sm:$0xf] %v2320
          %v2322 = vld [vmem:[%s1921 + $0xe0] sm:$0xf8]
          %v2323 = vsel %vm2234, %v2214, %v2322
          %2324 = vst [vmem:[%s1921 + $0xe0] sm:$0xf8] %v2323
          %v2325 = vld [vmem:[%s1921 + $0xe8] sm:$0xf]
          %v2326 = vsel %vm2240, %v2214, %v2325
          %2327 = vst [vmem:[%s1921 + $0xe8] sm:$0xf] %v2326
          %v2328 = vld [vmem:[%s1921 + $0xf0] sm:$0xf8]
          %v2329 = vsel %vm2234, %v2216, %v2328
          %2330 = vst [vmem:[%s1921 + $0xf0] sm:$0xf8] %v2329
          %v2331 = vld [vmem:[%s1921 + $0xf8] sm:$0xf]
          %v2332 = vsel %vm2240, %v2216, %v2331
          %2333 = vst [vmem:[%s1921 + $0xf8] sm:$0xf] %v2332
          %s2334 = smul.u32 %s1724, 2
          %s2335 = scalar_lea.vmem [#allocation12], %s2334
          %v2336 = vld [vmem:[%s2335] sm:$0x1]
          %v2338 = vlaneseq
          %v2339 = vshrl.u32 %v2338, 7
          %v2340 = vsub.s32 0, %v2339
          %v2341 = vrot.slane %v2336, %v2340
          %v2343 = vld [vmem:[#allocation3] sm:$0xf0]
          %v2344 = vld [vmem:[#allocation3 + $0x8] sm:$0xf]
          %v2345 = vld [vmem:[#allocation3 + $0x10] sm:$0xf0]
          %v2346 = vld [vmem:[#allocation3 + $0x18] sm:$0xf]
          %v2347 = vld [vmem:[#allocation3 + $0x20] sm:$0xf0]
          %v2348 = vld [vmem:[#allocation3 + $0x28] sm:$0xf]
          %v2349 = vld [vmem:[#allocation3 + $0x30] sm:$0xf0]
          %v2350 = vld [vmem:[#allocation3 + $0x38] sm:$0xf]
          %v2351 = vld [vmem:[#allocation3 + $0x40] sm:$0xf0]
          %v2352 = vld [vmem:[#allocation3 + $0x48] sm:$0xf]
          %v2353 = vld [vmem:[#allocation3 + $0x50] sm:$0xf0]
          %v2354 = vld [vmem:[#allocation3 + $0x58] sm:$0xf]
          %v2355 = vld [vmem:[#allocation3 + $0x60] sm:$0xf0]
          %v2356 = vld [vmem:[#allocation3 + $0x68] sm:$0xf]
          %v2357 = vld [vmem:[#allocation3 + $0x70] sm:$0xf0]
          %v2358 = vld [vmem:[#allocation3 + $0x78] sm:$0xf]
          %v2359 = vld [vmem:[#allocation3 + $0x80] sm:$0xf0]
          %v2360 = vld [vmem:[#allocation3 + $0x88] sm:$0xf]
          %v2361 = vld [vmem:[#allocation3 + $0x90] sm:$0xf0]
          %v2362 = vld [vmem:[#allocation3 + $0x98] sm:$0xf]
          %v2363 = vld [vmem:[#allocation3 + $0xa0] sm:$0xf0]
          %v2364 = vld [vmem:[#allocation3 + $0xa8] sm:$0xf]
          %v2365 = vld [vmem:[#allocation3 + $0xb0] sm:$0xf0]
          %v2366 = vld [vmem:[#allocation3 + $0xb8] sm:$0xf]
          %v2367 = vld [vmem:[#allocation3 + $0xc0] sm:$0xf0]
          %v2368 = vld [vmem:[#allocation3 + $0xc8] sm:$0xf]
          %v2369 = vld [vmem:[#allocation3 + $0xd0] sm:$0xf0]
          %v2370 = vld [vmem:[#allocation3 + $0xd8] sm:$0xf]
          %v2371 = vld [vmem:[#allocation3 + $0xe0] sm:$0xf0]
          %v2372 = vld [vmem:[#allocation3 + $0xe8] sm:$0xf]
          %v2373 = vld [vmem:[#allocation3 + $0xf0] sm:$0xf0]
          %v2374 = vld [vmem:[#allocation3 + $0xf8] sm:$0xf]
          %vm2407 = vcmask 1043456
          %v2408 = vrot.slane %v2343, 4
          %v2409 = vrot.slane %v2344, 4
          %v2410 = vsel %vm2407, %v2408, %v2409
          %v2411 = vrot.slane %v2345, 4
          %v2412 = vrot.slane %v2346, 4
          %v2413 = vsel %vm2407, %v2411, %v2412
          %v2414 = vrot.slane %v2347, 4
          %v2415 = vrot.slane %v2348, 4
          %v2416 = vsel %vm2407, %v2414, %v2415
          %v2417 = vrot.slane %v2349, 4
          %v2418 = vrot.slane %v2350, 4
          %v2419 = vsel %vm2407, %v2417, %v2418
          %v2420 = vrot.slane %v2351, 4
          %v2421 = vrot.slane %v2352, 4
          %v2422 = vsel %vm2407, %v2420, %v2421
          %v2423 = vrot.slane %v2353, 4
          %v2424 = vrot.slane %v2354, 4
          %v2425 = vsel %vm2407, %v2423, %v2424
          %v2426 = vrot.slane %v2355, 4
          %v2427 = vrot.slane %v2356, 4
          %v2428 = vsel %vm2407, %v2426, %v2427
          %v2429 = vrot.slane %v2357, 4
          %v2430 = vrot.slane %v2358, 4
          %v2431 = vsel %vm2407, %v2429, %v2430
          %v2432 = vrot.slane %v2359, 4
          %v2433 = vrot.slane %v2360, 4
          %v2434 = vsel %vm2407, %v2432, %v2433
          %v2435 = vrot.slane %v2361, 4
          %v2436 = vrot.slane %v2362, 4
          %v2437 = vsel %vm2407, %v2435, %v2436
          %v2438 = vrot.slane %v2363, 4
          %v2439 = vrot.slane %v2364, 4
          %v2440 = vsel %vm2407, %v2438, %v2439
          %v2441 = vrot.slane %v2365, 4
          %v2442 = vrot.slane %v2366, 4
          %v2443 = vsel %vm2407, %v2441, %v2442
          %v2444 = vrot.slane %v2367, 4
          %v2445 = vrot.slane %v2368, 4
          %v2446 = vsel %vm2407, %v2444, %v2445
          %v2447 = vrot.slane %v2369, 4
          %v2448 = vrot.slane %v2370, 4
          %v2449 = vsel %vm2407, %v2447, %v2448
          %v2450 = vrot.slane %v2371, 4
          %v2451 = vrot.slane %v2372, 4
          %v2452 = vsel %vm2407, %v2450, %v2451
          %v2453 = vrot.slane %v2373, 4
          %v2454 = vrot.slane %v2374, 4
          %v2455 = vsel %vm2407, %v2453, %v2454
          %s2456 = smul.u32 %s1724, 72
          %s2457 = smul.addr %s2456, 4
          %s2458 = scalar_lea.vmem [#allocation10], %s2457
          %v2459 = vld [vmem:[%s2458] sm:$0xf]
          %v2460 = vld [vmem:[%s2458 + $0x4] sm:$0xf]
          %v2461 = vld [vmem:[%s2458 + $0x8] sm:$0xf]
          %v2462 = vld [vmem:[%s2458 + $0xc] sm:$0xf]
          %v2463 = vld [vmem:[%s2458 + $0x10] sm:$0xf]
          %v2464 = vld [vmem:[%s2458 + $0x14] sm:$0xf]
          %v2465 = vld [vmem:[%s2458 + $0x18] sm:$0xf]
          %v2466 = vld [vmem:[%s2458 + $0x1c] sm:$0xf]
          %v2467 = vld [vmem:[%s2458 + $0x20] sm:$0xf]
          %v2468 = vld [vmem:[%s2458 + $0x24] sm:$0xf]
          %v2469 = vld [vmem:[%s2458 + $0x28] sm:$0xf]
          %v2470 = vld [vmem:[%s2458 + $0x2c] sm:$0xf]
          %v2483 = vunpack.c.l.b16 %v2459
          %v2484 = vunpack.c.l.b16 %v2460
          %v2485 = vunpack.c.l.b16 %v2461
          %v2486 = vunpack.c.l.b16 %v2462
          %v2487 = vunpack.c.l.b16 %v2463
          %v2488 = vunpack.c.l.b16 %v2464
          %v2489 = vunpack.c.l.b16 %v2465
          %v2490 = vunpack.c.l.b16 %v2466
          %v2491 = vunpack.c.l.b16 %v2467
          %v2492 = vunpack.c.l.b16 %v2468
          %v2493 = vunpack.c.l.b16 %v2469
          %v2494 = vunpack.c.l.b16 %v2470
          %v2495 = vpack.c.b16 %v2484, %v2483
          %v2496 = vpack.c.b16 %v2486, %v2485
          %v2497 = vpack.c.b16 %v2488, %v2487
          %v2498 = vpack.c.b16 %v2490, %v2489
          %v2499 = vpack.c.b16 %v2492, %v2491
          %v2500 = vpack.c.b16 %v2494, %v2493
          %v2508 = vsel %vm300, %v2410, 0
          %v2511 = vsel %vm300, %v2413, 0
          %v2514 = vsel %vm300, %v2416, 0
          %v2517 = vsel %vm300, %v2419, 0
          %v2520 = vsel %vm300, %v2422, 0
          %v2523 = vsel %vm300, %v2425, 0
          %v2526 = vsel %vm300, %v2428, 0
          %v2529 = vsel %vm300, %v2431, 0
          %v2532 = vsel %vm300, %v2434, 0
          %v2535 = vsel %vm300, %v2437, 0
          %v2538 = vsel %vm300, %v2440, 0
          %v2541 = vsel %vm300, %v2443, 0
          %v2544 = vsel %vm300, %v2446, 0
          %v2547 = vsel %vm300, %v2449, 0
          %v2550 = vsel %vm300, %v2452, 0
          %v2553 = vsel %vm300, %v2455, 0
          %2555 = vmatprep.subr.bf16.mxu0 0
          %2556 = vmatpush1.bf16.msra.mxu0 %v2495
          %2557 = vmatprep.subr.bf16.mxu0 0
          %2558 = vmatpush1.bf16.msra.mxu0 %v2496
          %2559 = vmatprep.subr.bf16.mxu0 0
          %2560 = vmatpush1.bf16.msra.mxu0 %v2497
          %2561 = vmatprep.subr.bf16.mxu0 0
          %2562 = vmatpush1.bf16.msra.mxu0 %v2498
          %2563 = vmatprep.subr.bf16.mxu0 0
          %2564 = vmatpush1.bf16.msra.mxu0 %v2499
          %2565 = vmatprep.subr.bf16.mxu0 0
          %2566 = vmatpush1.bf16.msra.mxu0 %v2500
          %2567 = vmatprep.subr.bf16.mxu0 0
          %2568 = vmatpush1.bf16.msra.mxu0 0
          %2569 = vmatprep.subr.bf16.mxu0 0
          %2570 = vmatpush1.bf16.msra.mxu0 0
          %2571 = vmatprep.subr.bf16.mxu0 0
          %2572 = vmatpush1.bf16.msra.mxu0 0
          %2573 = vmatprep.subr.bf16.mxu0 0
          %2574 = vmatpush1.bf16.msra.mxu0 0
          %2575 = vmatprep.subr.bf16.mxu0 0
          %2576 = vmatpush1.bf16.msra.mxu0 0
          %2577 = vmatprep.subr.bf16.mxu0 0
          %2578 = vmatpush1.bf16.msra.mxu0 0
          %2579 = vmatprep.subr.bf16.mxu0 0
          %2580 = vmatpush1.bf16.msra.mxu0 0
          %2581 = vmatprep.subr.bf16.mxu0 0
          %2582 = vmatpush1.bf16.msra.mxu0 0
          %2583 = vmatprep.subr.bf16.mxu0 0
          %2584 = vmatpush1.bf16.msra.mxu0 0
          %2585 = vmatprep.subr.bf16.mxu0 0
          %2586 = vmatpush1.bf16.msra.mxu0 0
          %2587 = vmatprep.mubr.bf16.mxu0 0
          %2588 = vmatmul.mubr.bf16.gmra.mrb[0].mxu0 %v2508
          %v2589 = vpop.f32.mrb[0].mxu0
          %v2590 = vadd.f32 0.0, %v2589
          %v2591 = vpop.f32.mrb[0].mxu0
          %v2592 = vpop.f32.mrb[0].mxu0
          %v2593 = vadd.f32 0.0, %v2592
          %v2594 = vpop.f32.mrb[0].mxu0
          %2595 = vmatprep.mubr.bf16.mxu0 0
          %2596 = vmatmul.mubr.bf16.gmra.mrb[0].mxu0 %v2511
          %v2597 = vpop.f32.mrb[0].mxu0
          %v2598 = vadd.f32 0.0, %v2597
          %v2599 = vpop.f32.mrb[0].mxu0
          %v2600 = vpop.f32.mrb[0].mxu0
          %v2601 = vadd.f32 0.0, %v2600
          %v2602 = vpop.f32.mrb[0].mxu0
          %2603 = vmatprep.mubr.bf16.mxu0 0
          %2604 = vmatmul.mubr.bf16.gmra.mrb[0].mxu0 %v2514
          %v2605 = vpop.f32.mrb[0].mxu0
          %v2606 = vadd.f32 0.0, %v2605
          %v2607 = vpop.f32.mrb[0].mxu0
          %v2608 = vpop.f32.mrb[0].mxu0
          %v2609 = vadd.f32 0.0, %v2608
          %v2610 = vpop.f32.mrb[0].mxu0
          %2611 = vmatprep.mubr.bf16.mxu0 0
          %2612 = vmatmul.mubr.bf16.gmra.mrb[0].mxu0 %v2517
          %v2613 = vpop.f32.mrb[0].mxu0
          %v2614 = vadd.f32 0.0, %v2613
          %v2615 = vpop.f32.mrb[0].mxu0
          %v2616 = vpop.f32.mrb[0].mxu0
          %v2617 = vadd.f32 0.0, %v2616
          %v2618 = vpop.f32.mrb[0].mxu0
          %2619 = vmatprep.mubr.bf16.mxu0 0
          %2620 = vmatmul.mubr.bf16.gmra.mrb[0].mxu0 %v2520
          %v2621 = vpop.f32.mrb[0].mxu0
          %v2622 = vadd.f32 0.0, %v2621
          %v2623 = vpop.f32.mrb[0].mxu0
          %v2624 = vpop.f32.mrb[0].mxu0
          %v2625 = vadd.f32 0.0, %v2624
          %v2626 = vpop.f32.mrb[0].mxu0
          %2627 = vmatprep.mubr.bf16.mxu0 0
          %2628 = vmatmul.mubr.bf16.gmra.mrb[0].mxu0 %v2523
          %v2629 = vpop.f32.mrb[0].mxu0
          %v2630 = vadd.f32 0.0, %v2629
          %v2631 = vpop.f32.mrb[0].mxu0
          %v2632 = vpop.f32.mrb[0].mxu0
          %v2633 = vadd.f32 0.0, %v2632
          %v2634 = vpop.f32.mrb[0].mxu0
          %2635 = vmatprep.mubr.bf16.mxu0 0
          %2636 = vmatmul.mubr.bf16.gmra.mrb[0].mxu0 %v2526
          %v2637 = vpop.f32.mrb[0].mxu0
          %v2638 = vadd.f32 0.0, %v2637
          %v2639 = vpop.f32.mrb[0].mxu0
          %v2640 = vpop.f32.mrb[0].mxu0
          %v2641 = vadd.f32 0.0, %v2640
          %v2642 = vpop.f32.mrb[0].mxu0
          %2643 = vmatprep.mubr.bf16.mxu0 0
          %2644 = vmatmul.mubr.bf16.gmra.mrb[0].mxu0 %v2529
          %v2645 = vpop.f32.mrb[0].mxu0
          %v2646 = vadd.f32 0.0, %v2645
          %v2647 = vpop.f32.mrb[0].mxu0
          %v2648 = vpop.f32.mrb[0].mxu0
          %v2649 = vadd.f32 0.0, %v2648
          %v2650 = vpop.f32.mrb[0].mxu0
          %2651 = vmatprep.mubr.bf16.mxu0 0
          %2652 = vmatmul.mubr.bf16.gmra.mrb[0].mxu0 %v2532
          %v2653 = vpop.f32.mrb[0].mxu0
          %v2654 = vadd.f32 0.0, %v2653
          %v2655 = vpop.f32.mrb[0].mxu0
          %v2656 = vpop.f32.mrb[0].mxu0
          %v2657 = vadd.f32 0.0, %v2656
          %v2658 = vpop.f32.mrb[0].mxu0
          %2659 = vmatprep.mubr.bf16.mxu0 0
          %2660 = vmatmul.mubr.bf16.gmra.mrb[0].mxu0 %v2535
          %v2661 = vpop.f32.mrb[0].mxu0
          %v2662 = vadd.f32 0.0, %v2661
          %v2663 = vpop.f32.mrb[0].mxu0
          %v2664 = vpop.f32.mrb[0].mxu0
          %v2665 = vadd.f32 0.0, %v2664
          %v2666 = vpop.f32.mrb[0].mxu0
          %2667 = vmatprep.mubr.bf16.mxu0 0
          %2668 = vmatmul.mubr.bf16.gmra.mrb[0].mxu0 %v2538
          %v2669 = vpop.f32.mrb[0].mxu0
          %v2670 = vadd.f32 0.0, %v2669
          %v2671 = vpop.f32.mrb[0].mxu0
          %v2672 = vpop.f32.mrb[0].mxu0
          %v2673 = vadd.f32 0.0, %v2672
          %v2674 = vpop.f32.mrb[0].mxu0
          %2675 = vmatprep.mubr.bf16.mxu0 0
          %2676 = vmatmul.mubr.bf16.gmra.mrb[0].mxu0 %v2541
          %v2677 = vpop.f32.mrb[0].mxu0
          %v2678 = vadd.f32 0.0, %v2677
          %v2679 = vpop.f32.mrb[0].mxu0
          %v2680 = vpop.f32.mrb[0].mxu0
          %v2681 = vadd.f32 0.0, %v2680
          %v2682 = vpop.f32.mrb[0].mxu0
          %2683 = vmatprep.mubr.bf16.mxu0 0
          %2684 = vmatmul.mubr.bf16.gmra.mrb[0].mxu0 %v2544
          %v2685 = vpop.f32.mrb[0].mxu0
          %v2686 = vadd.f32 0.0, %v2685
          %v2687 = vpop.f32.mrb[0].mxu0
          %v2688 = vpop.f32.mrb[0].mxu0
          %v2689 = vadd.f32 0.0, %v2688
          %v2690 = vpop.f32.mrb[0].mxu0
          %2691 = vmatprep.mubr.bf16.mxu0 0
          %2692 = vmatmul.mubr.bf16.gmra.mrb[0].mxu0 %v2547
          %v2693 = vpop.f32.mrb[0].mxu0
          %v2694 = vadd.f32 0.0, %v2693
          %v2695 = vpop.f32.mrb[0].mxu0
          %v2696 = vpop.f32.mrb[0].mxu0
          %v2697 = vadd.f32 0.0, %v2696
          %v2698 = vpop.f32.mrb[0].mxu0
          %2699 = vmatprep.mubr.bf16.mxu0 0
          %2700 = vmatmul.mubr.bf16.gmra.mrb[0].mxu0 %v2550
          %v2701 = vpop.f32.mrb[0].mxu0
          %v2702 = vadd.f32 0.0, %v2701
          %v2703 = vpop.f32.mrb[0].mxu0
          %v2704 = vpop.f32.mrb[0].mxu0
          %v2705 = vadd.f32 0.0, %v2704
          %v2706 = vpop.f32.mrb[0].mxu0
          %2707 = vmatprep.mubr.bf16.mxu0 0
          %2708 = vmatmul.mubr.bf16.gmra.mrb[0].mxu0 %v2553
          %v2709 = vpop.f32.mrb[0].mxu0
          %v2710 = vadd.f32 0.0, %v2709
          %v2711 = vpop.f32.mrb[0].mxu0
          %v2712 = vpop.f32.mrb[0].mxu0
          %v2713 = vadd.f32 0.0, %v2712
          %v2714 = vpop.f32.mrb[0].mxu0
          %2715 = vdwg.mxu0
          %v2716 = vadd.f32 %v2341, %v2590
          %v2717 = vadd.f32 %v2341, %v2593
          %v2718 = vadd.f32 %v2341, %v2598
          %v2719 = vadd.f32 %v2341, %v2601
          %v2720 = vadd.f32 %v2341, %v2606
          %v2721 = vadd.f32 %v2341, %v2609
          %v2722 = vadd.f32 %v2341, %v2614
          %v2723 = vadd.f32 %v2341, %v2617
          %v2724 = vadd.f32 %v2341, %v2622
          %v2725 = vadd.f32 %v2341, %v2625
          %v2726 = vadd.f32 %v2341, %v2630
          %v2727 = vadd.f32 %v2341, %v2633
          %v2728 = vadd.f32 %v2341, %v2638
          %v2729 = vadd.f32 %v2341, %v2641
          %v2730 = vadd.f32 %v2341, %v2646
          %v2731 = vadd.f32 %v2341, %v2649
          %v2732 = vadd.f32 %v2341, %v2654
          %v2733 = vadd.f32 %v2341, %v2657
          %v2734 = vadd.f32 %v2341, %v2662
          %v2735 = vadd.f32 %v2341, %v2665
          %v2736 = vadd.f32 %v2341, %v2670
          %v2737 = vadd.f32 %v2341, %v2673
          %v2738 = vadd.f32 %v2341, %v2678
          %v2739 = vadd.f32 %v2341, %v2681
          %v2740 = vadd.f32 %v2341, %v2686
          %v2741 = vadd.f32 %v2341, %v2689
          %v2742 = vadd.f32 %v2341, %v2694
          %v2743 = vadd.f32 %v2341, %v2697
          %v2744 = vadd.f32 %v2341, %v2702
          %v2745 = vadd.f32 %v2341, %v2705
          %v2746 = vadd.f32 %v2341, %v2710
          %v2747 = vadd.f32 %v2341, %v2713
          %v2748 = vld [vmem:[%s1921] sm:$0xf0]
          %v2749 = vld [vmem:[%s1921 + $0x8] sm:$0xf]
          %v2750 = vld [vmem:[%s1921 + $0x10] sm:$0xf0]
          %v2751 = vld [vmem:[%s1921 + $0x18] sm:$0xf]
          %v2752 = vld [vmem:[%s1921 + $0x20] sm:$0xf0]
          %v2753 = vld [vmem:[%s1921 + $0x28] sm:$0xf]
          %v2754 = vld [vmem:[%s1921 + $0x30] sm:$0xf0]
          %v2755 = vld [vmem:[%s1921 + $0x38] sm:$0xf]
          %v2756 = vld [vmem:[%s1921 + $0x40] sm:$0xf0]
          %v2757 = vld [vmem:[%s1921 + $0x48] sm:$0xf]
          %v2758 = vld [vmem:[%s1921 + $0x50] sm:$0xf0]
          %v2759 = vld [vmem:[%s1921 + $0x58] sm:$0xf]
          %v2760 = vld [vmem:[%s1921 + $0x60] sm:$0xf0]
          %v2761 = vld [vmem:[%s1921 + $0x68] sm:$0xf]
          %v2762 = vld [vmem:[%s1921 + $0x70] sm:$0xf0]
          %v2763 = vld [vmem:[%s1921 + $0x78] sm:$0xf]
          %v2764 = vld [vmem:[%s1921 + $0x80] sm:$0xf0]
          %v2765 = vld [vmem:[%s1921 + $0x88] sm:$0xf]
          %v2766 = vld [vmem:[%s1921 + $0x90] sm:$0xf0]
          %v2767 = vld [vmem:[%s1921 + $0x98] sm:$0xf]
          %v2768 = vld [vmem:[%s1921 + $0xa0] sm:$0xf0]
          %v2769 = vld [vmem:[%s1921 + $0xa8] sm:$0xf]
          %v2770 = vld [vmem:[%s1921 + $0xb0] sm:$0xf0]
          %v2771 = vld [vmem:[%s1921 + $0xb8] sm:$0xf]
          %v2772 = vld [vmem:[%s1921 + $0xc0] sm:$0xf0]
          %v2773 = vld [vmem:[%s1921 + $0xc8] sm:$0xf]
          %v2774 = vld [vmem:[%s1921 + $0xd0] sm:$0xf0]
          %v2775 = vld [vmem:[%s1921 + $0xd8] sm:$0xf]
          %v2776 = vld [vmem:[%s1921 + $0xe0] sm:$0xf0]
          %v2777 = vld [vmem:[%s1921 + $0xe8] sm:$0xf]
          %v2778 = vld [vmem:[%s1921 + $0xf0] sm:$0xf0]
          %v2779 = vld [vmem:[%s1921 + $0xf8] sm:$0xf]
          %v2812 = vrot.slane %v2748, 4
          %v2813 = vrot.slane %v2749, 4
          %v2814 = vsel %vm2407, %v2812, %v2813
          %v2815 = vrot.slane %v2750, 4
          %v2816 = vrot.slane %v2751, 4
          %v2817 = vsel %vm2407, %v2815, %v2816
          %v2818 = vrot.slane %v2752, 4
          %v2819 = vrot.slane %v2753, 4
          %v2820 = vsel %vm2407, %v2818, %v2819
          %v2821 = vrot.slane %v2754, 4
          %v2822 = vrot.slane %v2755, 4
          %v2823 = vsel %vm2407, %v2821, %v2822
          %v2824 = vrot.slane %v2756, 4
          %v2825 = vrot.slane %v2757, 4
          %v2826 = vsel %vm2407, %v2824, %v2825
          %v2827 = vrot.slane %v2758, 4
          %v2828 = vrot.slane %v2759, 4
          %v2829 = vsel %vm2407, %v2827, %v2828
          %v2830 = vrot.slane %v2760, 4
          %v2831 = vrot.slane %v2761, 4
          %v2832 = vsel %vm2407, %v2830, %v2831
          %v2833 = vrot.slane %v2762, 4
          %v2834 = vrot.slane %v2763, 4
          %v2835 = vsel %vm2407, %v2833, %v2834
          %v2836 = vrot.slane %v2764, 4
          %v2837 = vrot.slane %v2765, 4
          %v2838 = vsel %vm2407, %v2836, %v2837
          %v2839 = vrot.slane %v2766, 4
          %v2840 = vrot.slane %v2767, 4
          %v2841 = vsel %vm2407, %v2839, %v2840
          %v2842 = vrot.slane %v2768, 4
          %v2843 = vrot.slane %v2769, 4
          %v2844 = vsel %vm2407, %v2842, %v2843
          %v2845 = vrot.slane %v2770, 4
          %v2846 = vrot.slane %v2771, 4
          %v2847 = vsel %vm2407, %v2845, %v2846
          %v2848 = vrot.slane %v2772, 4
          %v2849 = vrot.slane %v2773, 4
          %v2850 = vsel %vm2407, %v2848, %v2849
          %v2851 = vrot.slane %v2774, 4
          %v2852 = vrot.slane %v2775, 4
          %v2853 = vsel %vm2407, %v2851, %v2852
          %v2854 = vrot.slane %v2776, 4
          %v2855 = vrot.slane %v2777, 4
          %v2856 = vsel %vm2407, %v2854, %v2855
          %v2857 = vrot.slane %v2778, 4
          %v2858 = vrot.slane %v2779, 4
          %v2859 = vsel %vm2407, %v2857, %v2858
          %s2860 = sadd.s32 12, %s2456
          %s2861 = smul.addr %s2860, 4
          %s2862 = scalar_lea.vmem [#allocation10], %s2861
          %v2863 = vld [vmem:[%s2862] sm:$0xf]
          %v2864 = vld [vmem:[%s2862 + $0x4] sm:$0xf]
          %v2865 = vld [vmem:[%s2862 + $0x8] sm:$0xf]
          %v2866 = vld [vmem:[%s2862 + $0xc] sm:$0xf]
          %v2867 = vld [vmem:[%s2862 + $0x10] sm:$0xf]
          %v2868 = vld [vmem:[%s2862 + $0x14] sm:$0xf]
          %v2869 = vld [vmem:[%s2862 + $0x18] sm:$0xf]
          %v2870 = vld [vmem:[%s2862 + $0x1c] sm:$0xf]
          %v2871 = vld [vmem:[%s2862 + $0x20] sm:$0xf]
          %v2872 = vld [vmem:[%s2862 + $0x24] sm:$0xf]
          %v2873 = vld [vmem:[%s2862 + $0x28] sm:$0xf]
          %v2874 = vld [vmem:[%s2862 + $0x2c] sm:$0xf]
          %v2887 = vunpack.c.l.b16 %v2863
          %v2888 = vunpack.c.l.b16 %v2864
          %v2889 = vunpack.c.l.b16 %v2865
          %v2890 = vunpack.c.l.b16 %v2866
          %v2891 = vunpack.c.l.b16 %v2867
          %v2892 = vunpack.c.l.b16 %v2868
          %v2893 = vunpack.c.l.b16 %v2869
          %v2894 = vunpack.c.l.b16 %v2870
          %v2895 = vunpack.c.l.b16 %v2871
          %v2896 = vunpack.c.l.b16 %v2872
          %v2897 = vunpack.c.l.b16 %v2873
          %v2898 = vunpack.c.l.b16 %v2874
          %v2899 = vpack.c.b16 %v2888, %v2887
          %v2900 = vpack.c.b16 %v2890, %v2889
          %v2901 = vpack.c.b16 %v2892, %v2891
          %v2902 = vpack.c.b16 %v2894, %v2893
          %v2903 = vpack.c.b16 %v2896, %v2895
          %v2904 = vpack.c.b16 %v2898, %v2897
          %v2912 = vsel %vm300, %v2814, 0
          %v2915 = vsel %vm300, %v2817, 0
          %v2918 = vsel %vm300, %v2820, 0
          %v2921 = vsel %vm300, %v2823, 0
          %v2924 = vsel %vm300, %v2826, 0
          %v2927 = vsel %vm300, %v2829, 0
          %v2930 = vsel %vm300, %v2832, 0
          %v2933 = vsel %vm300, %v2835, 0
          %v2936 = vsel %vm300, %v2838, 0
          %v2939 = vsel %vm300, %v2841, 0
          %v2942 = vsel %vm300, %v2844, 0
          %v2945 = vsel %vm300, %v2847, 0
          %v2948 = vsel %vm300, %v2850, 0
          %v2951 = vsel %vm300, %v2853, 0
          %v2954 = vsel %vm300, %v2856, 0
          %v2957 = vsel %vm300, %v2859, 0
          %2959 = vmatprep.subr.bf16.mxu0 0
          %2960 = vmatpush1.bf16.msra.mxu0 %v2899
          %2961 = vmatprep.subr.bf16.mxu0 0
          %2962 = vmatpush1.bf16.msra.mxu0 %v2900
          %2963 = vmatprep.subr.bf16.mxu0 0
          %2964 = vmatpush1.bf16.msra.mxu0 %v2901
          %2965 = vmatprep.subr.bf16.mxu0 0
          %2966 = vmatpush1.bf16.msra.mxu0 %v2902
          %2967 = vmatprep.subr.bf16.mxu0 0
          %2968 = vmatpush1.bf16.msra.mxu0 %v2903
          %2969 = vmatprep.subr.bf16.mxu0 0
          %2970 = vmatpush1.bf16.msra.mxu0 %v2904
          %2971 = vmatprep.subr.bf16.mxu0 0
          %2972 = vmatpush1.bf16.msra.mxu0 0
          %2973 = vmatprep.subr.bf16.mxu0 0
          %2974 = vmatpush1.bf16.msra.mxu0 0
          %2975 = vmatprep.subr.bf16.mxu0 0
          %2976 = vmatpush1.bf16.msra.mxu0 0
          %2977 = vmatprep.subr.bf16.mxu0 0
          %2978 = vmatpush1.bf16.msra.mxu0 0
          %2979 = vmatprep.subr.bf16.mxu0 0
          %2980 = vmatpush1.bf16.msra.mxu0 0
          %2981 = vmatprep.subr.bf16.mxu0 0
          %2982 = vmatpush1.bf16.msra.mxu0 0
          %2983 = vmatprep.subr.bf16.mxu0 0
          %2984 = vmatpush1.bf16.msra.mxu0 0
          %2985 = vmatprep.subr.bf16.mxu0 0
          %2986 = vmatpush1.bf16.msra.mxu0 0
          %2987 = vmatprep.subr.bf16.mxu0 0
          %2988 = vmatpush1.bf16.msra.mxu0 0
          %2989 = vmatprep.subr.bf16.mxu0 0
          %2990 = vmatpush1.bf16.msra.mxu0 0
          %2991 = vmatprep.mubr.bf16.mxu0 0
          %2992 = vmatmul.mubr.bf16.gmra.mrb[0].mxu0 %v2912
          %v2993 = vpop.f32.mrb[0].mxu0
          %v2994 = vadd.f32 0.0, %v2993
          %v2995 = vpop.f32.mrb[0].mxu0
          %v2996 = vpop.f32.mrb[0].mxu0
          %v2997 = vadd.f32 0.0, %v2996
          %v2998 = vpop.f32.mrb[0].mxu0
          %2999 = vmatprep.mubr.bf16.mxu0 0
          %3000 = vmatmul.mubr.bf16.gmra.mrb[0].mxu0 %v2915
          %v3001 = vpop.f32.mrb[0].mxu0
          %v3002 = vadd.f32 0.0, %v3001
          %v3003 = vpop.f32.mrb[0].mxu0
          %v3004 = vpop.f32.mrb[0].mxu0
          %v3005 = vadd.f32 0.0, %v3004
          %v3006 = vpop.f32.mrb[0].mxu0
          %3007 = vmatprep.mubr.bf16.mxu0 0
          %3008 = vmatmul.mubr.bf16.gmra.mrb[0].mxu0 %v2918
          %v3009 = vpop.f32.mrb[0].mxu0
          %v3010 = vadd.f32 0.0, %v3009
          %v3011 = vpop.f32.mrb[0].mxu0
          %v3012 = vpop.f32.mrb[0].mxu0
          %v3013 = vadd.f32 0.0, %v3012
          %v3014 = vpop.f32.mrb[0].mxu0
          %3015 = vmatprep.mubr.bf16.mxu0 0
          %3016 = vmatmul.mubr.bf16.gmra.mrb[0].mxu0 %v2921
          %v3017 = vpop.f32.mrb[0].mxu0
          %v3018 = vadd.f32 0.0, %v3017
          %v3019 = vpop.f32.mrb[0].mxu0
          %v3020 = vpop.f32.mrb[0].mxu0
          %v3021 = vadd.f32 0.0, %v3020
          %v3022 = vpop.f32.mrb[0].mxu0
          %3023 = vmatprep.mubr.bf16.mxu0 0
          %3024 = vmatmul.mubr.bf16.gmra.mrb[0].mxu0 %v2924
          %v3025 = vpop.f32.mrb[0].mxu0
          %v3026 = vadd.f32 0.0, %v3025
          %v3027 = vpop.f32.mrb[0].mxu0
          %v3028 = vpop.f32.mrb[0].mxu0
          %v3029 = vadd.f32 0.0, %v3028
          %v3030 = vpop.f32.mrb[0].mxu0
          %3031 = vmatprep.mubr.bf16.mxu0 0
          %3032 = vmatmul.mubr.bf16.gmra.mrb[0].mxu0 %v2927
          %v3033 = vpop.f32.mrb[0].mxu0
          %v3034 = vadd.f32 0.0, %v3033
          %v3035 = vpop.f32.mrb[0].mxu0
          %v3036 = vpop.f32.mrb[0].mxu0
          %v3037 = vadd.f32 0.0, %v3036
          %v3038 = vpop.f32.mrb[0].mxu0
          %3039 = vmatprep.mubr.bf16.mxu0 0
          %3040 = vmatmul.mubr.bf16.gmra.mrb[0].mxu0 %v2930
          %v3041 = vpop.f32.mrb[0].mxu0
          %v3042 = vadd.f32 0.0, %v3041
          %v3043 = vpop.f32.mrb[0].mxu0
          %v3044 = vpop.f32.mrb[0].mxu0
          %v3045 = vadd.f32 0.0, %v3044
          %v3046 = vpop.f32.mrb[0].mxu0
          %3047 = vmatprep.mubr.bf16.mxu0 0
          %3048 = vmatmul.mubr.bf16.gmra.mrb[0].mxu0 %v2933
          %v3049 = vpop.f32.mrb[0].mxu0
          %v3050 = vadd.f32 0.0, %v3049
          %v3051 = vpop.f32.mrb[0].mxu0
          %v3052 = vpop.f32.mrb[0].mxu0
          %v3053 = vadd.f32 0.0, %v3052
          %v3054 = vpop.f32.mrb[0].mxu0
          %3055 = vmatprep.mubr.bf16.mxu0 0
          %3056 = vmatmul.mubr.bf16.gmra.mrb[0].mxu0 %v2936
          %v3057 = vpop.f32.mrb[0].mxu0
          %v3058 = vadd.f32 0.0, %v3057
          %v3059 = vpop.f32.mrb[0].mxu0
          %v3060 = vpop.f32.mrb[0].mxu0
          %v3061 = vadd.f32 0.0, %v3060
          %v3062 = vpop.f32.mrb[0].mxu0
          %3063 = vmatprep.mubr.bf16.mxu0 0
          %3064 = vmatmul.mubr.bf16.gmra.mrb[0].mxu0 %v2939
          %v3065 = vpop.f32.mrb[0].mxu0
          %v3066 = vadd.f32 0.0, %v3065
          %v3067 = vpop.f32.mrb[0].mxu0
          %v3068 = vpop.f32.mrb[0].mxu0
          %v3069 = vadd.f32 0.0, %v3068
          %v3070 = vpop.f32.mrb[0].mxu0
          %3071 = vmatprep.mubr.bf16.mxu0 0
          %3072 = vmatmul.mubr.bf16.gmra.mrb[0].mxu0 %v2942
          %v3073 = vpop.f32.mrb[0].mxu0
          %v3074 = vadd.f32 0.0, %v3073
          %v3075 = vpop.f32.mrb[0].mxu0
          %v3076 = vpop.f32.mrb[0].mxu0
          %v3077 = vadd.f32 0.0, %v3076
          %v3078 = vpop.f32.mrb[0].mxu0
          %3079 = vmatprep.mubr.bf16.mxu0 0
          %3080 = vmatmul.mubr.bf16.gmra.mrb[0].mxu0 %v2945
          %v3081 = vpop.f32.mrb[0].mxu0
          %v3082 = vadd.f32 0.0, %v3081
          %v3083 = vpop.f32.mrb[0].mxu0
          %v3084 = vpop.f32.mrb[0].mxu0
          %v3085 = vadd.f32 0.0, %v3084
          %v3086 = vpop.f32.mrb[0].mxu0
          %3087 = vmatprep.mubr.bf16.mxu0 0
          %3088 = vmatmul.mubr.bf16.gmra.mrb[0].mxu0 %v2948
          %v3089 = vpop.f32.mrb[0].mxu0
          %v3090 = vadd.f32 0.0, %v3089
          %v3091 = vpop.f32.mrb[0].mxu0
          %v3092 = vpop.f32.mrb[0].mxu0
          %v3093 = vadd.f32 0.0, %v3092
          %v3094 = vpop.f32.mrb[0].mxu0
          %3095 = vmatprep.mubr.bf16.mxu0 0
          %3096 = vmatmul.mubr.bf16.gmra.mrb[0].mxu0 %v2951
          %v3097 = vpop.f32.mrb[0].mxu0
          %v3098 = vadd.f32 0.0, %v3097
          %v3099 = vpop.f32.mrb[0].mxu0
          %v3100 = vpop.f32.mrb[0].mxu0
          %v3101 = vadd.f32 0.0, %v3100
          %v3102 = vpop.f32.mrb[0].mxu0
          %3103 = vmatprep.mubr.bf16.mxu0 0
          %3104 = vmatmul.mubr.bf16.gmra.mrb[0].mxu0 %v2954
          %v3105 = vpop.f32.mrb[0].mxu0
          %v3106 = vadd.f32 0.0, %v3105
          %v3107 = vpop.f32.mrb[0].mxu0
          %v3108 = vpop.f32.mrb[0].mxu0
          %v3109 = vadd.f32 0.0, %v3108
          %v3110 = vpop.f32.mrb[0].mxu0
          %3111 = vmatprep.mubr.bf16.mxu0 0
          %3112 = vmatmul.mubr.bf16.gmra.mrb[0].mxu0 %v2957
          %v3113 = vpop.f32.mrb[0].mxu0
          %v3114 = vadd.f32 0.0, %v3113
          %v3115 = vpop.f32.mrb[0].mxu0
          %v3116 = vpop.f32.mrb[0].mxu0
          %v3117 = vadd.f32 0.0, %v3116
          %v3118 = vpop.f32.mrb[0].mxu0
          %3119 = vdwg.mxu0
          %v3120 = vadd.f32 %v2716, %v2994
          %v3121 = vadd.f32 %v2717, %v2997
          %v3122 = vadd.f32 %v2718, %v3002
          %v3123 = vadd.f32 %v2719, %v3005
          %v3124 = vadd.f32 %v2720, %v3010
          %v3125 = vadd.f32 %v2721, %v3013
          %v3126 = vadd.f32 %v2722, %v3018
          %v3127 = vadd.f32 %v2723, %v3021
          %v3128 = vadd.f32 %v2724, %v3026
          %v3129 = vadd.f32 %v2725, %v3029
          %v3130 = vadd.f32 %v2726, %v3034
          %v3131 = vadd.f32 %v2727, %v3037
          %v3132 = vadd.f32 %v2728, %v3042
          %v3133 = vadd.f32 %v2729, %v3045
          %v3134 = vadd.f32 %v2730, %v3050
          %v3135 = vadd.f32 %v2731, %v3053
          %v3136 = vadd.f32 %v2732, %v3058
          %v3137 = vadd.f32 %v2733, %v3061
          %v3138 = vadd.f32 %v2734, %v3066
          %v3139 = vadd.f32 %v2735, %v3069
          %v3140 = vadd.f32 %v2736, %v3074
          %v3141 = vadd.f32 %v2737, %v3077
          %v3142 = vadd.f32 %v2738, %v3082
          %v3143 = vadd.f32 %v2739, %v3085
          %v3144 = vadd.f32 %v2740, %v3090
          %v3145 = vadd.f32 %v2741, %v3093
          %v3146 = vadd.f32 %v2742, %v3098
          %v3147 = vadd.f32 %v2743, %v3101
          %v3148 = vadd.f32 %v2744, %v3106
          %v3149 = vadd.f32 %v2745, %v3109
          %v3150 = vadd.f32 %v2746, %v3114
          %v3151 = vadd.f32 %v2747, %v3117
          %s3152 = scalar_lea.vmem [#allocation3], 32
          %v3153 = vld [vmem:[%s3152] sm:$0xf0]
          %v3154 = vld [vmem:[%s3152 + $0x8] sm:$0xf]
          %v3155 = vld [vmem:[%s3152 + $0x10] sm:$0xf0]
          %v3156 = vld [vmem:[%s3152 + $0x18] sm:$0xf]
          %v3157 = vld [vmem:[%s3152 + $0x20] sm:$0xf0]
          %v3158 = vld [vmem:[%s3152 + $0x28] sm:$0xf]
          %v3159 = vld [vmem:[%s3152 + $0x30] sm:$0xf0]
          %v3160 = vld [vmem:[%s3152 + $0x38] sm:$0xf]
          %v3161 = vld [vmem:[%s3152 + $0x40] sm:$0xf0]
          %v3162 = vld [vmem:[%s3152 + $0x48] sm:$0xf]
          %v3163 = vld [vmem:[%s3152 + $0x50] sm:$0xf0]
          %v3164 = vld [vmem:[%s3152 + $0x58] sm:$0xf]
          %v3165 = vld [vmem:[%s3152 + $0x60] sm:$0xf0]
          %v3166 = vld [vmem:[%s3152 + $0x68] sm:$0xf]
          %v3167 = vld [vmem:[%s3152 + $0x70] sm:$0xf0]
          %v3168 = vld [vmem:[%s3152 + $0x78] sm:$0xf]
          %v3169 = vld [vmem:[%s3152 + $0x80] sm:$0xf0]
          %v3170 = vld [vmem:[%s3152 + $0x88] sm:$0xf]
          %v3171 = vld [vmem:[%s3152 + $0x90] sm:$0xf0]
          %v3172 = vld [vmem:[%s3152 + $0x98] sm:$0xf]
          %v3173 = vld [vmem:[%s3152 + $0xa0] sm:$0xf0]
          %v3174 = vld [vmem:[%s3152 + $0xa8] sm:$0xf]
          %v3175 = vld [vmem:[%s3152 + $0xb0] sm:$0xf0]
          %v3176 = vld [vmem:[%s3152 + $0xb8] sm:$0xf]
          %v3177 = vld [vmem:[%s3152 + $0xc0] sm:$0xf0]
          %v3178 = vld [vmem:[%s3152 + $0xc8] sm:$0xf]
          %v3179 = vld [vmem:[%s3152 + $0xd0] sm:$0xf0]
          %v3180 = vld [vmem:[%s3152 + $0xd8] sm:$0xf]
          %v3181 = vld [vmem:[%s3152 + $0xe0] sm:$0xf0]
          %v3182 = vld [vmem:[%s3152 + $0xe8] sm:$0xf]
          %v3183 = vld [vmem:[%s3152 + $0xf0] sm:$0xf0]
          %v3184 = vld [vmem:[%s3152 + $0xf8] sm:$0xf]
          %v3217 = vrot.slane %v3153, 4
          %v3218 = vrot.slane %v3154, 4
          %v3219 = vsel %vm2407, %v3217, %v3218
          %v3220 = vrot.slane %v3155, 4
          %v3221 = vrot.slane %v3156, 4
          %v3222 = vsel %vm2407, %v3220, %v3221
          %v3223 = vrot.slane %v3157, 4
          %v3224 = vrot.slane %v3158, 4
          %v3225 = vsel %vm2407, %v3223, %v3224
          %v3226 = vrot.slane %v3159, 4
          %v3227 = vrot.slane %v3160, 4
          %v3228 = vsel %vm2407, %v3226, %v3227
          %v3229 = vrot.slane %v3161, 4
          %v3230 = vrot.slane %v3162, 4
          %v3231 = vsel %vm2407, %v3229, %v3230
          %v3232 = vrot.slane %v3163, 4
          %v3233 = vrot.slane %v3164, 4
          %v3234 = vsel %vm2407, %v3232, %v3233
          %v3235 = vrot.slane %v3165, 4
          %v3236 = vrot.slane %v3166, 4
          %v3237 = vsel %vm2407, %v3235, %v3236
          %v3238 = vrot.slane %v3167, 4
          %v3239 = vrot.slane %v3168, 4
          %v3240 = vsel %vm2407, %v3238, %v3239
          %v3241 = vrot.slane %v3169, 4
          %v3242 = vrot.slane %v3170, 4
          %v3243 = vsel %vm2407, %v3241, %v3242
          %v3244 = vrot.slane %v3171, 4
          %v3245 = vrot.slane %v3172, 4
          %v3246 = vsel %vm2407, %v3244, %v3245
          %v3247 = vrot.slane %v3173, 4
          %v3248 = vrot.slane %v3174, 4
          %v3249 = vsel %vm2407, %v3247, %v3248
          %v3250 = vrot.slane %v3175, 4
          %v3251 = vrot.slane %v3176, 4
          %v3252 = vsel %vm2407, %v3250, %v3251
          %v3253 = vrot.slane %v3177, 4
          %v3254 = vrot.slane %v3178, 4
          %v3255 = vsel %vm2407, %v3253, %v3254
          %v3256 = vrot.slane %v3179, 4
          %v3257 = vrot.slane %v3180, 4
          %v3258 = vsel %vm2407, %v3256, %v3257
          %v3259 = vrot.slane %v3181, 4
          %v3260 = vrot.slane %v3182, 4
          %v3261 = vsel %vm2407, %v3259, %v3260
          %v3262 = vrot.slane %v3183, 4
          %v3263 = vrot.slane %v3184, 4
          %v3264 = vsel %vm2407, %v3262, %v3263
          %s3265 = sadd.s32 24, %s2456
          %s3266 = smul.addr %s3265, 4
          %s3267 = scalar_lea.vmem [#allocation10], %s3266
          %v3268 = vld [vmem:[%s3267] sm:$0xf]
          %v3269 = vld [vmem:[%s3267 + $0x4] sm:$0xf]
          %v3270 = vld [vmem:[%s3267 + $0x8] sm:$0xf]
          %v3271 = vld [vmem:[%s3267 + $0xc] sm:$0xf]
          %v3272 = vld [vmem:[%s3267 + $0x10] sm:$0xf]
          %v3273 = vld [vmem:[%s3267 + $0x14] sm:$0xf]
          %v3274 = vld [vmem:[%s3267 + $0x18] sm:$0xf]
          %v3275 = vld [vmem:[%s3267 + $0x1c] sm:$0xf]
          %v3276 = vld [vmem:[%s3267 + $0x20] sm:$0xf]
          %v3277 = vld [vmem:[%s3267 + $0x24] sm:$0xf]
          %v3278 = vld [vmem:[%s3267 + $0x28] sm:$0xf]
          %v3279 = vld [vmem:[%s3267 + $0x2c] sm:$0xf]
          %v3292 = vunpack.c.l.b16 %v3268
          %v3293 = vunpack.c.l.b16 %v3269
          %v3294 = vunpack.c.l.b16 %v3270
          %v3295 = vunpack.c.l.b16 %v3271
          %v3296 = vunpack.c.l.b16 %v3272
          %v3297 = vunpack.c.l.b16 %v3273
          %v3298 = vunpack.c.l.b16 %v3274
          %v3299 = vunpack.c.l.b16 %v3275
          %v3300 = vunpack.c.l.b16 %v3276
          %v3301 = vunpack.c.l.b16 %v3277
          %v3302 = vunpack.c.l.b16 %v3278
          %v3303 = vunpack.c.l.b16 %v3279
          %v3304 = vpack.c.b16 %v3293, %v3292
          %v3305 = vpack.c.b16 %v3295, %v3294
          %v3306 = vpack.c.b16 %v3297, %v3296
          %v3307 = vpack.c.b16 %v3299, %v3298
          %v3308 = vpack.c.b16 %v3301, %v3300
          %v3309 = vpack.c.b16 %v3303, %v3302
          %v3317 = vsel %vm300, %v3219, 0
          %v3320 = vsel %vm300, %v3222, 0
          %v3323 = vsel %vm300, %v3225, 0
          %v3326 = vsel %vm300, %v3228, 0
          %v3329 = vsel %vm300, %v3231, 0
          %v3332 = vsel %vm300, %v3234, 0
          %v3335 = vsel %vm300, %v3237, 0
          %v3338 = vsel %vm300, %v3240, 0
          %v3341 = vsel %vm300, %v3243, 0
          %v3344 = vsel %vm300, %v3246, 0
          %v3347 = vsel %vm300, %v3249, 0
          %v3350 = vsel %vm300, %v3252, 0
          %v3353 = vsel %vm300, %v3255, 0
          %v3356 = vsel %vm300, %v3258, 0
          %v3359 = vsel %vm300, %v3261, 0
          %v3362 = vsel %vm300, %v3264, 0
          %3364 = vmatprep.subr.bf16.mxu0 0
          %3365 = vmatpush1.bf16.msra.mxu0 %v3304
          %3366 = vmatprep.subr.bf16.mxu0 0
          %3367 = vmatpush1.bf16.msra.mxu0 %v3305
          %3368 = vmatprep.subr.bf16.mxu0 0
          %3369 = vmatpush1.bf16.msra.mxu0 %v3306
          %3370 = vmatprep.subr.bf16.mxu0 0
          %3371 = vmatpush1.bf16.msra.mxu0 %v3307
          %3372 = vmatprep.subr.bf16.mxu0 0
          %3373 = vmatpush1.bf16.msra.mxu0 %v3308
          %3374 = vmatprep.subr.bf16.mxu0 0
          %3375 = vmatpush1.bf16.msra.mxu0 %v3309
          %3376 = vmatprep.subr.bf16.mxu0 0
          %3377 = vmatpush1.bf16.msra.mxu0 0
          %3378 = vmatprep.subr.bf16.mxu0 0
          %3379 = vmatpush1.bf16.msra.mxu0 0
          %3380 = vmatprep.subr.bf16.mxu0 0
          %3381 = vmatpush1.bf16.msra.mxu0 0
          %3382 = vmatprep.subr.bf16.mxu0 0
          %3383 = vmatpush1.bf16.msra.mxu0 0
          %3384 = vmatprep.subr.bf16.mxu0 0
          %3385 = vmatpush1.bf16.msra.mxu0 0
          %3386 = vmatprep.subr.bf16.mxu0 0
          %3387 = vmatpush1.bf16.msra.mxu0 0
          %3388 = vmatprep.subr.bf16.mxu0 0
          %3389 = vmatpush1.bf16.msra.mxu0 0
          %3390 = vmatprep.subr.bf16.mxu0 0
          %3391 = vmatpush1.bf16.msra.mxu0 0
          %3392 = vmatprep.subr.bf16.mxu0 0
          %3393 = vmatpush1.bf16.msra.mxu0 0
          %3394 = vmatprep.subr.bf16.mxu0 0
          %3395 = vmatpush1.bf16.msra.mxu0 0
          %3396 = vmatprep.mubr.bf16.mxu0 0
          %3397 = vmatmul.mubr.bf16.gmra.mrb[0].mxu0 %v3317
          %v3398 = vpop.f32.mrb[0].mxu0
          %v3399 = vadd.f32 0.0, %v3398
          %v3400 = vpop.f32.mrb[0].mxu0
          %v3401 = vpop.f32.mrb[0].mxu0
          %v3402 = vadd.f32 0.0, %v3401
          %v3403 = vpop.f32.mrb[0].mxu0
          %3404 = vmatprep.mubr.bf16.mxu0 0
          %3405 = vmatmul.mubr.bf16.gmra.mrb[0].mxu0 %v3320
          %v3406 = vpop.f32.mrb[0].mxu0
          %v3407 = vadd.f32 0.0, %v3406
          %v3408 = vpop.f32.mrb[0].mxu0
          %v3409 = vpop.f32.mrb[0].mxu0
          %v3410 = vadd.f32 0.0, %v3409
          %v3411 = vpop.f32.mrb[0].mxu0
          %3412 = vmatprep.mubr.bf16.mxu0 0
          %3413 = vmatmul.mubr.bf16.gmra.mrb[0].mxu0 %v3323
          %v3414 = vpop.f32.mrb[0].mxu0
          %v3415 = vadd.f32 0.0, %v3414
          %v3416 = vpop.f32.mrb[0].mxu0
          %v3417 = vpop.f32.mrb[0].mxu0
          %v3418 = vadd.f32 0.0, %v3417
          %v3419 = vpop.f32.mrb[0].mxu0
          %3420 = vmatprep.mubr.bf16.mxu0 0
          %3421 = vmatmul.mubr.bf16.gmra.mrb[0].mxu0 %v3326
          %v3422 = vpop.f32.mrb[0].mxu0
          %v3423 = vadd.f32 0.0, %v3422
          %v3424 = vpop.f32.mrb[0].mxu0
          %v3425 = vpop.f32.mrb[0].mxu0
          %v3426 = vadd.f32 0.0, %v3425
          %v3427 = vpop.f32.mrb[0].mxu0
          %3428 = vmatprep.mubr.bf16.mxu0 0
          %3429 = vmatmul.mubr.bf16.gmra.mrb[0].mxu0 %v3329
          %v3430 = vpop.f32.mrb[0].mxu0
          %v3431 = vadd.f32 0.0, %v3430
          %v3432 = vpop.f32.mrb[0].mxu0
          %v3433 = vpop.f32.mrb[0].mxu0
          %v3434 = vadd.f32 0.0, %v3433
          %v3435 = vpop.f32.mrb[0].mxu0
          %3436 = vmatprep.mubr.bf16.mxu0 0
          %3437 = vmatmul.mubr.bf16.gmra.mrb[0].mxu0 %v3332
          %v3438 = vpop.f32.mrb[0].mxu0
          %v3439 = vadd.f32 0.0, %v3438
          %v3440 = vpop.f32.mrb[0].mxu0
          %v3441 = vpop.f32.mrb[0].mxu0
          %v3442 = vadd.f32 0.0, %v3441
          %v3443 = vpop.f32.mrb[0].mxu0
          %3444 = vmatprep.mubr.bf16.mxu0 0
          %3445 = vmatmul.mubr.bf16.gmra.mrb[0].mxu0 %v3335
          %v3446 = vpop.f32.mrb[0].mxu0
          %v3447 = vadd.f32 0.0, %v3446
          %v3448 = vpop.f32.mrb[0].mxu0
          %v3449 = vpop.f32.mrb[0].mxu0
          %v3450 = vadd.f32 0.0, %v3449
          %v3451 = vpop.f32.mrb[0].mxu0
          %3452 = vmatprep.mubr.bf16.mxu0 0
          %3453 = vmatmul.mubr.bf16.gmra.mrb[0].mxu0 %v3338
          %v3454 = vpop.f32.mrb[0].mxu0
          %v3455 = vadd.f32 0.0, %v3454
          %v3456 = vpop.f32.mrb[0].mxu0
          %v3457 = vpop.f32.mrb[0].mxu0
          %v3458 = vadd.f32 0.0, %v3457
          %v3459 = vpop.f32.mrb[0].mxu0
          %3460 = vmatprep.mubr.bf16.mxu0 0
          %3461 = vmatmul.mubr.bf16.gmra.mrb[0].mxu0 %v3341
          %v3462 = vpop.f32.mrb[0].mxu0
          %v3463 = vadd.f32 0.0, %v3462
          %v3464 = vpop.f32.mrb[0].mxu0
          %v3465 = vpop.f32.mrb[0].mxu0
          %v3466 = vadd.f32 0.0, %v3465
          %v3467 = vpop.f32.mrb[0].mxu0
          %3468 = vmatprep.mubr.bf16.mxu0 0
          %3469 = vmatmul.mubr.bf16.gmra.mrb[0].mxu0 %v3344
          %v3470 = vpop.f32.mrb[0].mxu0
          %v3471 = vadd.f32 0.0, %v3470
          %v3472 = vpop.f32.mrb[0].mxu0
          %v3473 = vpop.f32.mrb[0].mxu0
          %v3474 = vadd.f32 0.0, %v3473
          %v3475 = vpop.f32.mrb[0].mxu0
          %3476 = vmatprep.mubr.bf16.mxu0 0
          %3477 = vmatmul.mubr.bf16.gmra.mrb[0].mxu0 %v3347
          %v3478 = vpop.f32.mrb[0].mxu0
          %v3479 = vadd.f32 0.0, %v3478
          %v3480 = vpop.f32.mrb[0].mxu0
          %v3481 = vpop.f32.mrb[0].mxu0
          %v3482 = vadd.f32 0.0, %v3481
          %v3483 = vpop.f32.mrb[0].mxu0
          %3484 = vmatprep.mubr.bf16.mxu0 0
          %3485 = vmatmul.mubr.bf16.gmra.mrb[0].mxu0 %v3350
          %v3486 = vpop.f32.mrb[0].mxu0
          %v3487 = vadd.f32 0.0, %v3486
          %v3488 = vpop.f32.mrb[0].mxu0
          %v3489 = vpop.f32.mrb[0].mxu0
          %v3490 = vadd.f32 0.0, %v3489
          %v3491 = vpop.f32.mrb[0].mxu0
          %3492 = vmatprep.mubr.bf16.mxu0 0
          %3493 = vmatmul.mubr.bf16.gmra.mrb[0].mxu0 %v3353
          %v3494 = vpop.f32.mrb[0].mxu0
          %v3495 = vadd.f32 0.0, %v3494
          %v3496 = vpop.f32.mrb[0].mxu0
          %v3497 = vpop.f32.mrb[0].mxu0
          %v3498 = vadd.f32 0.0, %v3497
          %v3499 = vpop.f32.mrb[0].mxu0
          %3500 = vmatprep.mubr.bf16.mxu0 0
          %3501 = vmatmul.mubr.bf16.gmra.mrb[0].mxu0 %v3356
          %v3502 = vpop.f32.mrb[0].mxu0
          %v3503 = vadd.f32 0.0, %v3502
          %v3504 = vpop.f32.mrb[0].mxu0
          %v3505 = vpop.f32.mrb[0].mxu0
          %v3506 = vadd.f32 0.0, %v3505
          %v3507 = vpop.f32.mrb[0].mxu0
          %3508 = vmatprep.mubr.bf16.mxu0 0
          %3509 = vmatmul.mubr.bf16.gmra.mrb[0].mxu0 %v3359
          %v3510 = vpop.f32.mrb[0].mxu0
          %v3511 = vadd.f32 0.0, %v3510
          %v3512 = vpop.f32.mrb[0].mxu0
          %v3513 = vpop.f32.mrb[0].mxu0
          %v3514 = vadd.f32 0.0, %v3513
          %v3515 = vpop.f32.mrb[0].mxu0
          %3516 = vmatprep.mubr.bf16.mxu0 0
          %3517 = vmatmul.mubr.bf16.gmra.mrb[0].mxu0 %v3362
          %v3518 = vpop.f32.mrb[0].mxu0
          %v3519 = vadd.f32 0.0, %v3518
          %v3520 = vpop.f32.mrb[0].mxu0
          %v3521 = vpop.f32.mrb[0].mxu0
          %v3522 = vadd.f32 0.0, %v3521
          %v3523 = vpop.f32.mrb[0].mxu0
          %3524 = vdwg.mxu0
          %v3525 = vadd.f32 %v3120, %v3399
          %v3526 = vadd.f32 %v3121, %v3402
          %v3527 = vadd.f32 %v3122, %v3407
          %v3528 = vadd.f32 %v3123, %v3410
          %v3529 = vadd.f32 %v3124, %v3415
          %v3530 = vadd.f32 %v3125, %v3418
          %v3531 = vadd.f32 %v3126, %v3423
          %v3532 = vadd.f32 %v3127, %v3426
          %v3533 = vadd.f32 %v3128, %v3431
          %v3534 = vadd.f32 %v3129, %v3434
          %v3535 = vadd.f32 %v3130, %v3439
          %v3536 = vadd.f32 %v3131, %v3442
          %v3537 = vadd.f32 %v3132, %v3447
          %v3538 = vadd.f32 %v3133, %v3450
          %v3539 = vadd.f32 %v3134, %v3455
          %v3540 = vadd.f32 %v3135, %v3458
          %v3541 = vadd.f32 %v3136, %v3463
          %v3542 = vadd.f32 %v3137, %v3466
          %v3543 = vadd.f32 %v3138, %v3471
          %v3544 = vadd.f32 %v3139, %v3474
          %v3545 = vadd.f32 %v3140, %v3479
          %v3546 = vadd.f32 %v3141, %v3482
          %v3547 = vadd.f32 %v3142, %v3487
          %v3548 = vadd.f32 %v3143, %v3490
          %v3549 = vadd.f32 %v3144, %v3495
          %v3550 = vadd.f32 %v3145, %v3498
          %v3551 = vadd.f32 %v3146, %v3503
          %v3552 = vadd.f32 %v3147, %v3506
          %v3553 = vadd.f32 %v3148, %v3511
          %v3554 = vadd.f32 %v3149, %v3514
          %v3555 = vadd.f32 %v3150, %v3519
          %v3556 = vadd.f32 %v3151, %v3522
          %v3557 = vmax.f32 %v3525, 0.0
          %v3558 = vmax.f32 %v3526, 0.0
          %v3559 = vmax.f32 %v3527, 0.0
          %v3560 = vmax.f32 %v3528, 0.0
          %v3561 = vmax.f32 %v3529, 0.0
          %v3562 = vmax.f32 %v3530, 0.0
          %v3563 = vmax.f32 %v3531, 0.0
          %v3564 = vmax.f32 %v3532, 0.0
          %v3565 = vmax.f32 %v3533, 0.0
          %v3566 = vmax.f32 %v3534, 0.0
          %v3567 = vmax.f32 %v3535, 0.0
          %v3568 = vmax.f32 %v3536, 0.0
          %v3569 = vmax.f32 %v3537, 0.0
          %v3570 = vmax.f32 %v3538, 0.0
          %v3571 = vmax.f32 %v3539, 0.0
          %v3572 = vmax.f32 %v3540, 0.0
          %v3573 = vmax.f32 %v3541, 0.0
          %v3574 = vmax.f32 %v3542, 0.0
          %v3575 = vmax.f32 %v3543, 0.0
          %v3576 = vmax.f32 %v3544, 0.0
          %v3577 = vmax.f32 %v3545, 0.0
          %v3578 = vmax.f32 %v3546, 0.0
          %v3579 = vmax.f32 %v3547, 0.0
          %v3580 = vmax.f32 %v3548, 0.0
          %v3581 = vmax.f32 %v3549, 0.0
          %v3582 = vmax.f32 %v3550, 0.0
          %v3583 = vmax.f32 %v3551, 0.0
          %v3584 = vmax.f32 %v3552, 0.0
          %v3585 = vmax.f32 %v3553, 0.0
          %v3586 = vmax.f32 %v3554, 0.0
          %v3587 = vmax.f32 %v3555, 0.0
          %v3588 = vmax.f32 %v3556, 0.0
          %v3589 = vpack.c.bf16 %v3558, %v3557
          %v3590 = vpack.c.bf16 %v3560, %v3559
          %v3591 = vpack.c.bf16 %v3562, %v3561
          %v3592 = vpack.c.bf16 %v3564, %v3563
          %v3593 = vpack.c.bf16 %v3566, %v3565
          %v3594 = vpack.c.bf16 %v3568, %v3567
          %v3595 = vpack.c.bf16 %v3570, %v3569
          %v3596 = vpack.c.bf16 %v3572, %v3571
          %v3597 = vpack.c.bf16 %v3574, %v3573
          %v3598 = vpack.c.bf16 %v3576, %v3575
          %v3599 = vpack.c.bf16 %v3578, %v3577
          %v3600 = vpack.c.bf16 %v3580, %v3579
          %v3601 = vpack.c.bf16 %v3582, %v3581
          %v3602 = vpack.c.bf16 %v3584, %v3583
          %v3603 = vpack.c.bf16 %v3586, %v3585
          %v3604 = vpack.c.bf16 %v3588, %v3587
          %v3606 = vshrl.u32 %v3589, 16
          %v3608 = vrot.slane %v3606, 3
          %v3609 = vshll.u32 %v3589, 16
          %v3611 = vrot.slane %v3609, 4
          %v3612 = vor.u32 %v3608, %v3611
          %v3614 = vshrl.u32 %v3590, 16
          %v3616 = vrot.slane %v3614, 3
          %v3617 = vshll.u32 %v3590, 16
          %v3619 = vrot.slane %v3617, 4
          %v3620 = vor.u32 %v3616, %v3619
          %v3622 = vshrl.u32 %v3591, 16
          %v3624 = vrot.slane %v3622, 3
          %v3625 = vshll.u32 %v3591, 16
          %v3627 = vrot.slane %v3625, 4
          %v3628 = vor.u32 %v3624, %v3627
          %v3630 = vshrl.u32 %v3592, 16
          %v3632 = vrot.slane %v3630, 3
          %v3633 = vshll.u32 %v3592, 16
          %v3635 = vrot.slane %v3633, 4
          %v3636 = vor.u32 %v3632, %v3635
          %v3638 = vshrl.u32 %v3593, 16
          %v3640 = vrot.slane %v3638, 3
          %v3641 = vshll.u32 %v3593, 16
          %v3643 = vrot.slane %v3641, 4
          %v3644 = vor.u32 %v3640, %v3643
          %v3646 = vshrl.u32 %v3594, 16
          %v3648 = vrot.slane %v3646, 3
          %v3649 = vshll.u32 %v3594, 16
          %v3651 = vrot.slane %v3649, 4
          %v3652 = vor.u32 %v3648, %v3651
          %v3654 = vshrl.u32 %v3595, 16
          %v3656 = vrot.slane %v3654, 3
          %v3657 = vshll.u32 %v3595, 16
          %v3659 = vrot.slane %v3657, 4
          %v3660 = vor.u32 %v3656, %v3659
          %v3662 = vshrl.u32 %v3596, 16
          %v3664 = vrot.slane %v3662, 3
          %v3665 = vshll.u32 %v3596, 16
          %v3667 = vrot.slane %v3665, 4
          %v3668 = vor.u32 %v3664, %v3667
          %v3670 = vshrl.u32 %v3597, 16
          %v3672 = vrot.slane %v3670, 3
          %v3673 = vshll.u32 %v3597, 16
          %v3675 = vrot.slane %v3673, 4
          %v3676 = vor.u32 %v3672, %v3675
          %v3678 = vshrl.u32 %v3598, 16
          %v3680 = vrot.slane %v3678, 3
          %v3681 = vshll.u32 %v3598, 16
          %v3683 = vrot.slane %v3681, 4
          %v3684 = vor.u32 %v3680, %v3683
          %v3686 = vshrl.u32 %v3599, 16
          %v3688 = vrot.slane %v3686, 3
          %v3689 = vshll.u32 %v3599, 16
          %v3691 = vrot.slane %v3689, 4
          %v3692 = vor.u32 %v3688, %v3691
          %v3694 = vshrl.u32 %v3600, 16
          %v3696 = vrot.slane %v3694, 3
          %v3697 = vshll.u32 %v3600, 16
          %v3699 = vrot.slane %v3697, 4
          %v3700 = vor.u32 %v3696, %v3699
          %v3702 = vshrl.u32 %v3601, 16
          %v3704 = vrot.slane %v3702, 3
          %v3705 = vshll.u32 %v3601, 16
          %v3707 = vrot.slane %v3705, 4
          %v3708 = vor.u32 %v3704, %v3707
          %v3710 = vshrl.u32 %v3602, 16
          %v3712 = vrot.slane %v3710, 3
          %v3713 = vshll.u32 %v3602, 16
          %v3715 = vrot.slane %v3713, 4
          %v3716 = vor.u32 %v3712, %v3715
          %v3718 = vshrl.u32 %v3603, 16
          %v3720 = vrot.slane %v3718, 3
          %v3721 = vshll.u32 %v3603, 16
          %v3723 = vrot.slane %v3721, 4
          %v3724 = vor.u32 %v3720, %v3723
          %v3726 = vshrl.u32 %v3604, 16
          %v3728 = vrot.slane %v3726, 3
          %v3729 = vshll.u32 %v3604, 16
          %v3731 = vrot.slane %v3729, 4
          %v3732 = vor.u32 %v3728, %v3731
          %v3749 = vsel %vm1924, %v3612, %v2748
          %3750 = vst [vmem:[%s1921] sm:$0xf0] %v3749
          %v3751 = vld [vmem:[%s1921 + $0x8] sm:$0x1f]
          %v3752 = vsel %vm1929, %v3612, %v3751
          %3753 = vst [vmem:[%s1921 + $0x8] sm:$0x1f] %v3752
          %v3754 = vld [vmem:[%s1921 + $0x10] sm:$0xf0]
          %v3755 = vsel %vm1924, %v3620, %v3754
          %3756 = vst [vmem:[%s1921 + $0x10] sm:$0xf0] %v3755
          %v3757 = vld [vmem:[%s1921 + $0x18] sm:$0x1f]
          %v3758 = vsel %vm1929, %v3620, %v3757
          %3759 = vst [vmem:[%s1921 + $0x18] sm:$0x1f] %v3758
          %v3760 = vld [vmem:[%s1921 + $0x20] sm:$0xf0]
          %v3761 = vsel %vm1924, %v3628, %v3760
          %3762 = vst [vmem:[%s1921 + $0x20] sm:$0xf0] %v3761
          %v3763 = vld [vmem:[%s1921 + $0x28] sm:$0x1f]
          %v3764 = vsel %vm1929, %v3628, %v3763
          %3765 = vst [vmem:[%s1921 + $0x28] sm:$0x1f] %v3764
          %v3766 = vld [vmem:[%s1921 + $0x30] sm:$0xf0]
          %v3767 = vsel %vm1924, %v3636, %v3766
          %3768 = vst [vmem:[%s1921 + $0x30] sm:$0xf0] %v3767
          %v3769 = vld [vmem:[%s1921 + $0x38] sm:$0x1f]
          %v3770 = vsel %vm1929, %v3636, %v3769
          %3771 = vst [vmem:[%s1921 + $0x38] sm:$0x1f] %v3770
          %v3772 = vld [vmem:[%s1921 + $0x40] sm:$0xf0]
          %v3773 = vsel %vm1924, %v3644, %v3772
          %3774 = vst [vmem:[%s1921 + $0x40] sm:$0xf0] %v3773
          %v3775 = vld [vmem:[%s1921 + $0x48] sm:$0x1f]
          %v3776 = vsel %vm1929, %v3644, %v3775
          %3777 = vst [vmem:[%s1921 + $0x48] sm:$0x1f] %v3776
          %v3778 = vld [vmem:[%s1921 + $0x50] sm:$0xf0]
          %v3779 = vsel %vm1924, %v3652, %v3778
          %3780 = vst [vmem:[%s1921 + $0x50] sm:$0xf0] %v3779
          %v3781 = vld [vmem:[%s1921 + $0x58] sm:$0x1f]
          %v3782 = vsel %vm1929, %v3652, %v3781
          %3783 = vst [vmem:[%s1921 + $0x58] sm:$0x1f] %v3782
          %v3784 = vld [vmem:[%s1921 + $0x60] sm:$0xf0]
          %v3785 = vsel %vm1924, %v3660, %v3784
          %3786 = vst [vmem:[%s1921 + $0x60] sm:$0xf0] %v3785
          %v3787 = vld [vmem:[%s1921 + $0x68] sm:$0x1f]
          %v3788 = vsel %vm1929, %v3660, %v3787
          %3789 = vst [vmem:[%s1921 + $0x68] sm:$0x1f] %v3788
          %v3790 = vld [vmem:[%s1921 + $0x70] sm:$0xf0]
          %v3791 = vsel %vm1924, %v3668, %v3790
          %3792 = vst [vmem:[%s1921 + $0x70] sm:$0xf0] %v3791
          %v3793 = vld [vmem:[%s1921 + $0x78] sm:$0x1f]
          %v3794 = vsel %vm1929, %v3668, %v3793
          %3795 = vst [vmem:[%s1921 + $0x78] sm:$0x1f] %v3794
          %v3796 = vld [vmem:[%s1921 + $0x80] sm:$0xf0]
          %v3797 = vsel %vm1924, %v3676, %v3796
          %3798 = vst [vmem:[%s1921 + $0x80] sm:$0xf0] %v3797
          %v3799 = vld [vmem:[%s1921 + $0x88] sm:$0x1f]
          %v3800 = vsel %vm1929, %v3676, %v3799
          %3801 = vst [vmem:[%s1921 + $0x88] sm:$0x1f] %v3800
          %v3802 = vld [vmem:[%s1921 + $0x90] sm:$0xf0]
          %v3803 = vsel %vm1924, %v3684, %v3802
          %3804 = vst [vmem:[%s1921 + $0x90] sm:$0xf0] %v3803
          %v3805 = vld [vmem:[%s1921 + $0x98] sm:$0x1f]
          %v3806 = vsel %vm1929, %v3684, %v3805
          %3807 = vst [vmem:[%s1921 + $0x98] sm:$0x1f] %v3806
          %v3808 = vld [vmem:[%s1921 + $0xa0] sm:$0xf0]
          %v3809 = vsel %vm1924, %v3692, %v3808
          %3810 = vst [vmem:[%s1921 + $0xa0] sm:$0xf0] %v3809
          %v3811 = vld [vmem:[%s1921 + $0xa8] sm:$0x1f]
          %v3812 = vsel %vm1929, %v3692, %v3811
          %3813 = vst [vmem:[%s1921 + $0xa8] sm:$0x1f] %v3812
          %v3814 = vld [vmem:[%s1921 + $0xb0] sm:$0xf0]
          %v3815 = vsel %vm1924, %v3700, %v3814
          %3816 = vst [vmem:[%s1921 + $0xb0] sm:$0xf0] %v3815
          %v3817 = vld [vmem:[%s1921 + $0xb8] sm:$0x1f]
          %v3818 = vsel %vm1929, %v3700, %v3817
          %3819 = vst [vmem:[%s1921 + $0xb8] sm:$0x1f] %v3818
          %v3820 = vld [vmem:[%s1921 + $0xc0] sm:$0xf0]
          %v3821 = vsel %vm1924, %v3708, %v3820
          %3822 = vst [vmem:[%s1921 + $0xc0] sm:$0xf0] %v3821
          %v3823 = vld [vmem:[%s1921 + $0xc8] sm:$0x1f]
          %v3824 = vsel %vm1929, %v3708, %v3823
          %3825 = vst [vmem:[%s1921 + $0xc8] sm:$0x1f] %v3824
          %v3826 = vld [vmem:[%s1921 + $0xd0] sm:$0xf0]
          %v3827 = vsel %vm1924, %v3716, %v3826
          %3828 = vst [vmem:[%s1921 + $0xd0] sm:$0xf0] %v3827
          %v3829 = vld [vmem:[%s1921 + $0xd8] sm:$0x1f]
          %v3830 = vsel %vm1929, %v3716, %v3829
          %3831 = vst [vmem:[%s1921 + $0xd8] sm:$0x1f] %v3830
          %v3832 = vld [vmem:[%s1921 + $0xe0] sm:$0xf0]
          %v3833 = vsel %vm1924, %v3724, %v3832
          %3834 = vst [vmem:[%s1921 + $0xe0] sm:$0xf0] %v3833
          %v3835 = vld [vmem:[%s1921 + $0xe8] sm:$0x1f]
          %v3836 = vsel %vm1929, %v3724, %v3835
          %3837 = vst [vmem:[%s1921 + $0xe8] sm:$0x1f] %v3836
          %v3838 = vld [vmem:[%s1921 + $0xf0] sm:$0xf0]
          %v3839 = vsel %vm1924, %v3732, %v3838
          %3840 = vst [vmem:[%s1921 + $0xf0] sm:$0xf0] %v3839
          %v3841 = vld [vmem:[%s1921 + $0xf8] sm:$0x1f]
          %v3842 = vsel %vm1929, %v3732, %v3841
          %3843 = vst [vmem:[%s1921 + $0xf8] sm:$0x1f] %v3842
          %v3860 = vrot.slane %v3589, 4
          %v3861 = vrot.slane %v3590, 4
          %v3862 = vrot.slane %v3591, 4
          %v3863 = vrot.slane %v3592, 4
          %v3864 = vrot.slane %v3593, 4
          %v3865 = vrot.slane %v3594, 4
          %v3866 = vrot.slane %v3595, 4
          %v3867 = vrot.slane %v3596, 4
          %v3868 = vrot.slane %v3597, 4
          %v3869 = vrot.slane %v3598, 4
          %v3870 = vrot.slane %v3599, 4
          %v3871 = vrot.slane %v3600, 4
          %v3872 = vrot.slane %v3601, 4
          %v3873 = vrot.slane %v3602, 4
          %v3874 = vrot.slane %v3603, 4
          %v3875 = vrot.slane %v3604, 4
          %3876 = vrot.lane.b32.xlu0 %v3860, 32
          %v3877 = vpop.permute.xlu0 %3876
          %3878 = vrot.lane.b32.xlu0 %v3861, 32
          %v3879 = vpop.permute.xlu0 %3878
          %3880 = vrot.lane.b32.xlu0 %v3862, 32
          %v3881 = vpop.permute.xlu0 %3880
          %3882 = vrot.lane.b32.xlu0 %v3863, 32
          %v3883 = vpop.permute.xlu0 %3882
          %3884 = vrot.lane.b32.xlu0 %v3864, 32
          %v3885 = vpop.permute.xlu0 %3884
          %3886 = vrot.lane.b32.xlu0 %v3865, 32
          %v3887 = vpop.permute.xlu0 %3886
          %3888 = vrot.lane.b32.xlu0 %v3866, 32
          %v3889 = vpop.permute.xlu0 %3888
          %3890 = vrot.lane.b32.xlu0 %v3867, 32
          %v3891 = vpop.permute.xlu0 %3890
          %3892 = vrot.lane.b32.xlu0 %v3868, 32
          %v3893 = vpop.permute.xlu0 %3892
          %3894 = vrot.lane.b32.xlu0 %v3869, 32
          %v3895 = vpop.permute.xlu0 %3894
          %3896 = vrot.lane.b32.xlu0 %v3870, 32
          %v3897 = vpop.permute.xlu0 %3896
          %3898 = vrot.lane.b32.xlu0 %v3871, 32
          %v3899 = vpop.permute.xlu0 %3898
          %3900 = vrot.lane.b32.xlu0 %v3872, 32
          %v3901 = vpop.permute.xlu0 %3900
          %3902 = vrot.lane.b32.xlu0 %v3873, 32
          %v3903 = vpop.permute.xlu0 %3902
          %3904 = vrot.lane.b32.xlu0 %v3874, 32
          %v3905 = vpop.permute.xlu0 %3904
          %3906 = vrot.lane.b32.xlu0 %v3875, 32
          %v3907 = vpop.permute.xlu0 %3906
          %3924 = vst.msk [vmem:[%s1921] sm:$0xf0] %vm2103, %v3877
          %3925 = vst.msk [vmem:[%s1921 + $0x8] sm:$0xf] %vm2105, %v3877
          %3926 = vst.msk [vmem:[%s1921 + $0x10] sm:$0xf0] %vm2103, %v3879
          %3927 = vst.msk [vmem:[%s1921 + $0x18] sm:$0xf] %vm2105, %v3879
          %3928 = vst.msk [vmem:[%s1921 + $0x20] sm:$0xf0] %vm2103, %v3881
          %3929 = vst.msk [vmem:[%s1921 + $0x28] sm:$0xf] %vm2105, %v3881
          %3930 = vst.msk [vmem:[%s1921 + $0x30] sm:$0xf0] %vm2103, %v3883
          %3931 = vst.msk [vmem:[%s1921 + $0x38] sm:$0xf] %vm2105, %v3883
          %3932 = vst.msk [vmem:[%s1921 + $0x40] sm:$0xf0] %vm2103, %v3885
          %3933 = vst.msk [vmem:[%s1921 + $0x48] sm:$0xf] %vm2105, %v3885
          %3934 = vst.msk [vmem:[%s1921 + $0x50] sm:$0xf0] %vm2103, %v3887
          %3935 = vst.msk [vmem:[%s1921 + $0x58] sm:$0xf] %vm2105, %v3887
          %3936 = vst.msk [vmem:[%s1921 + $0x60] sm:$0xf0] %vm2103, %v3889
          %3937 = vst.msk [vmem:[%s1921 + $0x68] sm:$0xf] %vm2105, %v3889
          %3938 = vst.msk [vmem:[%s1921 + $0x70] sm:$0xf0] %vm2103, %v3891
          %3939 = vst.msk [vmem:[%s1921 + $0x78] sm:$0xf] %vm2105, %v3891
          %3940 = vst.msk [vmem:[%s1921 + $0x80] sm:$0xf0] %vm2103, %v3893
          %3941 = vst.msk [vmem:[%s1921 + $0x88] sm:$0xf] %vm2105, %v3893
          %3942 = vst.msk [vmem:[%s1921 + $0x90] sm:$0xf0] %vm2103, %v3895
          %3943 = vst.msk [vmem:[%s1921 + $0x98] sm:$0xf] %vm2105, %v3895
          %3944 = vst.msk [vmem:[%s1921 + $0xa0] sm:$0xf0] %vm2103, %v3897
          %3945 = vst.msk [vmem:[%s1921 + $0xa8] sm:$0xf] %vm2105, %v3897
          %3946 = vst.msk [vmem:[%s1921 + $0xb0] sm:$0xf0] %vm2103, %v3899
          %3947 = vst.msk [vmem:[%s1921 + $0xb8] sm:$0xf] %vm2105, %v3899
          %3948 = vst.msk [vmem:[%s1921 + $0xc0] sm:$0xf0] %vm2103, %v3901
          %3949 = vst.msk [vmem:[%s1921 + $0xc8] sm:$0xf] %vm2105, %v3901
          %3950 = vst.msk [vmem:[%s1921 + $0xd0] sm:$0xf0] %vm2103, %v3903
          %3951 = vst.msk [vmem:[%s1921 + $0xd8] sm:$0xf] %vm2105, %v3903
          %3952 = vst.msk [vmem:[%s1921 + $0xe0] sm:$0xf0] %vm2103, %v3905
          %3953 = vst.msk [vmem:[%s1921 + $0xe8] sm:$0xf] %vm2105, %v3905
          %3954 = vst.msk [vmem:[%s1921 + $0xf0] sm:$0xf0] %vm2103, %v3907
          %3955 = vst.msk [vmem:[%s1921 + $0xf8] sm:$0xf] %vm2105, %v3907
          %v3956 = vrot.slane %v3606, 4
          %v3957 = vrot.slane %v3609, 5
          %v3958 = vor.u32 %v3956, %v3957
          %v3959 = vrot.slane %v3614, 4
          %v3960 = vrot.slane %v3617, 5
          %v3961 = vor.u32 %v3959, %v3960
          %v3962 = vrot.slane %v3622, 4
          %v3963 = vrot.slane %v3625, 5
          %v3964 = vor.u32 %v3962, %v3963
          %v3965 = vrot.slane %v3630, 4
          %v3966 = vrot.slane %v3633, 5
          %v3967 = vor.u32 %v3965, %v3966
          %v3968 = vrot.slane %v3638, 4
          %v3969 = vrot.slane %v3641, 5
          %v3970 = vor.u32 %v3968, %v3969
          %v3971 = vrot.slane %v3646, 4
          %v3972 = vrot.slane %v3649, 5
          %v3973 = vor.u32 %v3971, %v3972
          %v3974 = vrot.slane %v3654, 4
          %v3975 = vrot.slane %v3657, 5
          %v3976 = vor.u32 %v3974, %v3975
          %v3977 = vrot.slane %v3662, 4
          %v3978 = vrot.slane %v3665, 5
          %v3979 = vor.u32 %v3977, %v3978
          %v3980 = vrot.slane %v3670, 4
          %v3981 = vrot.slane %v3673, 5
          %v3982 = vor.u32 %v3980, %v3981
          %v3983 = vrot.slane %v3678, 4
          %v3984 = vrot.slane %v3681, 5
          %v3985 = vor.u32 %v3983, %v3984
          %v3986 = vrot.slane %v3686, 4
          %v3987 = vrot.slane %v3689, 5
          %v3988 = vor.u32 %v3986, %v3987
          %v3989 = vrot.slane %v3694, 4
          %v3990 = vrot.slane %v3697, 5
          %v3991 = vor.u32 %v3989, %v3990
          %v3992 = vrot.slane %v3702, 4
          %v3993 = vrot.slane %v3705, 5
          %v3994 = vor.u32 %v3992, %v3993
          %v3995 = vrot.slane %v3710, 4
          %v3996 = vrot.slane %v3713, 5
          %v3997 = vor.u32 %v3995, %v3996
          %v3998 = vrot.slane %v3718, 4
          %v3999 = vrot.slane %v3721, 5
          %v4000 = vor.u32 %v3998, %v3999
          %v4001 = vrot.slane %v3726, 4
          %v4002 = vrot.slane %v3729, 5
          %v4003 = vor.u32 %v4001, %v4002
          %4004 = vrot.lane.b32.xlu0 %v3958, 64
          %v4005 = vpop.permute.xlu0 %4004
          %4006 = vrot.lane.b32.xlu0 %v3961, 64
          %v4007 = vpop.permute.xlu0 %4006
          %4008 = vrot.lane.b32.xlu0 %v3964, 64
          %v4009 = vpop.permute.xlu0 %4008
          %4010 = vrot.lane.b32.xlu0 %v3967, 64
          %v4011 = vpop.permute.xlu0 %4010
          %4012 = vrot.lane.b32.xlu0 %v3970, 64
          %v4013 = vpop.permute.xlu0 %4012
          %4014 = vrot.lane.b32.xlu0 %v3973, 64
          %v4015 = vpop.permute.xlu0 %4014
          %4016 = vrot.lane.b32.xlu0 %v3976, 64
          %v4017 = vpop.permute.xlu0 %4016
          %4018 = vrot.lane.b32.xlu0 %v3979, 64
          %v4019 = vpop.permute.xlu0 %4018
          %4020 = vrot.lane.b32.xlu0 %v3982, 64
          %v4021 = vpop.permute.xlu0 %4020
          %4022 = vrot.lane.b32.xlu0 %v3985, 64
          %v4023 = vpop.permute.xlu0 %4022
          %4024 = vrot.lane.b32.xlu0 %v3988, 64
          %v4025 = vpop.permute.xlu0 %4024
          %4026 = vrot.lane.b32.xlu0 %v3991, 64
          %v4027 = vpop.permute.xlu0 %4026
          %4028 = vrot.lane.b32.xlu0 %v3994, 64
          %v4029 = vpop.permute.xlu0 %4028
          %4030 = vrot.lane.b32.xlu0 %v3997, 64
          %v4031 = vpop.permute.xlu0 %4030
          %4032 = vrot.lane.b32.xlu0 %v4000, 64
          %v4033 = vpop.permute.xlu0 %4032
          %4034 = vrot.lane.b32.xlu0 %v4003, 64
          %v4035 = vpop.permute.xlu0 %4034
          %v4052 = vld [vmem:[%s1921] sm:$0xf8]
          %v4053 = vsel %vm2234, %v4005, %v4052
          %4054 = vst [vmem:[%s1921] sm:$0xf8] %v4053
          %v4055 = vld [vmem:[%s1921 + $0x8] sm:$0xf]
          %v4056 = vsel %vm2240, %v4005, %v4055
          %4057 = vst [vmem:[%s1921 + $0x8] sm:$0xf] %v4056
          %v4058 = vld [vmem:[%s1921 + $0x10] sm:$0xf8]
          %v4059 = vsel %vm2234, %v4007, %v4058
          %4060 = vst [vmem:[%s1921 + $0x10] sm:$0xf8] %v4059
          %v4061 = vld [vmem:[%s1921 + $0x18] sm:$0xf]
          %v4062 = vsel %vm2240, %v4007, %v4061
          %4063 = vst [vmem:[%s1921 + $0x18] sm:$0xf] %v4062
          %v4064 = vld [vmem:[%s1921 + $0x20] sm:$0xf8]
          %v4065 = vsel %vm2234, %v4009, %v4064
          %4066 = vst [vmem:[%s1921 + $0x20] sm:$0xf8] %v4065
          %v4067 = vld [vmem:[%s1921 + $0x28] sm:$0xf]
          %v4068 = vsel %vm2240, %v4009, %v4067
          %4069 = vst [vmem:[%s1921 + $0x28] sm:$0xf] %v4068
          %v4070 = vld [vmem:[%s1921 + $0x30] sm:$0xf8]
          %v4071 = vsel %vm2234, %v4011, %v4070
          %4072 = vst [vmem:[%s1921 + $0x30] sm:$0xf8] %v4071
          %v4073 = vld [vmem:[%s1921 + $0x38] sm:$0xf]
          %v4074 = vsel %vm2240, %v4011, %v4073
          %4075 = vst [vmem:[%s1921 + $0x38] sm:$0xf] %v4074
          %v4076 = vld [vmem:[%s1921 + $0x40] sm:$0xf8]
          %v4077 = vsel %vm2234, %v4013, %v4076
          %4078 = vst [vmem:[%s1921 + $0x40] sm:$0xf8] %v4077
          %v4079 = vld [vmem:[%s1921 + $0x48] sm:$0xf]
          %v4080 = vsel %vm2240, %v4013, %v4079
          %4081 = vst [vmem:[%s1921 + $0x48] sm:$0xf] %v4080
          %v4082 = vld [vmem:[%s1921 + $0x50] sm:$0xf8]
          %v4083 = vsel %vm2234, %v4015, %v4082
          %4084 = vst [vmem:[%s1921 + $0x50] sm:$0xf8] %v4083
          %v4085 = vld [vmem:[%s1921 + $0x58] sm:$0xf]
          %v4086 = vsel %vm2240, %v4015, %v4085
          %4087 = vst [vmem:[%s1921 + $0x58] sm:$0xf] %v4086
          %v4088 = vld [vmem:[%s1921 + $0x60] sm:$0xf8]
          %v4089 = vsel %vm2234, %v4017, %v4088
          %4090 = vst [vmem:[%s1921 + $0x60] sm:$0xf8] %v4089
          %v4091 = vld [vmem:[%s1921 + $0x68] sm:$0xf]
          %v4092 = vsel %vm2240, %v4017, %v4091
          %4093 = vst [vmem:[%s1921 + $0x68] sm:$0xf] %v4092
          %v4094 = vld [vmem:[%s1921 + $0x70] sm:$0xf8]
          %v4095 = vsel %vm2234, %v4019, %v4094
          %4096 = vst [vmem:[%s1921 + $0x70] sm:$0xf8] %v4095
          %v4097 = vld [vmem:[%s1921 + $0x78] sm:$0xf]
          %v4098 = vsel %vm2240, %v4019, %v4097
          %4099 = vst [vmem:[%s1921 + $0x78] sm:$0xf] %v4098
          %v4100 = vld [vmem:[%s1921 + $0x80] sm:$0xf8]
          %v4101 = vsel %vm2234, %v4021, %v4100
          %4102 = vst [vmem:[%s1921 + $0x80] sm:$0xf8] %v4101
          %v4103 = vld [vmem:[%s1921 + $0x88] sm:$0xf]
          %v4104 = vsel %vm2240, %v4021, %v4103
          %4105 = vst [vmem:[%s1921 + $0x88] sm:$0xf] %v4104
          %v4106 = vld [vmem:[%s1921 + $0x90] sm:$0xf8]
          %v4107 = vsel %vm2234, %v4023, %v4106
          %4108 = vst [vmem:[%s1921 + $0x90] sm:$0xf8] %v4107
          %v4109 = vld [vmem:[%s1921 + $0x98] sm:$0xf]
          %v4110 = vsel %vm2240, %v4023, %v4109
          %4111 = vst [vmem:[%s1921 + $0x98] sm:$0xf] %v4110
          %v4112 = vld [vmem:[%s1921 + $0xa0] sm:$0xf8]
          %v4113 = vsel %vm2234, %v4025, %v4112
          %4114 = vst [vmem:[%s1921 + $0xa0] sm:$0xf8] %v4113
          %v4115 = vld [vmem:[%s1921 + $0xa8] sm:$0xf]
          %v4116 = vsel %vm2240, %v4025, %v4115
          %4117 = vst [vmem:[%s1921 + $0xa8] sm:$0xf] %v4116
          %v4118 = vld [vmem:[%s1921 + $0xb0] sm:$0xf8]
          %v4119 = vsel %vm2234, %v4027, %v4118
          %4120 = vst [vmem:[%s1921 + $0xb0] sm:$0xf8] %v4119
          %v4121 = vld [vmem:[%s1921 + $0xb8] sm:$0xf]
          %v4122 = vsel %vm2240, %v4027, %v4121
          %4123 = vst [vmem:[%s1921 + $0xb8] sm:$0xf] %v4122
          %v4124 = vld [vmem:[%s1921 + $0xc0] sm:$0xf8]
          %v4125 = vsel %vm2234, %v4029, %v4124
          %4126 = vst [vmem:[%s1921 + $0xc0] sm:$0xf8] %v4125
          %v4127 = vld [vmem:[%s1921 + $0xc8] sm:$0xf]
          %v4128 = vsel %vm2240, %v4029, %v4127
          %4129 = vst [vmem:[%s1921 + $0xc8] sm:$0xf] %v4128
          %v4130 = vld [vmem:[%s1921 + $0xd0] sm:$0xf8]
          %v4131 = vsel %vm2234, %v4031, %v4130
          %4132 = vst [vmem:[%s1921 + $0xd0] sm:$0xf8] %v4131
          %v4133 = vld [vmem:[%s1921 + $0xd8] sm:$0xf]
          %v4134 = vsel %vm2240, %v4031, %v4133
          %4135 = vst [vmem:[%s1921 + $0xd8] sm:$0xf] %v4134
          %v4136 = vld [vmem:[%s1921 + $0xe0] sm:$0xf8]
          %v4137 = vsel %vm2234, %v4033, %v4136
          %4138 = vst [vmem:[%s1921 + $0xe0] sm:$0xf8] %v4137
          %v4139 = vld [vmem:[%s1921 + $0xe8] sm:$0xf]
          %v4140 = vsel %vm2240, %v4033, %v4139
          %4141 = vst [vmem:[%s1921 + $0xe8] sm:$0xf] %v4140
          %v4142 = vld [vmem:[%s1921 + $0xf0] sm:$0xf8]
          %v4143 = vsel %vm2234, %v4035, %v4142
          %4144 = vst [vmem:[%s1921 + $0xf0] sm:$0xf8] %v4143
          %v4145 = vld [vmem:[%s1921 + $0xf8] sm:$0xf]
          %v4146 = vsel %vm2240, %v4035, %v4145
          %4147 = vst [vmem:[%s1921 + $0xf8] sm:$0xf] %v4146
          %v4148 = vld [vmem:[#allocation2] sm:$0xff]
          %v4149 = vld [vmem:[#allocation2 + $0x8] sm:$0xff]
          %v4150 = vld [vmem:[#allocation2 + $0x10] sm:$0xff]
          %v4151 = vld [vmem:[#allocation2 + $0x18] sm:$0xff]
          %v4152 = vld [vmem:[#allocation2 + $0x20] sm:$0xff]
          %v4153 = vld [vmem:[#allocation2 + $0x28] sm:$0xff]
          %v4154 = vld [vmem:[#allocation2 + $0x30] sm:$0xff]
          %v4155 = vld [vmem:[#allocation2 + $0x38] sm:$0xff]
          %v4156 = vld [vmem:[#allocation2 + $0x40] sm:$0xff]
          %v4157 = vld [vmem:[#allocation2 + $0x48] sm:$0xff]
          %v4158 = vld [vmem:[#allocation2 + $0x50] sm:$0xff]
          %v4159 = vld [vmem:[#allocation2 + $0x58] sm:$0xff]
          %v4160 = vld [vmem:[#allocation2 + $0x60] sm:$0xff]
          %v4161 = vld [vmem:[#allocation2 + $0x68] sm:$0xff]
          %v4162 = vld [vmem:[#allocation2 + $0x70] sm:$0xff]
          %v4163 = vld [vmem:[#allocation2 + $0x78] sm:$0xff]
          %v4164 = vld [vmem:[#allocation2 + $0x80] sm:$0xff]
          %v4165 = vld [vmem:[#allocation2 + $0x88] sm:$0xff]
          %v4166 = vld [vmem:[#allocation2 + $0x90] sm:$0xff]
          %v4167 = vld [vmem:[#allocation2 + $0x98] sm:$0xff]
          %v4168 = vld [vmem:[#allocation2 + $0xa0] sm:$0xff]
          %v4169 = vld [vmem:[#allocation2 + $0xa8] sm:$0xff]
          %v4170 = vld [vmem:[#allocation2 + $0xb0] sm:$0xff]
          %v4171 = vld [vmem:[#allocation2 + $0xb8] sm:$0xff]
          %v4172 = vld [vmem:[#allocation2 + $0xc0] sm:$0xff]
          %v4173 = vld [vmem:[#allocation2 + $0xc8] sm:$0xff]
          %v4174 = vld [vmem:[#allocation2 + $0xd0] sm:$0xff]
          %v4175 = vld [vmem:[#allocation2 + $0xd8] sm:$0xff]
          %v4176 = vld [vmem:[#allocation2 + $0xe0] sm:$0xff]
          %v4177 = vld [vmem:[#allocation2 + $0xe8] sm:$0xff]
          %v4178 = vld [vmem:[#allocation2 + $0xf0] sm:$0xff]
          %v4179 = vld [vmem:[#allocation2 + $0xf8] sm:$0xff]
          %s4180 = sadd.s32 1, %s2334
          %s4181 = scalar_lea.vmem [#allocation12], %s4180
          %v4182 = vld [vmem:[%s4181] sm:$0x1]
          %v4184 = vlaneseq
          %v4185 = vshrl.u32 %v4184, 7
          %v4186 = vsub.s32 0, %v4185
          %v4187 = vrot.slane %v4182, %v4186
          %v4189 = vadd.f32 %v4148, %v4187
          %v4190 = vadd.f32 %v4149, %v4187
          %v4191 = vadd.f32 %v4150, %v4187
          %v4192 = vadd.f32 %v4151, %v4187
          %v4193 = vadd.f32 %v4152, %v4187
          %v4194 = vadd.f32 %v4153, %v4187
          %v4195 = vadd.f32 %v4154, %v4187
          %v4196 = vadd.f32 %v4155, %v4187
          %v4197 = vadd.f32 %v4156, %v4187
          %v4198 = vadd.f32 %v4157, %v4187
          %v4199 = vadd.f32 %v4158, %v4187
          %v4200 = vadd.f32 %v4159, %v4187
          %v4201 = vadd.f32 %v4160, %v4187
          %v4202 = vadd.f32 %v4161, %v4187
          %v4203 = vadd.f32 %v4162, %v4187
          %v4204 = vadd.f32 %v4163, %v4187
          %v4205 = vadd.f32 %v4164, %v4187
          %v4206 = vadd.f32 %v4165, %v4187
          %v4207 = vadd.f32 %v4166, %v4187
          %v4208 = vadd.f32 %v4167, %v4187
          %v4209 = vadd.f32 %v4168, %v4187
          %v4210 = vadd.f32 %v4169, %v4187
          %v4211 = vadd.f32 %v4170, %v4187
          %v4212 = vadd.f32 %v4171, %v4187
          %v4213 = vadd.f32 %v4172, %v4187
          %v4214 = vadd.f32 %v4173, %v4187
          %v4215 = vadd.f32 %v4174, %v4187
          %v4216 = vadd.f32 %v4175, %v4187
          %v4217 = vadd.f32 %v4176, %v4187
          %v4218 = vadd.f32 %v4177, %v4187
          %v4219 = vadd.f32 %v4178, %v4187
          %v4220 = vadd.f32 %v4179, %v4187
          %v4221 = vld [vmem:[#allocation3] sm:$0xf0]
          %v4222 = vld [vmem:[#allocation3 + $0x8] sm:$0xf]
          %v4223 = vld [vmem:[#allocation3 + $0x10] sm:$0xf0]
          %v4224 = vld [vmem:[#allocation3 + $0x18] sm:$0xf]
          %v4225 = vld [vmem:[#allocation3 + $0x20] sm:$0xf0]
          %v4226 = vld [vmem:[#allocation3 + $0x28] sm:$0xf]
          %v4227 = vld [vmem:[#allocation3 + $0x30] sm:$0xf0]
          %v4228 = vld [vmem:[#allocation3 + $0x38] sm:$0xf]
          %v4229 = vld [vmem:[#allocation3 + $0x40] sm:$0xf0]
          %v4230 = vld [vmem:[#allocation3 + $0x48] sm:$0xf]
          %v4231 = vld [vmem:[#allocation3 + $0x50] sm:$0xf0]
          %v4232 = vld [vmem:[#allocation3 + $0x58] sm:$0xf]
          %v4233 = vld [vmem:[#allocation3 + $0x60] sm:$0xf0]
          %v4234 = vld [vmem:[#allocation3 + $0x68] sm:$0xf]
          %v4235 = vld [vmem:[#allocation3 + $0x70] sm:$0xf0]
          %v4236 = vld [vmem:[#allocation3 + $0x78] sm:$0xf]
          %v4237 = vld [vmem:[#allocation3 + $0x80] sm:$0xf0]
          %v4238 = vld [vmem:[#allocation3 + $0x88] sm:$0xf]
          %v4239 = vld [vmem:[#allocation3 + $0x90] sm:$0xf0]
          %v4240 = vld [vmem:[#allocation3 + $0x98] sm:$0xf]
          %v4241 = vld [vmem:[#allocation3 + $0xa0] sm:$0xf0]
          %v4242 = vld [vmem:[#allocation3 + $0xa8] sm:$0xf]
          %v4243 = vld [vmem:[#allocation3 + $0xb0] sm:$0xf0]
          %v4244 = vld [vmem:[#allocation3 + $0xb8] sm:$0xf]
          %v4245 = vld [vmem:[#allocation3 + $0xc0] sm:$0xf0]
          %v4246 = vld [vmem:[#allocation3 + $0xc8] sm:$0xf]
          %v4247 = vld [vmem:[#allocation3 + $0xd0] sm:$0xf0]
          %v4248 = vld [vmem:[#allocation3 + $0xd8] sm:$0xf]
          %v4249 = vld [vmem:[#allocation3 + $0xe0] sm:$0xf0]
          %v4250 = vld [vmem:[#allocation3 + $0xe8] sm:$0xf]
          %v4251 = vld [vmem:[#allocation3 + $0xf0] sm:$0xf0]
          %v4252 = vld [vmem:[#allocation3 + $0xf8] sm:$0xf]
          %v4285 = vrot.slane %v4221, 4
          %v4286 = vrot.slane %v4222, 4
          %v4287 = vsel %vm2407, %v4285, %v4286
          %v4288 = vrot.slane %v4223, 4
          %v4289 = vrot.slane %v4224, 4
          %v4290 = vsel %vm2407, %v4288, %v4289
          %v4291 = vrot.slane %v4225, 4
          %v4292 = vrot.slane %v4226, 4
          %v4293 = vsel %vm2407, %v4291, %v4292
          %v4294 = vrot.slane %v4227, 4
          %v4295 = vrot.slane %v4228, 4
          %v4296 = vsel %vm2407, %v4294, %v4295
          %v4297 = vrot.slane %v4229, 4
          %v4298 = vrot.slane %v4230, 4
          %v4299 = vsel %vm2407, %v4297, %v4298
          %v4300 = vrot.slane %v4231, 4
          %v4301 = vrot.slane %v4232, 4
          %v4302 = vsel %vm2407, %v4300, %v4301
          %v4303 = vrot.slane %v4233, 4
          %v4304 = vrot.slane %v4234, 4
          %v4305 = vsel %vm2407, %v4303, %v4304
          %v4306 = vrot.slane %v4235, 4
          %v4307 = vrot.slane %v4236, 4
          %v4308 = vsel %vm2407, %v4306, %v4307
          %v4309 = vrot.slane %v4237, 4
          %v4310 = vrot.slane %v4238, 4
          %v4311 = vsel %vm2407, %v4309, %v4310
          %v4312 = vrot.slane %v4239, 4
          %v4313 = vrot.slane %v4240, 4
          %v4314 = vsel %vm2407, %v4312, %v4313
          %v4315 = vrot.slane %v4241, 4
          %v4316 = vrot.slane %v4242, 4
          %v4317 = vsel %vm2407, %v4315, %v4316
          %v4318 = vrot.slane %v4243, 4
          %v4319 = vrot.slane %v4244, 4
          %v4320 = vsel %vm2407, %v4318, %v4319
          %v4321 = vrot.slane %v4245, 4
          %v4322 = vrot.slane %v4246, 4
          %v4323 = vsel %vm2407, %v4321, %v4322
          %v4324 = vrot.slane %v4247, 4
          %v4325 = vrot.slane %v4248, 4
          %v4326 = vsel %vm2407, %v4324, %v4325
          %v4327 = vrot.slane %v4249, 4
          %v4328 = vrot.slane %v4250, 4
          %v4329 = vsel %vm2407, %v4327, %v4328
          %v4330 = vrot.slane %v4251, 4
          %v4331 = vrot.slane %v4252, 4
          %v4332 = vsel %vm2407, %v4330, %v4331
          %s4333 = sadd.s32 36, %s2456
          %s4334 = smul.addr %s4333, 4
          %s4335 = scalar_lea.vmem [#allocation10], %s4334
          %v4336 = vld [vmem:[%s4335] sm:$0xf]
          %v4337 = vld [vmem:[%s4335 + $0x4] sm:$0xf]
          %v4338 = vld [vmem:[%s4335 + $0x8] sm:$0xf]
          %v4339 = vld [vmem:[%s4335 + $0xc] sm:$0xf]
          %v4340 = vld [vmem:[%s4335 + $0x10] sm:$0xf]
          %v4341 = vld [vmem:[%s4335 + $0x14] sm:$0xf]
          %v4342 = vld [vmem:[%s4335 + $0x18] sm:$0xf]
          %v4343 = vld [vmem:[%s4335 + $0x1c] sm:$0xf]
          %v4344 = vld [vmem:[%s4335 + $0x20] sm:$0xf]
          %v4345 = vld [vmem:[%s4335 + $0x24] sm:$0xf]
          %v4346 = vld [vmem:[%s4335 + $0x28] sm:$0xf]
          %v4347 = vld [vmem:[%s4335 + $0x2c] sm:$0xf]
          %v4360 = vunpack.c.l.b16 %v4336
          %v4361 = vunpack.c.l.b16 %v4337
          %v4362 = vunpack.c.l.b16 %v4338
          %v4363 = vunpack.c.l.b16 %v4339
          %v4364 = vunpack.c.l.b16 %v4340
          %v4365 = vunpack.c.l.b16 %v4341
          %v4366 = vunpack.c.l.b16 %v4342
          %v4367 = vunpack.c.l.b16 %v4343
          %v4368 = vunpack.c.l.b16 %v4344
          %v4369 = vunpack.c.l.b16 %v4345
          %v4370 = vunpack.c.l.b16 %v4346
          %v4371 = vunpack.c.l.b16 %v4347
          %v4372 = vpack.c.b16 %v4361, %v4360
          %v4373 = vpack.c.b16 %v4363, %v4362
          %v4374 = vpack.c.b16 %v4365, %v4364
          %v4375 = vpack.c.b16 %v4367, %v4366
          %v4376 = vpack.c.b16 %v4369, %v4368
          %v4377 = vpack.c.b16 %v4371, %v4370
          %v4385 = vsel %vm300, %v4287, 0
          %v4388 = vsel %vm300, %v4290, 0
          %v4391 = vsel %vm300, %v4293, 0
          %v4394 = vsel %vm300, %v4296, 0
          %v4397 = vsel %vm300, %v4299, 0
          %v4400 = vsel %vm300, %v4302, 0
          %v4403 = vsel %vm300, %v4305, 0
          %v4406 = vsel %vm300, %v4308, 0
          %v4409 = vsel %vm300, %v4311, 0
          %v4412 = vsel %vm300, %v4314, 0
          %v4415 = vsel %vm300, %v4317, 0
          %v4418 = vsel %vm300, %v4320, 0
          %v4421 = vsel %vm300, %v4323, 0
          %v4424 = vsel %vm300, %v4326, 0
          %v4427 = vsel %vm300, %v4329, 0
          %v4430 = vsel %vm300, %v4332, 0
          %4432 = vmatprep.subr.bf16.mxu0 0
          %4433 = vmatpush1.bf16.msra.mxu0 %v4372
          %4434 = vmatprep.subr.bf16.mxu0 0
          %4435 = vmatpush1.bf16.msra.mxu0 %v4373
          %4436 = vmatprep.subr.bf16.mxu0 0
          %4437 = vmatpush1.bf16.msra.mxu0 %v4374
          %4438 = vmatprep.subr.bf16.mxu0 0
          %4439 = vmatpush1.bf16.msra.mxu0 %v4375
          %4440 = vmatprep.subr.bf16.mxu0 0
          %4441 = vmatpush1.bf16.msra.mxu0 %v4376
          %4442 = vmatprep.subr.bf16.mxu0 0
          %4443 = vmatpush1.bf16.msra.mxu0 %v4377
          %4444 = vmatprep.subr.bf16.mxu0 0
          %4445 = vmatpush1.bf16.msra.mxu0 0
          %4446 = vmatprep.subr.bf16.mxu0 0
          %4447 = vmatpush1.bf16.msra.mxu0 0
          %4448 = vmatprep.subr.bf16.mxu0 0
          %4449 = vmatpush1.bf16.msra.mxu0 0
          %4450 = vmatprep.subr.bf16.mxu0 0
          %4451 = vmatpush1.bf16.msra.mxu0 0
          %4452 = vmatprep.subr.bf16.mxu0 0
          %4453 = vmatpush1.bf16.msra.mxu0 0
          %4454 = vmatprep.subr.bf16.mxu0 0
          %4455 = vmatpush1.bf16.msra.mxu0 0
          %4456 = vmatprep.subr.bf16.mxu0 0
          %4457 = vmatpush1.bf16.msra.mxu0 0
          %4458 = vmatprep.subr.bf16.mxu0 0
          %4459 = vmatpush1.bf16.msra.mxu0 0
          %4460 = vmatprep.subr.bf16.mxu0 0
          %4461 = vmatpush1.bf16.msra.mxu0 0
          %4462 = vmatprep.subr.bf16.mxu0 0
          %4463 = vmatpush1.bf16.msra.mxu0 0
          %4464 = vmatprep.mubr.bf16.mxu0 0
          %4465 = vmatmul.mubr.bf16.gmra.mrb[0].mxu0 %v4385
          %v4466 = vpop.f32.mrb[0].mxu0
          %v4467 = vadd.f32 0.0, %v4466
          %v4468 = vpop.f32.mrb[0].mxu0
          %v4469 = vpop.f32.mrb[0].mxu0
          %v4470 = vadd.f32 0.0, %v4469
          %v4471 = vpop.f32.mrb[0].mxu0
          %4472 = vmatprep.mubr.bf16.mxu0 0
          %4473 = vmatmul.mubr.bf16.gmra.mrb[0].mxu0 %v4388
          %v4474 = vpop.f32.mrb[0].mxu0
          %v4475 = vadd.f32 0.0, %v4474
          %v4476 = vpop.f32.mrb[0].mxu0
          %v4477 = vpop.f32.mrb[0].mxu0
          %v4478 = vadd.f32 0.0, %v4477
          %v4479 = vpop.f32.mrb[0].mxu0
          %4480 = vmatprep.mubr.bf16.mxu0 0
          %4481 = vmatmul.mubr.bf16.gmra.mrb[0].mxu0 %v4391
          %v4482 = vpop.f32.mrb[0].mxu0
          %v4483 = vadd.f32 0.0, %v4482
          %v4484 = vpop.f32.mrb[0].mxu0
          %v4485 = vpop.f32.mrb[0].mxu0
          %v4486 = vadd.f32 0.0, %v4485
          %v4487 = vpop.f32.mrb[0].mxu0
          %4488 = vmatprep.mubr.bf16.mxu0 0
          %4489 = vmatmul.mubr.bf16.gmra.mrb[0].mxu0 %v4394
          %v4490 = vpop.f32.mrb[0].mxu0
          %v4491 = vadd.f32 0.0, %v4490
          %v4492 = vpop.f32.mrb[0].mxu0
          %v4493 = vpop.f32.mrb[0].mxu0
          %v4494 = vadd.f32 0.0, %v4493
          %v4495 = vpop.f32.mrb[0].mxu0
          %4496 = vmatprep.mubr.bf16.mxu0 0
          %4497 = vmatmul.mubr.bf16.gmra.mrb[0].mxu0 %v4397
          %v4498 = vpop.f32.mrb[0].mxu0
          %v4499 = vadd.f32 0.0, %v4498
          %v4500 = vpop.f32.mrb[0].mxu0
          %v4501 = vpop.f32.mrb[0].mxu0
          %v4502 = vadd.f32 0.0, %v4501
          %v4503 = vpop.f32.mrb[0].mxu0
          %4504 = vmatprep.mubr.bf16.mxu0 0
          %4505 = vmatmul.mubr.bf16.gmra.mrb[0].mxu0 %v4400
          %v4506 = vpop.f32.mrb[0].mxu0
          %v4507 = vadd.f32 0.0, %v4506
          %v4508 = vpop.f32.mrb[0].mxu0
          %v4509 = vpop.f32.mrb[0].mxu0
          %v4510 = vadd.f32 0.0, %v4509
          %v4511 = vpop.f32.mrb[0].mxu0
          %4512 = vmatprep.mubr.bf16.mxu0 0
          %4513 = vmatmul.mubr.bf16.gmra.mrb[0].mxu0 %v4403
          %v4514 = vpop.f32.mrb[0].mxu0
          %v4515 = vadd.f32 0.0, %v4514
          %v4516 = vpop.f32.mrb[0].mxu0
          %v4517 = vpop.f32.mrb[0].mxu0
          %v4518 = vadd.f32 0.0, %v4517
          %v4519 = vpop.f32.mrb[0].mxu0
          %4520 = vmatprep.mubr.bf16.mxu0 0
          %4521 = vmatmul.mubr.bf16.gmra.mrb[0].mxu0 %v4406
          %v4522 = vpop.f32.mrb[0].mxu0
          %v4523 = vadd.f32 0.0, %v4522
          %v4524 = vpop.f32.mrb[0].mxu0
          %v4525 = vpop.f32.mrb[0].mxu0
          %v4526 = vadd.f32 0.0, %v4525
          %v4527 = vpop.f32.mrb[0].mxu0
          %4528 = vmatprep.mubr.bf16.mxu0 0
          %4529 = vmatmul.mubr.bf16.gmra.mrb[0].mxu0 %v4409
          %v4530 = vpop.f32.mrb[0].mxu0
          %v4531 = vadd.f32 0.0, %v4530
          %v4532 = vpop.f32.mrb[0].mxu0
          %v4533 = vpop.f32.mrb[0].mxu0
          %v4534 = vadd.f32 0.0, %v4533
          %v4535 = vpop.f32.mrb[0].mxu0
          %4536 = vmatprep.mubr.bf16.mxu0 0
          %4537 = vmatmul.mubr.bf16.gmra.mrb[0].mxu0 %v4412
          %v4538 = vpop.f32.mrb[0].mxu0
          %v4539 = vadd.f32 0.0, %v4538
          %v4540 = vpop.f32.mrb[0].mxu0
          %v4541 = vpop.f32.mrb[0].mxu0
          %v4542 = vadd.f32 0.0, %v4541
          %v4543 = vpop.f32.mrb[0].mxu0
          %4544 = vmatprep.mubr.bf16.mxu0 0
          %4545 = vmatmul.mubr.bf16.gmra.mrb[0].mxu0 %v4415
          %v4546 = vpop.f32.mrb[0].mxu0
          %v4547 = vadd.f32 0.0, %v4546
          %v4548 = vpop.f32.mrb[0].mxu0
          %v4549 = vpop.f32.mrb[0].mxu0
          %v4550 = vadd.f32 0.0, %v4549
          %v4551 = vpop.f32.mrb[0].mxu0
          %4552 = vmatprep.mubr.bf16.mxu0 0
          %4553 = vmatmul.mubr.bf16.gmra.mrb[0].mxu0 %v4418
          %v4554 = vpop.f32.mrb[0].mxu0
          %v4555 = vadd.f32 0.0, %v4554
          %v4556 = vpop.f32.mrb[0].mxu0
          %v4557 = vpop.f32.mrb[0].mxu0
          %v4558 = vadd.f32 0.0, %v4557
          %v4559 = vpop.f32.mrb[0].mxu0
          %4560 = vmatprep.mubr.bf16.mxu0 0
          %4561 = vmatmul.mubr.bf16.gmra.mrb[0].mxu0 %v4421
          %v4562 = vpop.f32.mrb[0].mxu0
          %v4563 = vadd.f32 0.0, %v4562
          %v4564 = vpop.f32.mrb[0].mxu0
          %v4565 = vpop.f32.mrb[0].mxu0
          %v4566 = vadd.f32 0.0, %v4565
          %v4567 = vpop.f32.mrb[0].mxu0
          %4568 = vmatprep.mubr.bf16.mxu0 0
          %4569 = vmatmul.mubr.bf16.gmra.mrb[0].mxu0 %v4424
          %v4570 = vpop.f32.mrb[0].mxu0
          %v4571 = vadd.f32 0.0, %v4570
          %v4572 = vpop.f32.mrb[0].mxu0
          %v4573 = vpop.f32.mrb[0].mxu0
          %v4574 = vadd.f32 0.0, %v4573
          %v4575 = vpop.f32.mrb[0].mxu0
          %4576 = vmatprep.mubr.bf16.mxu0 0
          %4577 = vmatmul.mubr.bf16.gmra.mrb[0].mxu0 %v4427
          %v4578 = vpop.f32.mrb[0].mxu0
          %v4579 = vadd.f32 0.0, %v4578
          %v4580 = vpop.f32.mrb[0].mxu0
          %v4581 = vpop.f32.mrb[0].mxu0
          %v4582 = vadd.f32 0.0, %v4581
          %v4583 = vpop.f32.mrb[0].mxu0
          %4584 = vmatprep.mubr.bf16.mxu0 0
          %4585 = vmatmul.mubr.bf16.gmra.mrb[0].mxu0 %v4430
          %v4586 = vpop.f32.mrb[0].mxu0
          %v4587 = vadd.f32 0.0, %v4586
          %v4588 = vpop.f32.mrb[0].mxu0
          %v4589 = vpop.f32.mrb[0].mxu0
          %v4590 = vadd.f32 0.0, %v4589
          %v4591 = vpop.f32.mrb[0].mxu0
          %4592 = vdwg.mxu0
          %v4593 = vadd.f32 %v4189, %v4467
          %v4594 = vadd.f32 %v4190, %v4470
          %v4595 = vadd.f32 %v4191, %v4475
          %v4596 = vadd.f32 %v4192, %v4478
          %v4597 = vadd.f32 %v4193, %v4483
          %v4598 = vadd.f32 %v4194, %v4486
          %v4599 = vadd.f32 %v4195, %v4491
          %v4600 = vadd.f32 %v4196, %v4494
          %v4601 = vadd.f32 %v4197, %v4499
          %v4602 = vadd.f32 %v4198, %v4502
          %v4603 = vadd.f32 %v4199, %v4507
          %v4604 = vadd.f32 %v4200, %v4510
          %v4605 = vadd.f32 %v4201, %v4515
          %v4606 = vadd.f32 %v4202, %v4518
          %v4607 = vadd.f32 %v4203, %v4523
          %v4608 = vadd.f32 %v4204, %v4526
          %v4609 = vadd.f32 %v4205, %v4531
          %v4610 = vadd.f32 %v4206, %v4534
          %v4611 = vadd.f32 %v4207, %v4539
          %v4612 = vadd.f32 %v4208, %v4542
          %v4613 = vadd.f32 %v4209, %v4547
          %v4614 = vadd.f32 %v4210, %v4550
          %v4615 = vadd.f32 %v4211, %v4555
          %v4616 = vadd.f32 %v4212, %v4558
          %v4617 = vadd.f32 %v4213, %v4563
          %v4618 = vadd.f32 %v4214, %v4566
          %v4619 = vadd.f32 %v4215, %v4571
          %v4620 = vadd.f32 %v4216, %v4574
          %v4621 = vadd.f32 %v4217, %v4579
          %v4622 = vadd.f32 %v4218, %v4582
          %v4623 = vadd.f32 %v4219, %v4587
          %v4624 = vadd.f32 %v4220, %v4590
          %v4625 = vld [vmem:[%s1921] sm:$0xf0]
          %v4626 = vld [vmem:[%s1921 + $0x8] sm:$0xf]
          %v4627 = vld [vmem:[%s1921 + $0x10] sm:$0xf0]
          %v4628 = vld [vmem:[%s1921 + $0x18] sm:$0xf]
          %v4629 = vld [vmem:[%s1921 + $0x20] sm:$0xf0]
          %v4630 = vld [vmem:[%s1921 + $0x28] sm:$0xf]
          %v4631 = vld [vmem:[%s1921 + $0x30] sm:$0xf0]
          %v4632 = vld [vmem:[%s1921 + $0x38] sm:$0xf]
          %v4633 = vld [vmem:[%s1921 + $0x40] sm:$0xf0]
          %v4634 = vld [vmem:[%s1921 + $0x48] sm:$0xf]
          %v4635 = vld [vmem:[%s1921 + $0x50] sm:$0xf0]
          %v4636 = vld [vmem:[%s1921 + $0x58] sm:$0xf]
          %v4637 = vld [vmem:[%s1921 + $0x60] sm:$0xf0]
          %v4638 = vld [vmem:[%s1921 + $0x68] sm:$0xf]
          %v4639 = vld [vmem:[%s1921 + $0x70] sm:$0xf0]
          %v4640 = vld [vmem:[%s1921 + $0x78] sm:$0xf]
          %v4641 = vld [vmem:[%s1921 + $0x80] sm:$0xf0]
          %v4642 = vld [vmem:[%s1921 + $0x88] sm:$0xf]
          %v4643 = vld [vmem:[%s1921 + $0x90] sm:$0xf0]
          %v4644 = vld [vmem:[%s1921 + $0x98] sm:$0xf]
          %v4645 = vld [vmem:[%s1921 + $0xa0] sm:$0xf0]
          %v4646 = vld [vmem:[%s1921 + $0xa8] sm:$0xf]
          %v4647 = vld [vmem:[%s1921 + $0xb0] sm:$0xf0]
          %v4648 = vld [vmem:[%s1921 + $0xb8] sm:$0xf]
          %v4649 = vld [vmem:[%s1921 + $0xc0] sm:$0xf0]
          %v4650 = vld [vmem:[%s1921 + $0xc8] sm:$0xf]
          %v4651 = vld [vmem:[%s1921 + $0xd0] sm:$0xf0]
          %v4652 = vld [vmem:[%s1921 + $0xd8] sm:$0xf]
          %v4653 = vld [vmem:[%s1921 + $0xe0] sm:$0xf0]
          %v4654 = vld [vmem:[%s1921 + $0xe8] sm:$0xf]
          %v4655 = vld [vmem:[%s1921 + $0xf0] sm:$0xf0]
          %v4656 = vld [vmem:[%s1921 + $0xf8] sm:$0xf]
          %v4689 = vrot.slane %v4625, 4
          %v4690 = vrot.slane %v4626, 4
          %v4691 = vsel %vm2407, %v4689, %v4690
          %v4692 = vrot.slane %v4627, 4
          %v4693 = vrot.slane %v4628, 4
          %v4694 = vsel %vm2407, %v4692, %v4693
          %v4695 = vrot.slane %v4629, 4
          %v4696 = vrot.slane %v4630, 4
          %v4697 = vsel %vm2407, %v4695, %v4696
          %v4698 = vrot.slane %v4631, 4
          %v4699 = vrot.slane %v4632, 4
          %v4700 = vsel %vm2407, %v4698, %v4699
          %v4701 = vrot.slane %v4633, 4
          %v4702 = vrot.slane %v4634, 4
          %v4703 = vsel %vm2407, %v4701, %v4702
          %v4704 = vrot.slane %v4635, 4
          %v4705 = vrot.slane %v4636, 4
          %v4706 = vsel %vm2407, %v4704, %v4705
          %v4707 = vrot.slane %v4637, 4
          %v4708 = vrot.slane %v4638, 4
          %v4709 = vsel %vm2407, %v4707, %v4708
          %v4710 = vrot.slane %v4639, 4
          %v4711 = vrot.slane %v4640, 4
          %v4712 = vsel %vm2407, %v4710, %v4711
          %v4713 = vrot.slane %v4641, 4
          %v4714 = vrot.slane %v4642, 4
          %v4715 = vsel %vm2407, %v4713, %v4714
          %v4716 = vrot.slane %v4643, 4
          %v4717 = vrot.slane %v4644, 4
          %v4718 = vsel %vm2407, %v4716, %v4717
          %v4719 = vrot.slane %v4645, 4
          %v4720 = vrot.slane %v4646, 4
          %v4721 = vsel %vm2407, %v4719, %v4720
          %v4722 = vrot.slane %v4647, 4
          %v4723 = vrot.slane %v4648, 4
          %v4724 = vsel %vm2407, %v4722, %v4723
          %v4725 = vrot.slane %v4649, 4
          %v4726 = vrot.slane %v4650, 4
          %v4727 = vsel %vm2407, %v4725, %v4726
          %v4728 = vrot.slane %v4651, 4
          %v4729 = vrot.slane %v4652, 4
          %v4730 = vsel %vm2407, %v4728, %v4729
          %v4731 = vrot.slane %v4653, 4
          %v4732 = vrot.slane %v4654, 4
          %v4733 = vsel %vm2407, %v4731, %v4732
          %v4734 = vrot.slane %v4655, 4
          %v4735 = vrot.slane %v4656, 4
          %v4736 = vsel %vm2407, %v4734, %v4735
          %s4737 = sadd.s32 48, %s2456
          %s4738 = smul.addr %s4737, 4
          %s4739 = scalar_lea.vmem [#allocation10], %s4738
          %v4740 = vld [vmem:[%s4739] sm:$0xf]
          %v4741 = vld [vmem:[%s4739 + $0x4] sm:$0xf]
          %v4742 = vld [vmem:[%s4739 + $0x8] sm:$0xf]
          %v4743 = vld [vmem:[%s4739 + $0xc] sm:$0xf]
          %v4744 = vld [vmem:[%s4739 + $0x10] sm:$0xf]
          %v4745 = vld [vmem:[%s4739 + $0x14] sm:$0xf]
          %v4746 = vld [vmem:[%s4739 + $0x18] sm:$0xf]
          %v4747 = vld [vmem:[%s4739 + $0x1c] sm:$0xf]
          %v4748 = vld [vmem:[%s4739 + $0x20] sm:$0xf]
          %v4749 = vld [vmem:[%s4739 + $0x24] sm:$0xf]
          %v4750 = vld [vmem:[%s4739 + $0x28] sm:$0xf]
          %v4751 = vld [vmem:[%s4739 + $0x2c] sm:$0xf]
          %v4764 = vunpack.c.l.b16 %v4740
          %v4765 = vunpack.c.l.b16 %v4741
          %v4766 = vunpack.c.l.b16 %v4742
          %v4767 = vunpack.c.l.b16 %v4743
          %v4768 = vunpack.c.l.b16 %v4744
          %v4769 = vunpack.c.l.b16 %v4745
          %v4770 = vunpack.c.l.b16 %v4746
          %v4771 = vunpack.c.l.b16 %v4747
          %v4772 = vunpack.c.l.b16 %v4748
          %v4773 = vunpack.c.l.b16 %v4749
          %v4774 = vunpack.c.l.b16 %v4750
          %v4775 = vunpack.c.l.b16 %v4751
          %v4776 = vpack.c.b16 %v4765, %v4764
          %v4777 = vpack.c.b16 %v4767, %v4766
          %v4778 = vpack.c.b16 %v4769, %v4768
          %v4779 = vpack.c.b16 %v4771, %v4770
          %v4780 = vpack.c.b16 %v4773, %v4772
          %v4781 = vpack.c.b16 %v4775, %v4774
          %v4789 = vsel %vm300, %v4691, 0
          %v4792 = vsel %vm300, %v4694, 0
          %v4795 = vsel %vm300, %v4697, 0
          %v4798 = vsel %vm300, %v4700, 0
          %v4801 = vsel %vm300, %v4703, 0
          %v4804 = vsel %vm300, %v4706, 0
          %v4807 = vsel %vm300, %v4709, 0
          %v4810 = vsel %vm300, %v4712, 0
          %v4813 = vsel %vm300, %v4715, 0
          %v4816 = vsel %vm300, %v4718, 0
          %v4819 = vsel %vm300, %v4721, 0
          %v4822 = vsel %vm300, %v4724, 0
          %v4825 = vsel %vm300, %v4727, 0
          %v4828 = vsel %vm300, %v4730, 0
          %v4831 = vsel %vm300, %v4733, 0
          %v4834 = vsel %vm300, %v4736, 0
          %4836 = vmatprep.subr.bf16.mxu0 0
          %4837 = vmatpush1.bf16.msra.mxu0 %v4776
          %4838 = vmatprep.subr.bf16.mxu0 0
          %4839 = vmatpush1.bf16.msra.mxu0 %v4777
          %4840 = vmatprep.subr.bf16.mxu0 0
          %4841 = vmatpush1.bf16.msra.mxu0 %v4778
          %4842 = vmatprep.subr.bf16.mxu0 0
          %4843 = vmatpush1.bf16.msra.mxu0 %v4779
          %4844 = vmatprep.subr.bf16.mxu0 0
          %4845 = vmatpush1.bf16.msra.mxu0 %v4780
          %4846 = vmatprep.subr.bf16.mxu0 0
          %4847 = vmatpush1.bf16.msra.mxu0 %v4781
          %4848 = vmatprep.subr.bf16.mxu0 0
          %4849 = vmatpush1.bf16.msra.mxu0 0
          %4850 = vmatprep.subr.bf16.mxu0 0
          %4851 = vmatpush1.bf16.msra.mxu0 0
          %4852 = vmatprep.subr.bf16.mxu0 0
          %4853 = vmatpush1.bf16.msra.mxu0 0
          %4854 = vmatprep.subr.bf16.mxu0 0
          %4855 = vmatpush1.bf16.msra.mxu0 0
          %4856 = vmatprep.subr.bf16.mxu0 0
          %4857 = vmatpush1.bf16.msra.mxu0 0
          %4858 = vmatprep.subr.bf16.mxu0 0
          %4859 = vmatpush1.bf16.msra.mxu0 0
          %4860 = vmatprep.subr.bf16.mxu0 0
          %4861 = vmatpush1.bf16.msra.mxu0 0
          %4862 = vmatprep.subr.bf16.mxu0 0
          %4863 = vmatpush1.bf16.msra.mxu0 0
          %4864 = vmatprep.subr.bf16.mxu0 0
          %4865 = vmatpush1.bf16.msra.mxu0 0
          %4866 = vmatprep.subr.bf16.mxu0 0
          %4867 = vmatpush1.bf16.msra.mxu0 0
          %4868 = vmatprep.mubr.bf16.mxu0 0
          %4869 = vmatmul.mubr.bf16.gmra.mrb[0].mxu0 %v4789
          %v4870 = vpop.f32.mrb[0].mxu0
          %v4871 = vadd.f32 0.0, %v4870
          %v4872 = vpop.f32.mrb[0].mxu0
          %v4873 = vpop.f32.mrb[0].mxu0
          %v4874 = vadd.f32 0.0, %v4873
          %v4875 = vpop.f32.mrb[0].mxu0
          %4876 = vmatprep.mubr.bf16.mxu0 0
          %4877 = vmatmul.mubr.bf16.gmra.mrb[0].mxu0 %v4792
          %v4878 = vpop.f32.mrb[0].mxu0
          %v4879 = vadd.f32 0.0, %v4878
          %v4880 = vpop.f32.mrb[0].mxu0
          %v4881 = vpop.f32.mrb[0].mxu0
          %v4882 = vadd.f32 0.0, %v4881
          %v4883 = vpop.f32.mrb[0].mxu0
          %4884 = vmatprep.mubr.bf16.mxu0 0
          %4885 = vmatmul.mubr.bf16.gmra.mrb[0].mxu0 %v4795
          %v4886 = vpop.f32.mrb[0].mxu0
          %v4887 = vadd.f32 0.0, %v4886
          %v4888 = vpop.f32.mrb[0].mxu0
          %v4889 = vpop.f32.mrb[0].mxu0
          %v4890 = vadd.f32 0.0, %v4889
          %v4891 = vpop.f32.mrb[0].mxu0
          %4892 = vmatprep.mubr.bf16.mxu0 0
          %4893 = vmatmul.mubr.bf16.gmra.mrb[0].mxu0 %v4798
          %v4894 = vpop.f32.mrb[0].mxu0
          %v4895 = vadd.f32 0.0, %v4894
          %v4896 = vpop.f32.mrb[0].mxu0
          %v4897 = vpop.f32.mrb[0].mxu0
          %v4898 = vadd.f32 0.0, %v4897
          %v4899 = vpop.f32.mrb[0].mxu0
          %4900 = vmatprep.mubr.bf16.mxu0 0
          %4901 = vmatmul.mubr.bf16.gmra.mrb[0].mxu0 %v4801
          %v4902 = vpop.f32.mrb[0].mxu0
          %v4903 = vadd.f32 0.0, %v4902
          %v4904 = vpop.f32.mrb[0].mxu0
          %v4905 = vpop.f32.mrb[0].mxu0
          %v4906 = vadd.f32 0.0, %v4905
          %v4907 = vpop.f32.mrb[0].mxu0
          %4908 = vmatprep.mubr.bf16.mxu0 0
          %4909 = vmatmul.mubr.bf16.gmra.mrb[0].mxu0 %v4804
          %v4910 = vpop.f32.mrb[0].mxu0
          %v4911 = vadd.f32 0.0, %v4910
          %v4912 = vpop.f32.mrb[0].mxu0
          %v4913 = vpop.f32.mrb[0].mxu0
          %v4914 = vadd.f32 0.0, %v4913
          %v4915 = vpop.f32.mrb[0].mxu0
          %4916 = vmatprep.mubr.bf16.mxu0 0
          %4917 = vmatmul.mubr.bf16.gmra.mrb[0].mxu0 %v4807
          %v4918 = vpop.f32.mrb[0].mxu0
          %v4919 = vadd.f32 0.0, %v4918
          %v4920 = vpop.f32.mrb[0].mxu0
          %v4921 = vpop.f32.mrb[0].mxu0
          %v4922 = vadd.f32 0.0, %v4921
          %v4923 = vpop.f32.mrb[0].mxu0
          %4924 = vmatprep.mubr.bf16.mxu0 0
          %4925 = vmatmul.mubr.bf16.gmra.mrb[0].mxu0 %v4810
          %v4926 = vpop.f32.mrb[0].mxu0
          %v4927 = vadd.f32 0.0, %v4926
          %v4928 = vpop.f32.mrb[0].mxu0
          %v4929 = vpop.f32.mrb[0].mxu0
          %v4930 = vadd.f32 0.0, %v4929
          %v4931 = vpop.f32.mrb[0].mxu0
          %4932 = vmatprep.mubr.bf16.mxu0 0
          %4933 = vmatmul.mubr.bf16.gmra.mrb[0].mxu0 %v4813
          %v4934 = vpop.f32.mrb[0].mxu0
          %v4935 = vadd.f32 0.0, %v4934
          %v4936 = vpop.f32.mrb[0].mxu0
          %v4937 = vpop.f32.mrb[0].mxu0
          %v4938 = vadd.f32 0.0, %v4937
          %v4939 = vpop.f32.mrb[0].mxu0
          %4940 = vmatprep.mubr.bf16.mxu0 0
          %4941 = vmatmul.mubr.bf16.gmra.mrb[0].mxu0 %v4816
          %v4942 = vpop.f32.mrb[0].mxu0
          %v4943 = vadd.f32 0.0, %v4942
          %v4944 = vpop.f32.mrb[0].mxu0
          %v4945 = vpop.f32.mrb[0].mxu0
          %v4946 = vadd.f32 0.0, %v4945
          %v4947 = vpop.f32.mrb[0].mxu0
          %4948 = vmatprep.mubr.bf16.mxu0 0
          %4949 = vmatmul.mubr.bf16.gmra.mrb[0].mxu0 %v4819
          %v4950 = vpop.f32.mrb[0].mxu0
          %v4951 = vadd.f32 0.0, %v4950
          %v4952 = vpop.f32.mrb[0].mxu0
          %v4953 = vpop.f32.mrb[0].mxu0
          %v4954 = vadd.f32 0.0, %v4953
          %v4955 = vpop.f32.mrb[0].mxu0
          %4956 = vmatprep.mubr.bf16.mxu0 0
          %4957 = vmatmul.mubr.bf16.gmra.mrb[0].mxu0 %v4822
          %v4958 = vpop.f32.mrb[0].mxu0
          %v4959 = vadd.f32 0.0, %v4958
          %v4960 = vpop.f32.mrb[0].mxu0
          %v4961 = vpop.f32.mrb[0].mxu0
          %v4962 = vadd.f32 0.0, %v4961
          %v4963 = vpop.f32.mrb[0].mxu0
          %4964 = vmatprep.mubr.bf16.mxu0 0
          %4965 = vmatmul.mubr.bf16.gmra.mrb[0].mxu0 %v4825
          %v4966 = vpop.f32.mrb[0].mxu0
          %v4967 = vadd.f32 0.0, %v4966
          %v4968 = vpop.f32.mrb[0].mxu0
          %v4969 = vpop.f32.mrb[0].mxu0
          %v4970 = vadd.f32 0.0, %v4969
          %v4971 = vpop.f32.mrb[0].mxu0
          %4972 = vmatprep.mubr.bf16.mxu0 0
          %4973 = vmatmul.mubr.bf16.gmra.mrb[0].mxu0 %v4828
          %v4974 = vpop.f32.mrb[0].mxu0
          %v4975 = vadd.f32 0.0, %v4974
          %v4976 = vpop.f32.mrb[0].mxu0
          %v4977 = vpop.f32.mrb[0].mxu0
          %v4978 = vadd.f32 0.0, %v4977
          %v4979 = vpop.f32.mrb[0].mxu0
          %4980 = vmatprep.mubr.bf16.mxu0 0
          %4981 = vmatmul.mubr.bf16.gmra.mrb[0].mxu0 %v4831
          %v4982 = vpop.f32.mrb[0].mxu0
          %v4983 = vadd.f32 0.0, %v4982
          %v4984 = vpop.f32.mrb[0].mxu0
          %v4985 = vpop.f32.mrb[0].mxu0
          %v4986 = vadd.f32 0.0, %v4985
          %v4987 = vpop.f32.mrb[0].mxu0
          %4988 = vmatprep.mubr.bf16.mxu0 0
          %4989 = vmatmul.mubr.bf16.gmra.mrb[0].mxu0 %v4834
          %v4990 = vpop.f32.mrb[0].mxu0
          %v4991 = vadd.f32 0.0, %v4990
          %v4992 = vpop.f32.mrb[0].mxu0
          %v4993 = vpop.f32.mrb[0].mxu0
          %v4994 = vadd.f32 0.0, %v4993
          %v4995 = vpop.f32.mrb[0].mxu0
          %4996 = vdwg.mxu0
          %v4997 = vadd.f32 %v4593, %v4871
          %v4998 = vadd.f32 %v4594, %v4874
          %v4999 = vadd.f32 %v4595, %v4879
          %v5000 = vadd.f32 %v4596, %v4882
          %v5001 = vadd.f32 %v4597, %v4887
          %v5002 = vadd.f32 %v4598, %v4890
          %v5003 = vadd.f32 %v4599, %v4895
          %v5004 = vadd.f32 %v4600, %v4898
          %v5005 = vadd.f32 %v4601, %v4903
          %v5006 = vadd.f32 %v4602, %v4906
          %v5007 = vadd.f32 %v4603, %v4911
          %v5008 = vadd.f32 %v4604, %v4914
          %v5009 = vadd.f32 %v4605, %v4919
          %v5010 = vadd.f32 %v4606, %v4922
          %v5011 = vadd.f32 %v4607, %v4927
          %v5012 = vadd.f32 %v4608, %v4930
          %v5013 = vadd.f32 %v4609, %v4935
          %v5014 = vadd.f32 %v4610, %v4938
          %v5015 = vadd.f32 %v4611, %v4943
          %v5016 = vadd.f32 %v4612, %v4946
          %v5017 = vadd.f32 %v4613, %v4951
          %v5018 = vadd.f32 %v4614, %v4954
          %v5019 = vadd.f32 %v4615, %v4959
          %v5020 = vadd.f32 %v4616, %v4962
          %v5021 = vadd.f32 %v4617, %v4967
          %v5022 = vadd.f32 %v4618, %v4970
          %v5023 = vadd.f32 %v4619, %v4975
          %v5024 = vadd.f32 %v4620, %v4978
          %v5025 = vadd.f32 %v4621, %v4983
          %v5026 = vadd.f32 %v4622, %v4986
          %v5027 = vadd.f32 %v4623, %v4991
          %v5028 = vadd.f32 %v4624, %v4994
          %v5029 = vld [vmem:[%s3152] sm:$0xf0]
          %v5030 = vld [vmem:[%s3152 + $0x8] sm:$0xf]
          %v5031 = vld [vmem:[%s3152 + $0x10] sm:$0xf0]
          %v5032 = vld [vmem:[%s3152 + $0x18] sm:$0xf]
          %v5033 = vld [vmem:[%s3152 + $0x20] sm:$0xf0]
          %v5034 = vld [vmem:[%s3152 + $0x28] sm:$0xf]
          %v5035 = vld [vmem:[%s3152 + $0x30] sm:$0xf0]
          %v5036 = vld [vmem:[%s3152 + $0x38] sm:$0xf]
          %v5037 = vld [vmem:[%s3152 + $0x40] sm:$0xf0]
          %v5038 = vld [vmem:[%s3152 + $0x48] sm:$0xf]
          %v5039 = vld [vmem:[%s3152 + $0x50] sm:$0xf0]
          %v5040 = vld [vmem:[%s3152 + $0x58] sm:$0xf]
          %v5041 = vld [vmem:[%s3152 + $0x60] sm:$0xf0]
          %v5042 = vld [vmem:[%s3152 + $0x68] sm:$0xf]
          %v5043 = vld [vmem:[%s3152 + $0x70] sm:$0xf0]
          %v5044 = vld [vmem:[%s3152 + $0x78] sm:$0xf]
          %v5045 = vld [vmem:[%s3152 + $0x80] sm:$0xf0]
          %v5046 = vld [vmem:[%s3152 + $0x88] sm:$0xf]
          %v5047 = vld [vmem:[%s3152 + $0x90] sm:$0xf0]
          %v5048 = vld [vmem:[%s3152 + $0x98] sm:$0xf]
          %v5049 = vld [vmem:[%s3152 + $0xa0] sm:$0xf0]
          %v5050 = vld [vmem:[%s3152 + $0xa8] sm:$0xf]
          %v5051 = vld [vmem:[%s3152 + $0xb0] sm:$0xf0]
          %v5052 = vld [vmem:[%s3152 + $0xb8] sm:$0xf]
          %v5053 = vld [vmem:[%s3152 + $0xc0] sm:$0xf0]
          %v5054 = vld [vmem:[%s3152 + $0xc8] sm:$0xf]
          %v5055 = vld [vmem:[%s3152 + $0xd0] sm:$0xf0]
          %v5056 = vld [vmem:[%s3152 + $0xd8] sm:$0xf]
          %v5057 = vld [vmem:[%s3152 + $0xe0] sm:$0xf0]
          %v5058 = vld [vmem:[%s3152 + $0xe8] sm:$0xf]
          %v5059 = vld [vmem:[%s3152 + $0xf0] sm:$0xf0]
          %v5060 = vld [vmem:[%s3152 + $0xf8] sm:$0xf]
          %v5093 = vrot.slane %v5029, 4
          %v5094 = vrot.slane %v5030, 4
          %v5095 = vsel %vm2407, %v5093, %v5094
          %v5096 = vrot.slane %v5031, 4
          %v5097 = vrot.slane %v5032, 4
          %v5098 = vsel %vm2407, %v5096, %v5097
          %v5099 = vrot.slane %v5033, 4
          %v5100 = vrot.slane %v5034, 4
          %v5101 = vsel %vm2407, %v5099, %v5100
          %v5102 = vrot.slane %v5035, 4
          %v5103 = vrot.slane %v5036, 4
          %v5104 = vsel %vm2407, %v5102, %v5103
          %v5105 = vrot.slane %v5037, 4
          %v5106 = vrot.slane %v5038, 4
          %v5107 = vsel %vm2407, %v5105, %v5106
          %v5108 = vrot.slane %v5039, 4
          %v5109 = vrot.slane %v5040, 4
          %v5110 = vsel %vm2407, %v5108, %v5109
          %v5111 = vrot.slane %v5041, 4
          %v5112 = vrot.slane %v5042, 4
          %v5113 = vsel %vm2407, %v5111, %v5112
          %v5114 = vrot.slane %v5043, 4
          %v5115 = vrot.slane %v5044, 4
          %v5116 = vsel %vm2407, %v5114, %v5115
          %v5117 = vrot.slane %v5045, 4
          %v5118 = vrot.slane %v5046, 4
          %v5119 = vsel %vm2407, %v5117, %v5118
          %v5120 = vrot.slane %v5047, 4
          %v5121 = vrot.slane %v5048, 4
          %v5122 = vsel %vm2407, %v5120, %v5121
          %v5123 = vrot.slane %v5049, 4
          %v5124 = vrot.slane %v5050, 4
          %v5125 = vsel %vm2407, %v5123, %v5124
          %v5126 = vrot.slane %v5051, 4
          %v5127 = vrot.slane %v5052, 4
          %v5128 = vsel %vm2407, %v5126, %v5127
          %v5129 = vrot.slane %v5053, 4
          %v5130 = vrot.slane %v5054, 4
          %v5131 = vsel %vm2407, %v5129, %v5130
          %v5132 = vrot.slane %v5055, 4
          %v5133 = vrot.slane %v5056, 4
          %v5134 = vsel %vm2407, %v5132, %v5133
          %v5135 = vrot.slane %v5057, 4
          %v5136 = vrot.slane %v5058, 4
          %v5137 = vsel %vm2407, %v5135, %v5136
          %v5138 = vrot.slane %v5059, 4
          %v5139 = vrot.slane %v5060, 4
          %v5140 = vsel %vm2407, %v5138, %v5139
          %s5141 = sadd.s32 60, %s2456
          %s5142 = smul.addr %s5141, 4
          %s5143 = scalar_lea.vmem [#allocation10], %s5142
          %v5144 = vld [vmem:[%s5143] sm:$0xf]
          %v5145 = vld [vmem:[%s5143 + $0x4] sm:$0xf]
          %v5146 = vld [vmem:[%s5143 + $0x8] sm:$0xf]
          %v5147 = vld [vmem:[%s5143 + $0xc] sm:$0xf]
          %v5148 = vld [vmem:[%s5143 + $0x10] sm:$0xf]
          %v5149 = vld [vmem:[%s5143 + $0x14] sm:$0xf]
          %v5150 = vld [vmem:[%s5143 + $0x18] sm:$0xf]
          %v5151 = vld [vmem:[%s5143 + $0x1c] sm:$0xf]
          %v5152 = vld [vmem:[%s5143 + $0x20] sm:$0xf]
          %v5153 = vld [vmem:[%s5143 + $0x24] sm:$0xf]
          %v5154 = vld [vmem:[%s5143 + $0x28] sm:$0xf]
          %v5155 = vld [vmem:[%s5143 + $0x2c] sm:$0xf]
          %v5168 = vunpack.c.l.b16 %v5144
          %v5169 = vunpack.c.l.b16 %v5145
          %v5170 = vunpack.c.l.b16 %v5146
          %v5171 = vunpack.c.l.b16 %v5147
          %v5172 = vunpack.c.l.b16 %v5148
          %v5173 = vunpack.c.l.b16 %v5149
          %v5174 = vunpack.c.l.b16 %v5150
          %v5175 = vunpack.c.l.b16 %v5151
          %v5176 = vunpack.c.l.b16 %v5152
          %v5177 = vunpack.c.l.b16 %v5153
          %v5178 = vunpack.c.l.b16 %v5154
          %v5179 = vunpack.c.l.b16 %v5155
          %v5180 = vpack.c.b16 %v5169, %v5168
          %v5181 = vpack.c.b16 %v5171, %v5170
          %v5182 = vpack.c.b16 %v5173, %v5172
          %v5183 = vpack.c.b16 %v5175, %v5174
          %v5184 = vpack.c.b16 %v5177, %v5176
          %v5185 = vpack.c.b16 %v5179, %v5178
          %v5193 = vsel %vm300, %v5095, 0
          %v5196 = vsel %vm300, %v5098, 0
          %v5199 = vsel %vm300, %v5101, 0
          %v5202 = vsel %vm300, %v5104, 0
          %v5205 = vsel %vm300, %v5107, 0
          %v5208 = vsel %vm300, %v5110, 0
          %v5211 = vsel %vm300, %v5113, 0
          %v5214 = vsel %vm300, %v5116, 0
          %v5217 = vsel %vm300, %v5119, 0
          %v5220 = vsel %vm300, %v5122, 0
          %v5223 = vsel %vm300, %v5125, 0
          %v5226 = vsel %vm300, %v5128, 0
          %v5229 = vsel %vm300, %v5131, 0
          %v5232 = vsel %vm300, %v5134, 0
          %v5235 = vsel %vm300, %v5137, 0
          %v5238 = vsel %vm300, %v5140, 0
          %5240 = vmatprep.subr.bf16.mxu0 0
          %5241 = vmatpush1.bf16.msra.mxu0 %v5180
          %5242 = vmatprep.subr.bf16.mxu0 0
          %5243 = vmatpush1.bf16.msra.mxu0 %v5181
          %5244 = vmatprep.subr.bf16.mxu0 0
          %5245 = vmatpush1.bf16.msra.mxu0 %v5182
          %5246 = vmatprep.subr.bf16.mxu0 0
          %5247 = vmatpush1.bf16.msra.mxu0 %v5183
          %5248 = vmatprep.subr.bf16.mxu0 0
          %5249 = vmatpush1.bf16.msra.mxu0 %v5184
          %5250 = vmatprep.subr.bf16.mxu0 0
          %5251 = vmatpush1.bf16.msra.mxu0 %v5185
          %5252 = vmatprep.subr.bf16.mxu0 0
          %5253 = vmatpush1.bf16.msra.mxu0 0
          %5254 = vmatprep.subr.bf16.mxu0 0
          %5255 = vmatpush1.bf16.msra.mxu0 0
          %5256 = vmatprep.subr.bf16.mxu0 0
          %5257 = vmatpush1.bf16.msra.mxu0 0
          %5258 = vmatprep.subr.bf16.mxu0 0
          %5259 = vmatpush1.bf16.msra.mxu0 0
          %5260 = vmatprep.subr.bf16.mxu0 0
          %5261 = vmatpush1.bf16.msra.mxu0 0
          %5262 = vmatprep.subr.bf16.mxu0 0
          %5263 = vmatpush1.bf16.msra.mxu0 0
          %5264 = vmatprep.subr.bf16.mxu0 0
          %5265 = vmatpush1.bf16.msra.mxu0 0
          %5266 = vmatprep.subr.bf16.mxu0 0
          %5267 = vmatpush1.bf16.msra.mxu0 0
          %5268 = vmatprep.subr.bf16.mxu0 0
          %5269 = vmatpush1.bf16.msra.mxu0 0
          %5270 = vmatprep.subr.bf16.mxu0 0
          %5271 = vmatpush1.bf16.msra.mxu0 0
          %5272 = vmatprep.mubr.bf16.mxu0 0
          %5273 = vmatmul.mubr.bf16.gmra.mrb[0].mxu0 %v5193
          %v5274 = vpop.f32.mrb[0].mxu0
          %v5275 = vadd.f32 0.0, %v5274
          %v5276 = vpop.f32.mrb[0].mxu0
          %v5277 = vpop.f32.mrb[0].mxu0
          %v5278 = vadd.f32 0.0, %v5277
          %v5279 = vpop.f32.mrb[0].mxu0
          %5280 = vmatprep.mubr.bf16.mxu0 0
          %5281 = vmatmul.mubr.bf16.gmra.mrb[0].mxu0 %v5196
          %v5282 = vpop.f32.mrb[0].mxu0
          %v5283 = vadd.f32 0.0, %v5282
          %v5284 = vpop.f32.mrb[0].mxu0
          %v5285 = vpop.f32.mrb[0].mxu0
          %v5286 = vadd.f32 0.0, %v5285
          %v5287 = vpop.f32.mrb[0].mxu0
          %5288 = vmatprep.mubr.bf16.mxu0 0
          %5289 = vmatmul.mubr.bf16.gmra.mrb[0].mxu0 %v5199
          %v5290 = vpop.f32.mrb[0].mxu0
          %v5291 = vadd.f32 0.0, %v5290
          %v5292 = vpop.f32.mrb[0].mxu0
          %v5293 = vpop.f32.mrb[0].mxu0
          %v5294 = vadd.f32 0.0, %v5293
          %v5295 = vpop.f32.mrb[0].mxu0
          %5296 = vmatprep.mubr.bf16.mxu0 0
          %5297 = vmatmul.mubr.bf16.gmra.mrb[0].mxu0 %v5202
          %v5298 = vpop.f32.mrb[0].mxu0
          %v5299 = vadd.f32 0.0, %v5298
          %v5300 = vpop.f32.mrb[0].mxu0
          %v5301 = vpop.f32.mrb[0].mxu0
          %v5302 = vadd.f32 0.0, %v5301
          %v5303 = vpop.f32.mrb[0].mxu0
          %5304 = vmatprep.mubr.bf16.mxu0 0
          %5305 = vmatmul.mubr.bf16.gmra.mrb[0].mxu0 %v5205
          %v5306 = vpop.f32.mrb[0].mxu0
          %v5307 = vadd.f32 0.0, %v5306
          %v5308 = vpop.f32.mrb[0].mxu0
          %v5309 = vpop.f32.mrb[0].mxu0
          %v5310 = vadd.f32 0.0, %v5309
          %v5311 = vpop.f32.mrb[0].mxu0
          %5312 = vmatprep.mubr.bf16.mxu0 0
          %5313 = vmatmul.mubr.bf16.gmra.mrb[0].mxu0 %v5208
          %v5314 = vpop.f32.mrb[0].mxu0
          %v5315 = vadd.f32 0.0, %v5314
          %v5316 = vpop.f32.mrb[0].mxu0
          %v5317 = vpop.f32.mrb[0].mxu0
          %v5318 = vadd.f32 0.0, %v5317
          %v5319 = vpop.f32.mrb[0].mxu0
          %5320 = vmatprep.mubr.bf16.mxu0 0
          %5321 = vmatmul.mubr.bf16.gmra.mrb[0].mxu0 %v5211
          %v5322 = vpop.f32.mrb[0].mxu0
          %v5323 = vadd.f32 0.0, %v5322
          %v5324 = vpop.f32.mrb[0].mxu0
          %v5325 = vpop.f32.mrb[0].mxu0
          %v5326 = vadd.f32 0.0, %v5325
          %v5327 = vpop.f32.mrb[0].mxu0
          %5328 = vmatprep.mubr.bf16.mxu0 0
          %5329 = vmatmul.mubr.bf16.gmra.mrb[0].mxu0 %v5214
          %v5330 = vpop.f32.mrb[0].mxu0
          %v5331 = vadd.f32 0.0, %v5330
          %v5332 = vpop.f32.mrb[0].mxu0
          %v5333 = vpop.f32.mrb[0].mxu0
          %v5334 = vadd.f32 0.0, %v5333
          %v5335 = vpop.f32.mrb[0].mxu0
          %5336 = vmatprep.mubr.bf16.mxu0 0
          %5337 = vmatmul.mubr.bf16.gmra.mrb[0].mxu0 %v5217
          %v5338 = vpop.f32.mrb[0].mxu0
          %v5339 = vadd.f32 0.0, %v5338
          %v5340 = vpop.f32.mrb[0].mxu0
          %v5341 = vpop.f32.mrb[0].mxu0
          %v5342 = vadd.f32 0.0, %v5341
          %v5343 = vpop.f32.mrb[0].mxu0
          %5344 = vmatprep.mubr.bf16.mxu0 0
          %5345 = vmatmul.mubr.bf16.gmra.mrb[0].mxu0 %v5220
          %v5346 = vpop.f32.mrb[0].mxu0
          %v5347 = vadd.f32 0.0, %v5346
          %v5348 = vpop.f32.mrb[0].mxu0
          %v5349 = vpop.f32.mrb[0].mxu0
          %v5350 = vadd.f32 0.0, %v5349
          %v5351 = vpop.f32.mrb[0].mxu0
          %5352 = vmatprep.mubr.bf16.mxu0 0
          %5353 = vmatmul.mubr.bf16.gmra.mrb[0].mxu0 %v5223
          %v5354 = vpop.f32.mrb[0].mxu0
          %v5355 = vadd.f32 0.0, %v5354
          %v5356 = vpop.f32.mrb[0].mxu0
          %v5357 = vpop.f32.mrb[0].mxu0
          %v5358 = vadd.f32 0.0, %v5357
          %v5359 = vpop.f32.mrb[0].mxu0
          %5360 = vmatprep.mubr.bf16.mxu0 0
          %5361 = vmatmul.mubr.bf16.gmra.mrb[0].mxu0 %v5226
          %v5362 = vpop.f32.mrb[0].mxu0
          %v5363 = vadd.f32 0.0, %v5362
          %v5364 = vpop.f32.mrb[0].mxu0
          %v5365 = vpop.f32.mrb[0].mxu0
          %v5366 = vadd.f32 0.0, %v5365
          %v5367 = vpop.f32.mrb[0].mxu0
          %5368 = vmatprep.mubr.bf16.mxu0 0
          %5369 = vmatmul.mubr.bf16.gmra.mrb[0].mxu0 %v5229
          %v5370 = vpop.f32.mrb[0].mxu0
          %v5371 = vadd.f32 0.0, %v5370
          %v5372 = vpop.f32.mrb[0].mxu0
          %v5373 = vpop.f32.mrb[0].mxu0
          %v5374 = vadd.f32 0.0, %v5373
          %v5375 = vpop.f32.mrb[0].mxu0
          %5376 = vmatprep.mubr.bf16.mxu0 0
          %5377 = vmatmul.mubr.bf16.gmra.mrb[0].mxu0 %v5232
          %v5378 = vpop.f32.mrb[0].mxu0
          %v5379 = vadd.f32 0.0, %v5378
          %v5380 = vpop.f32.mrb[0].mxu0
          %v5381 = vpop.f32.mrb[0].mxu0
          %v5382 = vadd.f32 0.0, %v5381
          %v5383 = vpop.f32.mrb[0].mxu0
          %5384 = vmatprep.mubr.bf16.mxu0 0
          %5385 = vmatmul.mubr.bf16.gmra.mrb[0].mxu0 %v5235
          %v5386 = vpop.f32.mrb[0].mxu0
          %v5387 = vadd.f32 0.0, %v5386
          %v5388 = vpop.f32.mrb[0].mxu0
          %v5389 = vpop.f32.mrb[0].mxu0
          %v5390 = vadd.f32 0.0, %v5389
          %v5391 = vpop.f32.mrb[0].mxu0
          %5392 = vmatprep.mubr.bf16.mxu0 0
          %5393 = vmatmul.mubr.bf16.gmra.mrb[0].mxu0 %v5238
          %v5394 = vpop.f32.mrb[0].mxu0
          %v5395 = vadd.f32 0.0, %v5394
          %v5396 = vpop.f32.mrb[0].mxu0
          %v5397 = vpop.f32.mrb[0].mxu0
          %v5398 = vadd.f32 0.0, %v5397
          %v5399 = vpop.f32.mrb[0].mxu0
          %5400 = vdwg.mxu0
          %v5401 = vadd.f32 %v4997, %v5275
          %v5402 = vadd.f32 %v4998, %v5278
          %v5403 = vadd.f32 %v4999, %v5283
          %v5404 = vadd.f32 %v5000, %v5286
          %v5405 = vadd.f32 %v5001, %v5291
          %v5406 = vadd.f32 %v5002, %v5294
          %v5407 = vadd.f32 %v5003, %v5299
          %v5408 = vadd.f32 %v5004, %v5302
          %v5409 = vadd.f32 %v5005, %v5307
          %v5410 = vadd.f32 %v5006, %v5310
          %v5411 = vadd.f32 %v5007, %v5315
          %v5412 = vadd.f32 %v5008, %v5318
          %v5413 = vadd.f32 %v5009, %v5323
          %v5414 = vadd.f32 %v5010, %v5326
          %v5415 = vadd.f32 %v5011, %v5331
          %v5416 = vadd.f32 %v5012, %v5334
          %v5417 = vadd.f32 %v5013, %v5339
          %v5418 = vadd.f32 %v5014, %v5342
          %v5419 = vadd.f32 %v5015, %v5347
          %v5420 = vadd.f32 %v5016, %v5350
          %v5421 = vadd.f32 %v5017, %v5355
          %v5422 = vadd.f32 %v5018, %v5358
          %v5423 = vadd.f32 %v5019, %v5363
          %v5424 = vadd.f32 %v5020, %v5366
          %v5425 = vadd.f32 %v5021, %v5371
          %v5426 = vadd.f32 %v5022, %v5374
          %v5427 = vadd.f32 %v5023, %v5379
          %v5428 = vadd.f32 %v5024, %v5382
          %v5429 = vadd.f32 %v5025, %v5387
          %v5430 = vadd.f32 %v5026, %v5390
          %v5431 = vadd.f32 %v5027, %v5395
          %v5432 = vadd.f32 %v5028, %v5398
          %5433 = vst.msk [vmem:[#allocation2] sm:$0xff] %vm1305, %v5401
          %5434 = vst.msk [vmem:[#allocation2 + $0x8] sm:$0xff] %vm1305, %v5402
          %5435 = vst.msk [vmem:[#allocation2 + $0x10] sm:$0xff] %vm1305, %v5403
          %5436 = vst.msk [vmem:[#allocation2 + $0x18] sm:$0xff] %vm1305, %v5404
          %5437 = vst.msk [vmem:[#allocation2 + $0x20] sm:$0xff] %vm1305, %v5405
          %5438 = vst.msk [vmem:[#allocation2 + $0x28] sm:$0xff] %vm1305, %v5406
          %5439 = vst.msk [vmem:[#allocation2 + $0x30] sm:$0xff] %vm1305, %v5407
          %5440 = vst.msk [vmem:[#allocation2 + $0x38] sm:$0xff] %vm1305, %v5408
          %5441 = vst.msk [vmem:[#allocation2 + $0x40] sm:$0xff] %vm1305, %v5409
          %5442 = vst.msk [vmem:[#allocation2 + $0x48] sm:$0xff] %vm1305, %v5410
          %5443 = vst.msk [vmem:[#allocation2 + $0x50] sm:$0xff] %vm1305, %v5411
          %5444 = vst.msk [vmem:[#allocation2 + $0x58] sm:$0xff] %vm1305, %v5412
          %5445 = vst.msk [vmem:[#allocation2 + $0x60] sm:$0xff] %vm1305, %v5413
          %5446 = vst.msk [vmem:[#allocation2 + $0x68] sm:$0xff] %vm1305, %v5414
          %5447 = vst.msk [vmem:[#allocation2 + $0x70] sm:$0xff] %vm1305, %v5415
          %5448 = vst.msk [vmem:[#allocation2 + $0x78] sm:$0xff] %vm1305, %v5416
          %5449 = vst.msk [vmem:[#allocation2 + $0x80] sm:$0xff] %vm1305, %v5417
          %5450 = vst.msk [vmem:[#allocation2 + $0x88] sm:$0xff] %vm1305, %v5418
          %5451 = vst.msk [vmem:[#allocation2 + $0x90] sm:$0xff] %vm1305, %v5419
          %5452 = vst.msk [vmem:[#allocation2 + $0x98] sm:$0xff] %vm1305, %v5420
          %5453 = vst.msk [vmem:[#allocation2 + $0xa0] sm:$0xff] %vm1305, %v5421
          %5454 = vst.msk [vmem:[#allocation2 + $0xa8] sm:$0xff] %vm1305, %v5422
          %5455 = vst.msk [vmem:[#allocation2 + $0xb0] sm:$0xff] %vm1305, %v5423
          %5456 = vst.msk [vmem:[#allocation2 + $0xb8] sm:$0xff] %vm1305, %v5424
          %5457 = vst.msk [vmem:[#allocation2 + $0xc0] sm:$0xff] %vm1305, %v5425
          %5458 = vst.msk [vmem:[#allocation2 + $0xc8] sm:$0xff] %vm1305, %v5426
          %5459 = vst.msk [vmem:[#allocation2 + $0xd0] sm:$0xff] %vm1305, %v5427
          %5460 = vst.msk [vmem:[#allocation2 + $0xd8] sm:$0xff] %vm1305, %v5428
          %5461 = vst.msk [vmem:[#allocation2 + $0xe0] sm:$0xff] %vm1305, %v5429
          %5462 = vst.msk [vmem:[#allocation2 + $0xe8] sm:$0xff] %vm1305, %v5430
          %5463 = vst.msk [vmem:[#allocation2 + $0xf0] sm:$0xff] %vm1305, %v5431
          %5464 = vst.msk [vmem:[#allocation2 + $0xf8] sm:$0xff] %vm1305, %v5432
        $region65: #{conv_residual_blocks.1} parent=39 // loop_footer
          %s1728 = sadd.s32 1, %s1724
        $region66: #{conv_residual_blocks.1} parent=39 // loop_footer_branch
          %1723 = sbr.rel target = $region62
        $region67: #{conv_residual_blocks.1} parent=39 // loop_exit
          _
        %v5465 = vld [vmem:[#allocation2] sm:$0xff]
        %v5466 = vld [vmem:[#allocation2 + $0x8] sm:$0xff]
        %v5467 = vld [vmem:[#allocation2 + $0x10] sm:$0xff]
        %v5468 = vld [vmem:[#allocation2 + $0x18] sm:$0xff]
        %v5469 = vld [vmem:[#allocation2 + $0x20] sm:$0xff]
        %v5470 = vld [vmem:[#allocation2 + $0x28] sm:$0xff]
        %v5471 = vld [vmem:[#allocation2 + $0x30] sm:$0xff]
        %v5472 = vld [vmem:[#allocation2 + $0x38] sm:$0xff]
        %v5473 = vld [vmem:[#allocation2 + $0x40] sm:$0xff]
        %v5474 = vld [vmem:[#allocation2 + $0x48] sm:$0xff]
        %v5475 = vld [vmem:[#allocation2 + $0x50] sm:$0xff]
        %v5476 = vld [vmem:[#allocation2 + $0x58] sm:$0xff]
        %v5477 = vld [vmem:[#allocation2 + $0x60] sm:$0xff]
        %v5478 = vld [vmem:[#allocation2 + $0x68] sm:$0xff]
        %v5479 = vld [vmem:[#allocation2 + $0x70] sm:$0xff]
        %v5480 = vld [vmem:[#allocation2 + $0x78] sm:$0xff]
        %v5481 = vld [vmem:[#allocation2 + $0x80] sm:$0xff]
        %v5482 = vld [vmem:[#allocation2 + $0x88] sm:$0xff]
        %v5483 = vld [vmem:[#allocation2 + $0x90] sm:$0xff]
        %v5484 = vld [vmem:[#allocation2 + $0x98] sm:$0xff]
        %v5485 = vld [vmem:[#allocation2 + $0xa0] sm:$0xff]
        %v5486 = vld [vmem:[#allocation2 + $0xa8] sm:$0xff]
        %v5487 = vld [vmem:[#allocation2 + $0xb0] sm:$0xff]
        %v5488 = vld [vmem:[#allocation2 + $0xb8] sm:$0xff]
        %v5489 = vld [vmem:[#allocation2 + $0xc0] sm:$0xff]
        %v5490 = vld [vmem:[#allocation2 + $0xc8] sm:$0xff]
        %v5491 = vld [vmem:[#allocation2 + $0xd0] sm:$0xff]
        %v5492 = vld [vmem:[#allocation2 + $0xd8] sm:$0xff]
        %v5493 = vld [vmem:[#allocation2 + $0xe0] sm:$0xff]
        %v5494 = vld [vmem:[#allocation2 + $0xe8] sm:$0xff]
        %v5495 = vld [vmem:[#allocation2 + $0xf0] sm:$0xff]
        %v5496 = vld [vmem:[#allocation2 + $0xf8] sm:$0xff]
        %5497 = vst.msk [vmem:[%s298] sm:$0xff] %vm1305, %v5465
        %5498 = vst.msk [vmem:[%s298 + $0x8] sm:$0xff] %vm1305, %v5466
        %5499 = vst.msk [vmem:[%s298 + $0x10] sm:$0xff] %vm1305, %v5467
        %5500 = vst.msk [vmem:[%s298 + $0x18] sm:$0xff] %vm1305, %v5468
        %5501 = vst.msk [vmem:[%s298 + $0x20] sm:$0xff] %vm1305, %v5469
        %5502 = vst.msk [vmem:[%s298 + $0x28] sm:$0xff] %vm1305, %v5470
        %5503 = vst.msk [vmem:[%s298 + $0x30] sm:$0xff] %vm1305, %v5471
        %5504 = vst.msk [vmem:[%s298 + $0x38] sm:$0xff] %vm1305, %v5472
        %5505 = vst.msk [vmem:[%s298 + $0x40] sm:$0xff] %vm1305, %v5473
        %5506 = vst.msk [vmem:[%s298 + $0x48] sm:$0xff] %vm1305, %v5474
        %5507 = vst.msk [vmem:[%s298 + $0x50] sm:$0xff] %vm1305, %v5475
        %5508 = vst.msk [vmem:[%s298 + $0x58] sm:$0xff] %vm1305, %v5476
        %5509 = vst.msk [vmem:[%s298 + $0x60] sm:$0xff] %vm1305, %v5477
        %5510 = vst.msk [vmem:[%s298 + $0x68] sm:$0xff] %vm1305, %v5478
        %5511 = vst.msk [vmem:[%s298 + $0x70] sm:$0xff] %vm1305, %v5479
        %5512 = vst.msk [vmem:[%s298 + $0x78] sm:$0xff] %vm1305, %v5480
        %5513 = vst.msk [vmem:[%s298 + $0x80] sm:$0xff] %vm1305, %v5481
        %5514 = vst.msk [vmem:[%s298 + $0x88] sm:$0xff] %vm1305, %v5482
        %5515 = vst.msk [vmem:[%s298 + $0x90] sm:$0xff] %vm1305, %v5483
        %5516 = vst.msk [vmem:[%s298 + $0x98] sm:$0xff] %vm1305, %v5484
        %5517 = vst.msk [vmem:[%s298 + $0xa0] sm:$0xff] %vm1305, %v5485
        %5518 = vst.msk [vmem:[%s298 + $0xa8] sm:$0xff] %vm1305, %v5486
        %5519 = vst.msk [vmem:[%s298 + $0xb0] sm:$0xff] %vm1305, %v5487
        %5520 = vst.msk [vmem:[%s298 + $0xb8] sm:$0xff] %vm1305, %v5488
        %5521 = vst.msk [vmem:[%s298 + $0xc0] sm:$0xff] %vm1305, %v5489
        %5522 = vst.msk [vmem:[%s298 + $0xc8] sm:$0xff] %vm1305, %v5490
        %5523 = vst.msk [vmem:[%s298 + $0xd0] sm:$0xff] %vm1305, %v5491
        %5524 = vst.msk [vmem:[%s298 + $0xd8] sm:$0xff] %vm1305, %v5492
        %5525 = vst.msk [vmem:[%s298 + $0xe0] sm:$0xff] %vm1305, %v5493
        %5526 = vst.msk [vmem:[%s298 + $0xe8] sm:$0xff] %vm1305, %v5494
        %5527 = vst.msk [vmem:[%s298 + $0xf0] sm:$0xff] %vm1305, %v5495
        %5528 = vst.msk [vmem:[%s298 + $0xf8] sm:$0xff] %vm1305, %v5496
        %s5529 = sand.u32 %s142, 1
        %s5530 = scalar_lea.sflag [#allocation6], %s5529
        %s5531 = sand.u32 %s142, 1
        %s5532 = smul.addr %s5531, 256
        %s5533 = scalar_lea.vmem [#allocation13], %s5532
        // Predicated region
        $region68: #{conv_residual_blocks.1} parent=39 // pred_check
          %p5534 = pneg %p152
        $region69: #{conv_residual_blocks.1} parent=39 // pred_check_branch
          %5536 = sbr.rel (%p5534) target = $region71
        $region70: #{conv_residual_blocks.1} parent=39 // pred_region
          %s5538 = ssub.s32 4096, 4096
          %5539 = vsyncadd %s5530, %s5538
          %s5540 = smul.addr %s24, 32
          %s5541 = smul.addr %s5540, 128
          %s5542 = scalar_lea.hbm %s5, %s5541
          %s5543 = sshll.u32 %s5533, 4
          %s5544 = int_to_ptr.vmem [resolvable:$true] %s5543
          %5549 = dma.vmem_to_hbm [thread:$0]  %s5544, 4096, %s5542, %s5530, 128, 128, 8
        $region71: #{conv_residual_blocks.1} parent=39 // pred_fallthru
          _
      $region40: #{conv_residual_blocks.1} parent=5 // pred_fallthru
        _
      %p5550 = scmp.le.s32.totalorder 2, %s19
      // Predicated region
      $region72: #{conv_residual_blocks.1} parent=5 // pred_check
        %p5551 = pneg %p5550
      $region73: #{conv_residual_blocks.1} parent=5 // pred_check_branch
        %5553 = sbr.rel (%p5551) target = $region75
      $region74: #{conv_residual_blocks.1} parent=5 // pred_region
        %s5554 = ssub.s32 %s19, 2
        // Predicated region
        $region76: #{conv_residual_blocks.1} parent=74 // pred_check
          %p5555 = pneg %p158
        $region77: #{conv_residual_blocks.1} parent=74 // pred_check_branch
          %5557 = sbr.rel (%p5555) target = $region79
        $region78: #{conv_residual_blocks.1} parent=74 // pred_region
          %s5558 = sand.u32 %s143, 1
          %s5559 = scalar_lea.sflag [#allocation6], %s5558
          %s5560 = sand.u32 %s143, 1
          %s5561 = smul.addr %s5560, 256
          %s5562 = scalar_lea.vmem [#allocation13], %s5561
          %5563 = dma.done %s5559, 4096
        $region79: #{conv_residual_blocks.1} parent=74 // pred_fallthru
          _
      $region75: #{conv_residual_blocks.1} parent=5 // pred_fallthru
        _
    $region6: #{conv_residual_blocks.1} parent=1 // loop_footer
      %s23 = sadd.s32 1, %s19
    $region7: #{conv_residual_blocks.1} parent=1 // loop_footer_branch
      %18 = sbr.rel target = $region3
    $region8: #{conv_residual_blocks.1} parent=1 // loop_exit
      _
    %5564 = vsyncpa [#allocation5], 1
    %s5565 = scalar_lea.sflag [#allocation5], 1
    %5566 = vsyncpa %s5565, 1
    %5567 = vsyncpa [#allocation8], 1
    %5568 = vsyncpa [#allocation11], 1
    %5569 = vsyncpa [#allocation6], 1
    %s5570 = scalar_lea.sflag [#allocation6], 1
    %5571 = vsyncpa %s5570, 1

</llo_original>
